<compile_context>
chip_gen: v7x
topology: tpu7x:2x2x1
jax: 0.10.0
libtpu: 0.0.40
codegen_flags: <defaults>
</compile_context>

<pallas_src>
import jax
import jax.numpy as jnp
from jax import lax
from jax.experimental import pallas as pl
from jax.experimental.pallas import tpu as pltpu


def _scaled_conv_kernel(s_ref, w_ref, x_ref, o_ref):
    # Fold the channel scale into the small weight tile (Cout_blk x Cin) along
    # the contraction (Cin) axis; mathematically identical to scaling x, but
    # it is a (Cout_blk*Cin) VPU multiply instead of (M*Cin), and the large
    # MXU RHS feed comes straight from the x buffer.
    ws = w_ref[...] * s_ref[...]                      # (Cout_blk, Cin) * (1, Cin)
    o_ref[...] = jnp.dot(
        ws,
        x_ref[...],
        preferred_element_type=jnp.float32,
        precision=lax.Precision.HIGHEST,              # match f32 reference
    ).astype(o_ref.dtype)                             # (Cout_blk, M)


def scaled_pointwise_conv(x_nchw, scale_nc11, weight_oihw, *, cout_blocks=2):
    """Computes Conv2d(1x1, no bias)(scale * x), matching PyTorch semantics."""
    N, Cin, H, W = x_nchw.shape
    Cout = weight_oihw.shape[0]
    M = H * W

    if Cout % cout_blocks != 0 or (Cout // cout_blocks) % 8 != 0:
        cout_blocks = 1
    cout_blk = Cout // cout_blocks

    # Free views only -- no layout round-trips around the kernel.
    x_flat = x_nchw.reshape(N, Cin, M)           # (N, Cin, M)
    s_flat = scale_nc11.reshape(N, 1, Cin)       # (N, 1, Cin) per-sample scale
    w_flat = weight_oihw.reshape(Cout, Cin)      # (Cout, Cin), no transpose

    itemsize = jnp.dtype(x_flat.dtype).itemsize
    cost = pl.CostEstimate(
        flops=2 * N * M * Cin * Cout,
        transcendentals=0,
        bytes_accessed=itemsize
        * (N * Cin * M + Cout * Cin + N * Cout * M + N * Cin),
    )

    out_flat = pl.pallas_call(
        _scaled_conv_kernel,
        out_shape=jax.ShapeDtypeStruct((N, Cout, M), x_flat.dtype),
        grid=(N, cout_blocks),
        in_specs=[
            # scale: per-sample, constant in the Cout-split axis
            pl.BlockSpec((None, 1, Cin), lambda b, c: (b, 0, 0)),
            # weight: split along Cout so each core/step moves half the bytes
            pl.BlockSpec((cout_blk, Cin), lambda b, c: (c, 0)),
            # activations: block index constant in c -> fetched once per core
            pl.BlockSpec((None, Cin, M), lambda b, c: (b, 0, 0)),
        ],
        out_specs=pl.BlockSpec((None, cout_blk, M), lambda b, c: (b, c, 0)),
        compiler_params=pltpu.CompilerParams(
            dimension_semantics=("parallel", "parallel"),
        ),
        cost_estimate=cost,
    )(s_flat, w_flat, x_flat)

    # (N, Cout, M) -> (N, Cout, H, W): free view, already NCHW.
    return out_flat.reshape(N, Cout, H, W)


def reference(x_nchw, scale_nc11, weight_oihw):
    # Pure-JAX reference for correctness checking (stays in NCHW too).
    x318 = scale_nc11 * x_nchw
    Cout, Cin = weight_oihw.shape[0], weight_oihw.shape[1]
    return jnp.einsum(
        "oc,nchw->nohw",
        weight_oihw.reshape(Cout, Cin),
        x318,
        precision=lax.Precision.HIGHEST,
    )


if __name__ == "__main__":
    key = jax.random.PRNGKey(0)
    k1, k2, k3 = jax.random.split(key, 3)

    # Shapes implied by the module's forward.
    N, Cin, H, W, Cout = 1, 768, 14, 14, 176

    x312 = jax.random.normal(k1, (N, Cin, H, W), dtype=jnp.float32)   # feature map
    x317 = jax.random.normal(k2, (N, Cin, 1, 1), dtype=jnp.float32)   # channel scale
    # Conv2d(768, 176, 1, bias=False) weight, kaiming-ish scale.
    w = jax.random.normal(k3, (Cout, Cin, 1, 1), dtype=jnp.float32) * (1.0 / Cin) ** 0.5

    out = scaled_pointwise_conv(x312, x317, w)
    out = jax.block_until_ready(out)

    ref = reference(x312, x317, w)
    assert out.shape == (N, Cout, H, W), out.shape
    assert jnp.allclose(out, ref, atol=1e-4, rtol=1e-4), "mismatch vs reference"

    print("KERNEL_OK")
</pallas_src>

<mosaic_0001>
module attributes {stable_mosaic.version = 11 : i64} {
  func.func @_scaled_conv_kernel(%arg0: i32, %arg1: i32, %arg2: memref<1x1x768xf32, #tpu.memory_space<vmem>>, %arg3: memref<88x768xf32, #tpu.memory_space<vmem>>, %arg4: memref<1x768x196xf32, #tpu.memory_space<vmem>>, %arg5: memref<1x88x196xf32, #tpu.memory_space<vmem>>) attributes {dimension_semantics = [#tpu.dimension_semantics<parallel>, #tpu.dimension_semantics<parallel>], iteration_bounds = array<i64: 1, 2>, scalar_prefetch = 0 : i64, scratch_operands = 0 : i64, tpu.core_type = #tpu.core_type<tc>, window_params = [{transform_indices = @transform_0, window_bounds = array<i64: 1, 1, 768>}, {transform_indices = @transform_1, window_bounds = array<i64: 88, 768>}, {transform_indices = @transform_2, window_bounds = array<i64: 1, 768, 196>}, {transform_indices = @transform_3, window_bounds = array<i64: 1, 88, 196>}]} {
    %c0 = arith.constant 0 : index
    %c0_0 = arith.constant 0 : index
    %0 = vector.load %arg3[%c0, %c0_0] : memref<88x768xf32, #tpu.memory_space<vmem>>, vector<88x768xf32>
    %c0_1 = arith.constant 0 : index
    %c0_2 = arith.constant 0 : index
    %c0_3 = arith.constant 0 : index
    %1 = vector.load %arg2[%c0_1, %c0_2, %c0_3] : memref<1x1x768xf32, #tpu.memory_space<vmem>>, vector<1x1x768xf32>
    %2 = vector.shape_cast %1 : vector<1x1x768xf32> to vector<1x768xf32>
    %3 = vector.broadcast %2 : vector<1x768xf32> to vector<88x768xf32>
    %4 = arith.mulf %0, %3 : vector<88x768xf32>
    %c0_4 = arith.constant 0 : index
    %c0_5 = arith.constant 0 : index
    %c0_6 = arith.constant 0 : index
    %5 = vector.load %arg4[%c0_4, %c0_5, %c0_6] : memref<1x768x196xf32, #tpu.memory_space<vmem>>, vector<1x768x196xf32>
    %6 = vector.shape_cast %5 : vector<1x768x196xf32> to vector<768x196xf32>
    %cst = arith.constant dense<0.000000e+00> : vector<88x196xf32>
    %7 = tpu.matmul %4, %6, %cst {dimension_numbers = #tpu.dot_dimension_numbers<[1], [0], [0], [1], [0, 0, 1, 1], [], []>, precision = #tpu.contract_precision<fp32>} : vector<88x768xf32>, vector<768x196xf32>, vector<88x196xf32> -> vector<88x196xf32>
    %c0_7 = arith.constant 0 : index
    %c0_8 = arith.constant 0 : index
    %c0_9 = arith.constant 0 : index
    %8 = vector.load %arg5[%c0_7, %c0_8, %c0_9] : memref<1x88x196xf32, #tpu.memory_space<vmem>>, vector<1x88x196xf32>
    %9 = vector.shape_cast %8 : vector<1x88x196xf32> to vector<88x196xf32>
    %10 = vector.shape_cast %7 : vector<88x196xf32> to vector<1x88x196xf32>
    tpu.vector_store %arg5[%c0_7, %c0_8, %c0_9], %10 {strides = array<i32>} : memref<1x88x196xf32, #tpu.memory_space<vmem>>, vector<1x88x196xf32>,
    return
  }
  func.func @transform_0(%arg0: i32, %arg1: i32) -> (i32, i32, i32) {
    %c0_i32 = arith.constant 0 : i32
    %c0_i32_0 = arith.constant 0 : i32
    %c0_i32_1 = arith.constant 0 : i32
    return %arg0, %c0_i32, %c0_i32_0 : i32, i32, i32
  }
  func.func @transform_1(%arg0: i32, %arg1: i32) -> (i32, i32) {
    %c0_i32 = arith.constant 0 : i32
    %c0_i32_0 = arith.constant 0 : i32
    return %arg1, %c0_i32 : i32, i32
  }
  func.func @transform_2(%arg0: i32, %arg1: i32) -> (i32, i32, i32) {
    %c0_i32 = arith.constant 0 : i32
    %c0_i32_0 = arith.constant 0 : i32
    %c0_i32_1 = arith.constant 0 : i32
    return %arg0, %c0_i32, %c0_i32_0 : i32, i32, i32
  }
  func.func @transform_3(%arg0: i32, %arg1: i32) -> (i32, i32, i32) {
    %c0_i32 = arith.constant 0 : i32
    %c0_i32_0 = arith.constant 0 : i32
    return %arg0, %arg1, %c0_i32 : i32, i32, i32
  }
}

</mosaic_0001>

<llo_original>
// kernel: tpu_custom_call.1
$region0: #{tpu_custom_call.1}
  #allocation0 [shape = 'u32[]', space=smem, size = 0x4, offset = 0x4, fixed_abs, tag = 'smem constant byte address 0x4 - core index']
  #allocation1 [shape = 'u32[144,128]{1,0:T(1,128)}', space=vmem, size = 0x12000, scoped, tag = 'internal scratch']
  %s0 = inlined_call_operand.vmem [shape: f32[1,1,768], index: 0, kind: input, shape index: {}]
  %s1 = inlined_call_operand.vmem [shape: f32[176,768], index: 1, kind: input, shape index: {}]
  %s2 = inlined_call_operand.vmem [shape: f32[1,768,196], index: 2, kind: input, shape index: {}]
  %s3 = inlined_call_operand.hbm [shape: f32[1,176,196], index: 3, kind: output, shape index: {}]
  %s4 = sld [smem:[#allocation0]]
  $region45: #{tpu_custom_call.1} parent=0
    _
  %s6 = ssub.s32 1, %s4
  %s7 = scalar_select 0, %s6, %s4
  $region1: #{tpu_custom_call.1} parent=0
    #allocation2 [shape = 'u8[180224]{0}', space=vmem, size = 0x2c000, scoped, tag = 'output window, operand 0']
    #allocation3 [shape = 's32[2]{0}', space=sflag, size = 0x8, scoped, tag = 'scoped memory for tpu_custom_call.1']
    %8 = vsyncpa [#allocation3], 0
    %s9 = scalar_lea.sflag [#allocation3], 1
    %10 = vsyncpa %s9, 0
    loop: start=0, step=1, limit=4
    $region2: #{tpu_custom_call.1} parent=1 // loop_pre_header
      _
    $region3: #{tpu_custom_call.1} parent=1 // loop_header
      %s12 = sphi 0, %s16
      %p13 = scmp.ge.s32.totalorder %s12, 4
      %s19 = sphi 0, %s31
      %s20 = sphi 0, %s27
      %s21 = sphi 0, %s19
      %s22 = sphi 0, %s20
      %s23 = sphi 0, %s21
      %s24 = sphi 0, %s22
      %s34 = sphi 0, %s36
      %s37 = sphi 0, %s34
      %s38 = sphi 0, %s37
      %s54 = sphi 0, %s38
      %s60 = sphi 0, %s62
      %s63 = sphi 0, %s60
      %s64 = sphi 0, %s63
      %s80 = sphi 0, %s64
      %s86 = sphi 0, %s88
      %s89 = sphi 0, %s86
      %s90 = sphi 0, %s89
      %s106 = sphi 0, %s90
      %s114 = sphi 0, %s116
      %s117 = sphi 0, %s114
      %s118 = sphi 0, %s117
      %s134 = sphi 0, %s118
    $region4: #{tpu_custom_call.1} parent=1 // loop_header_branch
      %15 = sbr.rel (%p13) target = $region8
    $region5: #{tpu_custom_call.1} parent=1 // loop_body
      %s17 = ssub.s32 %s12, 1
      %s18 = ssub.s32 %s12, 2
      %s25 = sadd.s32 1, %s20
      %p26 = scmp.ge.s32.totalorder %s25, 2
      %s27 = scalar_select %p26, 0, %s25
      %s28 = sadd.s32 1, %s19
      %s29 = scalar_select %p26, %s28, %s19
      %p30 = scmp.ge.s32.totalorder %s29, 1
      %s31 = scalar_select %p30, 0, %s29
      %s32 = ssub.s32 %s19, %s31
      %p33 = scmp.eq.s32.totalorder %s32, 0
      %s35 = sadd.s32 %s34, 1
      %s36 = scalar_select %p33, %s34, %s35
      %p39 = pneg %p33
      %p40 = scmp.eq.s32.totalorder %s12, 1
      %p41 = por %p39, %p40
      %p42 = scmp.ne.s32.totalorder %s34, %s37
      %p43 = scmp.eq.s32.totalorder %s12, 0
      %p44 = por %p42, %p43
      %p45 = scmp.ne.s32.totalorder %s34, %s37
      %p46 = scmp.eq.s32.totalorder %s17, 1
      %p47 = por %p45, %p46
      %p48 = scmp.ne.s32.totalorder %s37, %s38
      %p49 = scmp.eq.s32.totalorder %s17, 0
      %p50 = por %p48, %p49
      %p51 = scmp.ne.s32.totalorder %s37, %s38
      %p52 = scmp.eq.s32.totalorder %s18, 1
      %p53 = por %p51, %p52
      %p55 = scmp.ne.s32.totalorder %s38, %s54
      %p56 = scmp.eq.s32.totalorder %s18, 0
      %p57 = por %p55, %p56
      %s58 = ssub.s32 %s20, %s27
      %p59 = scmp.eq.s32.totalorder %s58, 0
      %s61 = sadd.s32 %s60, 1
      %s62 = scalar_select %p59, %s60, %s61
      %p65 = pneg %p59
      %p66 = scmp.eq.s32.totalorder %s12, 1
      %p67 = por %p65, %p66
      %p68 = scmp.ne.s32.totalorder %s60, %s63
      %p69 = scmp.eq.s32.totalorder %s12, 0
      %p70 = por %p68, %p69
      %p71 = scmp.ne.s32.totalorder %s60, %s63
      %p72 = scmp.eq.s32.totalorder %s17, 1
      %p73 = por %p71, %p72
      %p74 = scmp.ne.s32.totalorder %s63, %s64
      %p75 = scmp.eq.s32.totalorder %s17, 0
      %p76 = por %p74, %p75
      %p77 = scmp.ne.s32.totalorder %s63, %s64
      %p78 = scmp.eq.s32.totalorder %s18, 1
      %p79 = por %p77, %p78
      %p81 = scmp.ne.s32.totalorder %s64, %s80
      %p82 = scmp.eq.s32.totalorder %s18, 0
      %p83 = por %p81, %p82
      %s84 = ssub.s32 %s19, %s31
      %p85 = scmp.eq.s32.totalorder %s84, 0
      %s87 = sadd.s32 %s86, 1
      %s88 = scalar_select %p85, %s86, %s87
      %p91 = pneg %p85
      %p92 = scmp.eq.s32.totalorder %s12, 1
      %p93 = por %p91, %p92
      %p94 = scmp.ne.s32.totalorder %s86, %s89
      %p95 = scmp.eq.s32.totalorder %s12, 0
      %p96 = por %p94, %p95
      %p97 = scmp.ne.s32.totalorder %s86, %s89
      %p98 = scmp.eq.s32.totalorder %s17, 1
      %p99 = por %p97, %p98
      %p100 = scmp.ne.s32.totalorder %s89, %s90
      %p101 = scmp.eq.s32.totalorder %s17, 0
      %p102 = por %p100, %p101
      %p103 = scmp.ne.s32.totalorder %s89, %s90
      %p104 = scmp.eq.s32.totalorder %s18, 1
      %p105 = por %p103, %p104
      %p107 = scmp.ne.s32.totalorder %s90, %s106
      %p108 = scmp.eq.s32.totalorder %s18, 0
      %p109 = por %p107, %p108
      %s110 = ssub.s32 %s19, %s31
      %s111 = ssub.s32 %s20, %s27
      %s112 = sor.u32 %s110, %s111
      %p113 = scmp.eq.s32.totalorder %s112, 0
      %s115 = sadd.s32 %s114, 1
      %s116 = scalar_select %p113, %s114, %s115
      %p119 = pneg %p113
      %p120 = scmp.eq.s32.totalorder %s12, 1
      %p121 = por %p119, %p120
      %p122 = scmp.ne.s32.totalorder %s114, %s117
      %p123 = scmp.eq.s32.totalorder %s12, 0
      %p124 = por %p122, %p123
      %p125 = scmp.ne.s32.totalorder %s114, %s117
      %p126 = scmp.eq.s32.totalorder %s17, 1
      %p127 = por %p125, %p126
      %p128 = scmp.ne.s32.totalorder %s117, %s118
      %p129 = scmp.eq.s32.totalorder %s17, 0
      %p130 = por %p128, %p129
      %p131 = scmp.ne.s32.totalorder %s117, %s118
      %p132 = scmp.eq.s32.totalorder %s18, 1
      %p133 = por %p131, %p132
      %p135 = scmp.ne.s32.totalorder %s118, %s134
      %p136 = scmp.eq.s32.totalorder %s18, 0
      %p137 = por %p135, %p136
      %p138 = scmp.le.s32.totalorder 1, %s12
      %p139 = scmp.lt.s32.totalorder %s12, 3
      %p140 = pnand %p138, %p139
      %p141 = pneg %p140
      // Predicated region
      $region9: #{tpu_custom_call.1} parent=5 // pred_check
        _
      $region10: #{tpu_custom_call.1} parent=5 // pred_check_branch
        %143 = sbr.rel (%p140) target = $region12
      $region11: #{tpu_custom_call.1} parent=5 // pred_region
        %s144 = ssub.s32 %s12, 1
        // Predicated region
        $region13: #{tpu_custom_call.1} parent=11 // pred_check
          %p145 = pneg %p50
        $region14: #{tpu_custom_call.1} parent=11 // pred_check_branch
          %147 = sbr.rel (%p145) target = $region16
        $region15: #{tpu_custom_call.1} parent=11 // pred_region
          %p148 = scmp.lt.s32.totalorder %s21, 0
          %s149 = scalar_select %p148, %s21, 0
          %s150 = smul.addr %s149, 6
          %s151 = scalar_lea.vmem %s0, %s150
        $region16: #{tpu_custom_call.1} parent=11 // pred_fallthru
          _
        // Predicated region
        $region17: #{tpu_custom_call.1} parent=11 // pred_check
          %p152 = pneg %p102
        $region18: #{tpu_custom_call.1} parent=11 // pred_check_branch
          %154 = sbr.rel (%p152) target = $region20
        $region19: #{tpu_custom_call.1} parent=11 // pred_region
          %p155 = scmp.lt.s32.totalorder %s21, 0
          %s156 = scalar_select %p155, %s21, 0
          %s157 = smul.addr %s156, 192
          %s158 = smul.addr %s157, 8
          %s159 = scalar_lea.vmem %s2, %s158
        $region20: #{tpu_custom_call.1} parent=11 // pred_fallthru
          _
      $region12: #{tpu_custom_call.1} parent=5 // pred_fallthru
        _
      %p160 = scmp.lt.s32.totalorder %s12, 2
      // Predicated region
      $region21: #{tpu_custom_call.1} parent=5 // pred_check
        %p161 = pneg %p160
      $region22: #{tpu_custom_call.1} parent=5 // pred_check_branch
        %163 = sbr.rel (%p161) target = $region24
      $region23: #{tpu_custom_call.1} parent=5 // pred_region
        // Predicated region
        $region25: #{tpu_custom_call.1} parent=23 // pred_check
          %p164 = pneg %p70
        $region26: #{tpu_custom_call.1} parent=23 // pred_check_branch
          %166 = sbr.rel (%p164) target = $region28
        $region27: #{tpu_custom_call.1} parent=23 // pred_region
          %s167 = smul.u32 11, %s20
          %p168 = scmp.lt.s32.totalorder %s167, 21
          %s169 = scalar_select %p168, %s167, 21
          %s170 = smul.addr %s169, 6
          %s171 = smul.addr %s170, 8
          %s172 = scalar_lea.vmem %s1, %s171
          %s173 = smul.u32 11, %s20
        $region28: #{tpu_custom_call.1} parent=23 // pred_fallthru
          _
      $region24: #{tpu_custom_call.1} parent=5 // pred_fallthru
        _
      %p174 = scmp.le.s32.totalorder 1, %s12
      %p175 = scmp.lt.s32.totalorder %s12, 3
      %p176 = pnand %p174, %p175
      %p177 = pneg %p176
      // Predicated region
      $region29: #{tpu_custom_call.1} parent=5 // pred_check
        _
      $region30: #{tpu_custom_call.1} parent=5 // pred_check_branch
        %179 = sbr.rel (%p176) target = $region32
      $region31: #{tpu_custom_call.1} parent=5 // pred_region
        %s180 = ssub.s32 %s12, 1
        %p181 = scmp.lt.s32.totalorder %s21, 0
        %s182 = scalar_select %p181, %s21, 0
        %s183 = smul.addr %s182, 6
        %s184 = scalar_lea.vmem %s0, %s183
        %p185 = pneg %p50
        %p186 = pneg %p47
        %s187 = smul.u32 11, %s22
        %p188 = scmp.lt.s32.totalorder %s187, 21
        %s189 = scalar_select %p188, %s187, 21
        %s190 = smul.addr %s189, 6
        %s191 = smul.addr %s190, 8
        %s192 = scalar_lea.vmem %s1, %s191
        %p193 = pneg %p76
        %p194 = pneg %p73
        %p195 = scmp.lt.s32.totalorder %s21, 0
        %s196 = scalar_select %p195, %s21, 0
        %s197 = smul.addr %s196, 192
        %s198 = smul.addr %s197, 8
        %s199 = scalar_lea.vmem %s2, %s198
        %p200 = pneg %p102
        %p201 = pneg %p99
        %p202 = pneg %p130
        %p203 = pneg %p127
        %s204 = sand.u32 %s117, 1
        %s205 = scalar_lea.sflag [#allocation3], %s204
        %s206 = sand.u32 %s117, 1
        %s207 = smul.addr %s206, 176
        %s208 = scalar_lea.vmem [#allocation2], %s207
        %p209 = scmp.lt.s32.totalorder %s21, 0
        %s210 = scalar_select %p209, %s21, 0
        %s211 = smul.addr %s210, 6
        %s212 = scalar_lea.vmem %s0, %s211
        %s213 = smul.u32 11, %s22
        %p214 = scmp.lt.s32.totalorder %s213, 21
        %s215 = scalar_select %p214, %s213, 21
        %s216 = smul.addr %s215, 6
        %s217 = smul.addr %s216, 8
        %s218 = scalar_lea.vmem %s1, %s217
        %s219 = smul.u32 11, %s22
        %p220 = scmp.lt.s32.totalorder %s21, 0
        %s221 = scalar_select %p220, %s21, 0
        %s222 = smul.addr %s221, 192
        %s223 = smul.addr %s222, 8
        %s224 = scalar_lea.vmem %s2, %s223
        %s225 = smul.u32 11, %s22
        %v226 = vld [vmem:[%s218] sm:$0xff]
        %v227 = vld [vmem:[%s218 + $0x8] sm:$0xff]
        %v228 = vld [vmem:[%s218 + $0x10] sm:$0xff]
        %v229 = vld [vmem:[%s218 + $0x18] sm:$0xff]
        %v230 = vld [vmem:[%s218 + $0x20] sm:$0xff]
        %v231 = vld [vmem:[%s218 + $0x28] sm:$0xff]
        %v232 = vld [vmem:[%s218 + $0x30] sm:$0xff]
        %v233 = vld [vmem:[%s218 + $0x38] sm:$0xff]
        %v234 = vld [vmem:[%s218 + $0x40] sm:$0xff]
        %v235 = vld [vmem:[%s218 + $0x48] sm:$0xff]
        %v236 = vld [vmem:[%s218 + $0x50] sm:$0xff]
        %v237 = vld [vmem:[%s218 + $0x58] sm:$0xff]
        %v238 = vld [vmem:[%s218 + $0x60] sm:$0xff]
        %v239 = vld [vmem:[%s218 + $0x68] sm:$0xff]
        %v240 = vld [vmem:[%s218 + $0x70] sm:$0xff]
        %v241 = vld [vmem:[%s218 + $0x78] sm:$0xff]
        %v242 = vld [vmem:[%s218 + $0x80] sm:$0xff]
        %v243 = vld [vmem:[%s218 + $0x88] sm:$0xff]
        %v244 = vld [vmem:[%s218 + $0x90] sm:$0xff]
        %v245 = vld [vmem:[%s218 + $0x98] sm:$0xff]
        %v246 = vld [vmem:[%s218 + $0xa0] sm:$0xff]
        %v247 = vld [vmem:[%s218 + $0xa8] sm:$0xff]
        %v248 = vld [vmem:[%s218 + $0xb0] sm:$0xff]
        %v249 = vld [vmem:[%s218 + $0xb8] sm:$0xff]
        %v250 = vld [vmem:[%s218 + $0xc0] sm:$0xff]
        %v251 = vld [vmem:[%s218 + $0xc8] sm:$0xff]
        %v252 = vld [vmem:[%s218 + $0xd0] sm:$0xff]
        %v253 = vld [vmem:[%s218 + $0xd8] sm:$0xff]
        %v254 = vld [vmem:[%s218 + $0xe0] sm:$0xff]
        %v255 = vld [vmem:[%s218 + $0xe8] sm:$0xff]
        %v256 = vld [vmem:[%s218 + $0xf0] sm:$0xff]
        %v257 = vld [vmem:[%s218 + $0xf8] sm:$0xff]
        %v258 = vld [vmem:[%s218 + $0x100] sm:$0xff]
        %v259 = vld [vmem:[%s218 + $0x108] sm:$0xff]
        %v260 = vld [vmem:[%s218 + $0x110] sm:$0xff]
        %v261 = vld [vmem:[%s218 + $0x118] sm:$0xff]
        %v262 = vld [vmem:[%s218 + $0x120] sm:$0xff]
        %v263 = vld [vmem:[%s218 + $0x128] sm:$0xff]
        %v264 = vld [vmem:[%s218 + $0x130] sm:$0xff]
        %v265 = vld [vmem:[%s218 + $0x138] sm:$0xff]
        %v266 = vld [vmem:[%s218 + $0x140] sm:$0xff]
        %v267 = vld [vmem:[%s218 + $0x148] sm:$0xff]
        %v268 = vld [vmem:[%s218 + $0x150] sm:$0xff]
        %v269 = vld [vmem:[%s218 + $0x158] sm:$0xff]
        %v270 = vld [vmem:[%s218 + $0x160] sm:$0xff]
        %v271 = vld [vmem:[%s218 + $0x168] sm:$0xff]
        %v272 = vld [vmem:[%s218 + $0x170] sm:$0xff]
        %v273 = vld [vmem:[%s218 + $0x178] sm:$0xff]
        %v274 = vld [vmem:[%s218 + $0x180] sm:$0xff]
        %v275 = vld [vmem:[%s218 + $0x188] sm:$0xff]
        %v276 = vld [vmem:[%s218 + $0x190] sm:$0xff]
        %v277 = vld [vmem:[%s218 + $0x198] sm:$0xff]
        %v278 = vld [vmem:[%s218 + $0x1a0] sm:$0xff]
        %v279 = vld [vmem:[%s218 + $0x1a8] sm:$0xff]
        %v280 = vld [vmem:[%s218 + $0x1b0] sm:$0xff]
        %v281 = vld [vmem:[%s218 + $0x1b8] sm:$0xff]
        %v282 = vld [vmem:[%s218 + $0x1c0] sm:$0xff]
        %v283 = vld [vmem:[%s218 + $0x1c8] sm:$0xff]
        %v284 = vld [vmem:[%s218 + $0x1d0] sm:$0xff]
        %v285 = vld [vmem:[%s218 + $0x1d8] sm:$0xff]
        %v286 = vld [vmem:[%s218 + $0x1e0] sm:$0xff]
        %v287 = vld [vmem:[%s218 + $0x1e8] sm:$0xff]
        %v288 = vld [vmem:[%s218 + $0x1f0] sm:$0xff]
        %v289 = vld [vmem:[%s218 + $0x1f8] sm:$0xff]
        %v290 = vld [vmem:[%s218 + $0x200] sm:$0xff]
        %v291 = vld [vmem:[%s218 + $0x208] sm:$0xff]
        %v292 = vld [vmem:[%s212] sm:$0x3f]
        %v294 = vlaneseq
        %v295 = vshrl.u32 %v294, 7
        %v296 = vsub.s32 0, %v295
        %v297 = vrot.slane %v292, %v296
        %v298 = vlaneseq
        %v299 = vshrl.u32 %v298, 7
        %v300 = vsub.s32 1, %v299
        %v301 = vrot.slane %v292, %v300
        %v302 = vlaneseq
        %v303 = vshrl.u32 %v302, 7
        %v304 = vsub.s32 2, %v303
        %v305 = vrot.slane %v292, %v304
        %v306 = vlaneseq
        %v307 = vshrl.u32 %v306, 7
        %v308 = vsub.s32 3, %v307
        %v309 = vrot.slane %v292, %v308
        %v310 = vlaneseq
        %v311 = vshrl.u32 %v310, 7
        %v312 = vsub.s32 4, %v311
        %v313 = vrot.slane %v292, %v312
        %v314 = vlaneseq
        %v315 = vshrl.u32 %v314, 7
        %v316 = vsub.s32 5, %v315
        %v317 = vrot.slane %v292, %v316
        %v324 = vmul.f32 %v226, %v297
        %v325 = vmul.f32 %v227, %v301
        %v326 = vmul.f32 %v228, %v305
        %v327 = vmul.f32 %v229, %v309
        %v328 = vmul.f32 %v230, %v313
        %v329 = vmul.f32 %v231, %v317
        %v330 = vmul.f32 %v232, %v297
        %v331 = vmul.f32 %v233, %v301
        %v332 = vmul.f32 %v234, %v305
        %v333 = vmul.f32 %v235, %v309
        %v334 = vmul.f32 %v236, %v313
        %v335 = vmul.f32 %v237, %v317
        %v336 = vmul.f32 %v238, %v297
        %v337 = vmul.f32 %v239, %v301
        %v338 = vmul.f32 %v240, %v305
        %v339 = vmul.f32 %v241, %v309
        %v340 = vmul.f32 %v242, %v313
        %v341 = vmul.f32 %v243, %v317
        %v342 = vmul.f32 %v244, %v297
        %v343 = vmul.f32 %v245, %v301
        %v344 = vmul.f32 %v246, %v305
        %v345 = vmul.f32 %v247, %v309
        %v346 = vmul.f32 %v248, %v313
        %v347 = vmul.f32 %v249, %v317
        %v348 = vmul.f32 %v250, %v297
        %v349 = vmul.f32 %v251, %v301
        %v350 = vmul.f32 %v252, %v305
        %v351 = vmul.f32 %v253, %v309
        %v352 = vmul.f32 %v254, %v313
        %v353 = vmul.f32 %v255, %v317
        %v354 = vmul.f32 %v256, %v297
        %v355 = vmul.f32 %v257, %v301
        %v356 = vmul.f32 %v258, %v305
        %v357 = vmul.f32 %v259, %v309
        %v358 = vmul.f32 %v260, %v313
        %v359 = vmul.f32 %v261, %v317
        %v360 = vmul.f32 %v262, %v297
        %v361 = vmul.f32 %v263, %v301
        %v362 = vmul.f32 %v264, %v305
        %v363 = vmul.f32 %v265, %v309
        %v364 = vmul.f32 %v266, %v313
        %v365 = vmul.f32 %v267, %v317
        %v366 = vmul.f32 %v268, %v297
        %v367 = vmul.f32 %v269, %v301
        %v368 = vmul.f32 %v270, %v305
        %v369 = vmul.f32 %v271, %v309
        %v370 = vmul.f32 %v272, %v313
        %v371 = vmul.f32 %v273, %v317
        %v372 = vmul.f32 %v274, %v297
        %v373 = vmul.f32 %v275, %v301
        %v374 = vmul.f32 %v276, %v305
        %v375 = vmul.f32 %v277, %v309
        %v376 = vmul.f32 %v278, %v313
        %v377 = vmul.f32 %v279, %v317
        %v378 = vmul.f32 %v280, %v297
        %v379 = vmul.f32 %v281, %v301
        %v380 = vmul.f32 %v282, %v305
        %v381 = vmul.f32 %v283, %v309
        %v382 = vmul.f32 %v284, %v313
        %v383 = vmul.f32 %v285, %v317
        %v384 = vmul.f32 %v286, %v297
        %v385 = vmul.f32 %v287, %v301
        %v386 = vmul.f32 %v288, %v305
        %v387 = vmul.f32 %v289, %v309
        %v388 = vmul.f32 %v290, %v313
        %v389 = vmul.f32 %v291, %v317
        %v390 = vld [vmem:[%s224] sm:$0xff]
        %v391 = vld [vmem:[%s224 + $0x8] sm:$0xff]
        %v392 = vld [vmem:[%s224 + $0x10] sm:$0xff]
        %v393 = vld [vmem:[%s224 + $0x18] sm:$0xff]
        %v394 = vld [vmem:[%s224 + $0x20] sm:$0xff]
        %v395 = vld [vmem:[%s224 + $0x28] sm:$0xff]
        %v396 = vld [vmem:[%s224 + $0x30] sm:$0xff]
        %v397 = vld [vmem:[%s224 + $0x38] sm:$0xff]
        %v398 = vld [vmem:[%s224 + $0x40] sm:$0xff]
        %v399 = vld [vmem:[%s224 + $0x48] sm:$0xff]
        %v400 = vld [vmem:[%s224 + $0x50] sm:$0xff]
        %v401 = vld [vmem:[%s224 + $0x58] sm:$0xff]
        %v402 = vld [vmem:[%s224 + $0x60] sm:$0xff]
        %v403 = vld [vmem:[%s224 + $0x68] sm:$0xff]
        %v404 = vld [vmem:[%s224 + $0x70] sm:$0xff]
        %v405 = vld [vmem:[%s224 + $0x78] sm:$0xff]
        %v406 = vld [vmem:[%s224 + $0x80] sm:$0xff]
        %v407 = vld [vmem:[%s224 + $0x88] sm:$0xff]
        %v408 = vld [vmem:[%s224 + $0x90] sm:$0xff]
        %v409 = vld [vmem:[%s224 + $0x98] sm:$0xff]
        %v410 = vld [vmem:[%s224 + $0xa0] sm:$0xff]
        %v411 = vld [vmem:[%s224 + $0xa8] sm:$0xff]
        %v412 = vld [vmem:[%s224 + $0xb0] sm:$0xff]
        %v413 = vld [vmem:[%s224 + $0xb8] sm:$0xff]
        %v414 = vld [vmem:[%s224 + $0xc0] sm:$0xff]
        %v415 = vld [vmem:[%s224 + $0xc8] sm:$0xff]
        %v416 = vld [vmem:[%s224 + $0xd0] sm:$0xff]
        %v417 = vld [vmem:[%s224 + $0xd8] sm:$0xff]
        %v418 = vld [vmem:[%s224 + $0xe0] sm:$0xff]
        %v419 = vld [vmem:[%s224 + $0xe8] sm:$0xff]
        %v420 = vld [vmem:[%s224 + $0xf0] sm:$0xff]
        %v421 = vld [vmem:[%s224 + $0xf8] sm:$0xff]
        %v422 = vld [vmem:[%s224 + $0x100] sm:$0xff]
        %v423 = vld [vmem:[%s224 + $0x108] sm:$0xff]
        %v424 = vld [vmem:[%s224 + $0x110] sm:$0xff]
        %v425 = vld [vmem:[%s224 + $0x118] sm:$0xff]
        %v426 = vld [vmem:[%s224 + $0x120] sm:$0xff]
        %v427 = vld [vmem:[%s224 + $0x128] sm:$0xff]
        %v428 = vld [vmem:[%s224 + $0x130] sm:$0xff]
        %v429 = vld [vmem:[%s224 + $0x138] sm:$0xff]
        %v430 = vld [vmem:[%s224 + $0x140] sm:$0xff]
        %v431 = vld [vmem:[%s224 + $0x148] sm:$0xff]
        %v432 = vld [vmem:[%s224 + $0x150] sm:$0xff]
        %v433 = vld [vmem:[%s224 + $0x158] sm:$0xff]
        %v434 = vld [vmem:[%s224 + $0x160] sm:$0xff]
        %v435 = vld [vmem:[%s224 + $0x168] sm:$0xff]
        %v436 = vld [vmem:[%s224 + $0x170] sm:$0xff]
        %v437 = vld [vmem:[%s224 + $0x178] sm:$0xff]
        %v438 = vld [vmem:[%s224 + $0x180] sm:$0xff]
        %v439 = vld [vmem:[%s224 + $0x188] sm:$0xff]
        %v440 = vld [vmem:[%s224 + $0x190] sm:$0xff]
        %v441 = vld [vmem:[%s224 + $0x198] sm:$0xff]
        %v442 = vld [vmem:[%s224 + $0x1a0] sm:$0xff]
        %v443 = vld [vmem:[%s224 + $0x1a8] sm:$0xff]
        %v444 = vld [vmem:[%s224 + $0x1b0] sm:$0xff]
        %v445 = vld [vmem:[%s224 + $0x1b8] sm:$0xff]
        %v446 = vld [vmem:[%s224 + $0x1c0] sm:$0xff]
        %v447 = vld [vmem:[%s224 + $0x1c8] sm:$0xff]
        %v448 = vld [vmem:[%s224 + $0x1d0] sm:$0xff]
        %v449 = vld [vmem:[%s224 + $0x1d8] sm:$0xff]
        %v450 = vld [vmem:[%s224 + $0x1e0] sm:$0xff]
        %v451 = vld [vmem:[%s224 + $0x1e8] sm:$0xff]
        %v452 = vld [vmem:[%s224 + $0x1f0] sm:$0xff]
        %v453 = vld [vmem:[%s224 + $0x1f8] sm:$0xff]
        %v454 = vld [vmem:[%s224 + $0x200] sm:$0xff]
        %v455 = vld [vmem:[%s224 + $0x208] sm:$0xff]
        %v456 = vld [vmem:[%s224 + $0x210] sm:$0xff]
        %v457 = vld [vmem:[%s224 + $0x218] sm:$0xff]
        %v458 = vld [vmem:[%s224 + $0x220] sm:$0xff]
        %v459 = vld [vmem:[%s224 + $0x228] sm:$0xff]
        %v460 = vld [vmem:[%s224 + $0x230] sm:$0xff]
        %v461 = vld [vmem:[%s224 + $0x238] sm:$0xff]
        %v462 = vld [vmem:[%s224 + $0x240] sm:$0xff]
        %v463 = vld [vmem:[%s224 + $0x248] sm:$0xff]
        %v464 = vld [vmem:[%s224 + $0x250] sm:$0xff]
        %v465 = vld [vmem:[%s224 + $0x258] sm:$0xff]
        %v466 = vld [vmem:[%s224 + $0x260] sm:$0xff]
        %v467 = vld [vmem:[%s224 + $0x268] sm:$0xff]
        %v468 = vld [vmem:[%s224 + $0x270] sm:$0xff]
        %v469 = vld [vmem:[%s224 + $0x278] sm:$0xff]
        %v470 = vld [vmem:[%s224 + $0x280] sm:$0xff]
        %v471 = vld [vmem:[%s224 + $0x288] sm:$0xff]
        %v472 = vld [vmem:[%s224 + $0x290] sm:$0xff]
        %v473 = vld [vmem:[%s224 + $0x298] sm:$0xff]
        %v474 = vld [vmem:[%s224 + $0x2a0] sm:$0xff]
        %v475 = vld [vmem:[%s224 + $0x2a8] sm:$0xff]
        %v476 = vld [vmem:[%s224 + $0x2b0] sm:$0xff]
        %v477 = vld [vmem:[%s224 + $0x2b8] sm:$0xff]
        %v478 = vld [vmem:[%s224 + $0x2c0] sm:$0xff]
        %v479 = vld [vmem:[%s224 + $0x2c8] sm:$0xff]
        %v480 = vld [vmem:[%s224 + $0x2d0] sm:$0xff]
        %v481 = vld [vmem:[%s224 + $0x2d8] sm:$0xff]
        %v482 = vld [vmem:[%s224 + $0x2e0] sm:$0xff]
        %v483 = vld [vmem:[%s224 + $0x2e8] sm:$0xff]
        %v484 = vld [vmem:[%s224 + $0x2f0] sm:$0xff]
        %v485 = vld [vmem:[%s224 + $0x2f8] sm:$0xff]
        %v486 = vld [vmem:[%s224 + $0x300] sm:$0xff]
        %v487 = vld [vmem:[%s224 + $0x308] sm:$0xff]
        %v488 = vld [vmem:[%s224 + $0x310] sm:$0xff]
        %v489 = vld [vmem:[%s224 + $0x318] sm:$0xff]
        %v490 = vld [vmem:[%s224 + $0x320] sm:$0xff]
        %v491 = vld [vmem:[%s224 + $0x328] sm:$0xff]
        %v492 = vld [vmem:[%s224 + $0x330] sm:$0xff]
        %v493 = vld [vmem:[%s224 + $0x338] sm:$0xff]
        %v494 = vld [vmem:[%s224 + $0x340] sm:$0xff]
        %v495 = vld [vmem:[%s224 + $0x348] sm:$0xff]
        %v496 = vld [vmem:[%s224 + $0x350] sm:$0xff]
        %v497 = vld [vmem:[%s224 + $0x358] sm:$0xff]
        %v498 = vld [vmem:[%s224 + $0x360] sm:$0xff]
        %v499 = vld [vmem:[%s224 + $0x368] sm:$0xff]
        %v500 = vld [vmem:[%s224 + $0x370] sm:$0xff]
        %v501 = vld [vmem:[%s224 + $0x378] sm:$0xff]
        %v502 = vld [vmem:[%s224 + $0x380] sm:$0xff]
        %v503 = vld [vmem:[%s224 + $0x388] sm:$0xff]
        %v504 = vld [vmem:[%s224 + $0x390] sm:$0xff]
        %v505 = vld [vmem:[%s224 + $0x398] sm:$0xff]
        %v506 = vld [vmem:[%s224 + $0x3a0] sm:$0xff]
        %v507 = vld [vmem:[%s224 + $0x3a8] sm:$0xff]
        %v508 = vld [vmem:[%s224 + $0x3b0] sm:$0xff]
        %v509 = vld [vmem:[%s224 + $0x3b8] sm:$0xff]
        %v510 = vld [vmem:[%s224 + $0x3c0] sm:$0xff]
        %v511 = vld [vmem:[%s224 + $0x3c8] sm:$0xff]
        %v512 = vld [vmem:[%s224 + $0x3d0] sm:$0xff]
        %v513 = vld [vmem:[%s224 + $0x3d8] sm:$0xff]
        %v514 = vld [vmem:[%s224 + $0x3e0] sm:$0xff]
        %v515 = vld [vmem:[%s224 + $0x3e8] sm:$0xff]
        %v516 = vld [vmem:[%s224 + $0x3f0] sm:$0xff]
        %v517 = vld [vmem:[%s224 + $0x3f8] sm:$0xff]
        %v518 = vld [vmem:[%s224 + $0x400] sm:$0xff]
        %v519 = vld [vmem:[%s224 + $0x408] sm:$0xff]
        %v520 = vld [vmem:[%s224 + $0x410] sm:$0xff]
        %v521 = vld [vmem:[%s224 + $0x418] sm:$0xff]
        %v522 = vld [vmem:[%s224 + $0x420] sm:$0xff]
        %v523 = vld [vmem:[%s224 + $0x428] sm:$0xff]
        %v524 = vld [vmem:[%s224 + $0x430] sm:$0xff]
        %v525 = vld [vmem:[%s224 + $0x438] sm:$0xff]
        %v526 = vld [vmem:[%s224 + $0x440] sm:$0xff]
        %v527 = vld [vmem:[%s224 + $0x448] sm:$0xff]
        %v528 = vld [vmem:[%s224 + $0x450] sm:$0xff]
        %v529 = vld [vmem:[%s224 + $0x458] sm:$0xff]
        %v530 = vld [vmem:[%s224 + $0x460] sm:$0xff]
        %v531 = vld [vmem:[%s224 + $0x468] sm:$0xff]
        %v532 = vld [vmem:[%s224 + $0x470] sm:$0xff]
        %v533 = vld [vmem:[%s224 + $0x478] sm:$0xff]
        %v534 = vld [vmem:[%s224 + $0x480] sm:$0xff]
        %v535 = vld [vmem:[%s224 + $0x488] sm:$0xff]
        %v536 = vld [vmem:[%s224 + $0x490] sm:$0xff]
        %v537 = vld [vmem:[%s224 + $0x498] sm:$0xff]
        %v538 = vld [vmem:[%s224 + $0x4a0] sm:$0xff]
        %v539 = vld [vmem:[%s224 + $0x4a8] sm:$0xff]
        %v540 = vld [vmem:[%s224 + $0x4b0] sm:$0xff]
        %v541 = vld [vmem:[%s224 + $0x4b8] sm:$0xff]
        %v542 = vld [vmem:[%s224 + $0x4c0] sm:$0xff]
        %v543 = vld [vmem:[%s224 + $0x4c8] sm:$0xff]
        %v544 = vld [vmem:[%s224 + $0x4d0] sm:$0xff]
        %v545 = vld [vmem:[%s224 + $0x4d8] sm:$0xff]
        %v546 = vld [vmem:[%s224 + $0x4e0] sm:$0xff]
        %v547 = vld [vmem:[%s224 + $0x4e8] sm:$0xff]
        %v548 = vld [vmem:[%s224 + $0x4f0] sm:$0xff]
        %v549 = vld [vmem:[%s224 + $0x4f8] sm:$0xff]
        %v550 = vld [vmem:[%s224 + $0x500] sm:$0xff]
        %v551 = vld [vmem:[%s224 + $0x508] sm:$0xff]
        %v552 = vld [vmem:[%s224 + $0x510] sm:$0xff]
        %v553 = vld [vmem:[%s224 + $0x518] sm:$0xff]
        %v554 = vld [vmem:[%s224 + $0x520] sm:$0xff]
        %v555 = vld [vmem:[%s224 + $0x528] sm:$0xff]
        %v556 = vld [vmem:[%s224 + $0x530] sm:$0xff]
        %v557 = vld [vmem:[%s224 + $0x538] sm:$0xff]
        %v558 = vld [vmem:[%s224 + $0x540] sm:$0xff]
        %v559 = vld [vmem:[%s224 + $0x548] sm:$0xff]
        %v560 = vld [vmem:[%s224 + $0x550] sm:$0xff]
        %v561 = vld [vmem:[%s224 + $0x558] sm:$0xff]
        %v562 = vld [vmem:[%s224 + $0x560] sm:$0xff]
        %v563 = vld [vmem:[%s224 + $0x568] sm:$0xff]
        %v564 = vld [vmem:[%s224 + $0x570] sm:$0xff]
        %v565 = vld [vmem:[%s224 + $0x578] sm:$0xff]
        %v566 = vld [vmem:[%s224 + $0x580] sm:$0xff]
        %v567 = vld [vmem:[%s224 + $0x588] sm:$0xff]
        %v568 = vld [vmem:[%s224 + $0x590] sm:$0xff]
        %v569 = vld [vmem:[%s224 + $0x598] sm:$0xff]
        %v570 = vld [vmem:[%s224 + $0x5a0] sm:$0xff]
        %v571 = vld [vmem:[%s224 + $0x5a8] sm:$0xff]
        %v572 = vld [vmem:[%s224 + $0x5b0] sm:$0xff]
        %v573 = vld [vmem:[%s224 + $0x5b8] sm:$0xff]
        %v574 = vld [vmem:[%s224 + $0x5c0] sm:$0xff]
        %v575 = vld [vmem:[%s224 + $0x5c8] sm:$0xff]
        %v576 = vld [vmem:[%s224 + $0x5d0] sm:$0xff]
        %v577 = vld [vmem:[%s224 + $0x5d8] sm:$0xff]
        %v578 = vld [vmem:[%s224 + $0x5e0] sm:$0xff]
        %v579 = vld [vmem:[%s224 + $0x5e8] sm:$0xff]
        %v580 = vld [vmem:[%s224 + $0x5f0] sm:$0xff]
        %v581 = vld [vmem:[%s224 + $0x5f8] sm:$0xff]
        %v582 = vand.u32 %v391, 4294901760
        %583 = vmatprep.subr.mxu0 %v582
        %v584 = vand.u32 %v390, 4294901760
        %585 = vmatpush1.msra.mxu0 %v584
        %v586 = vand.u32 %v393, 4294901760
        %587 = vmatprep.subr.mxu0 %v586
        %v588 = vand.u32 %v392, 4294901760
        %589 = vmatpush1.msra.mxu0 %v588
        %v590 = vand.u32 %v395, 4294901760
        %591 = vmatprep.subr.mxu0 %v590
        %v592 = vand.u32 %v394, 4294901760
        %593 = vmatpush1.msra.mxu0 %v592
        %v594 = vand.u32 %v397, 4294901760
        %595 = vmatprep.subr.mxu0 %v594
        %v596 = vand.u32 %v396, 4294901760
        %597 = vmatpush1.msra.mxu0 %v596
        %v598 = vand.u32 %v399, 4294901760
        %599 = vmatprep.subr.mxu0 %v598
        %v600 = vand.u32 %v398, 4294901760
        %601 = vmatpush1.msra.mxu0 %v600
        %v602 = vand.u32 %v401, 4294901760
        %603 = vmatprep.subr.mxu0 %v602
        %v604 = vand.u32 %v400, 4294901760
        %605 = vmatpush1.msra.mxu0 %v604
        %v606 = vand.u32 %v403, 4294901760
        %607 = vmatprep.subr.mxu0 %v606
        %v608 = vand.u32 %v402, 4294901760
        %609 = vmatpush1.msra.mxu0 %v608
        %v610 = vand.u32 %v405, 4294901760
        %611 = vmatprep.subr.mxu0 %v610
        %v612 = vand.u32 %v404, 4294901760
        %613 = vmatpush1.msra.mxu0 %v612
        %v614 = vand.u32 %v407, 4294901760
        %615 = vmatprep.subr.mxu0 %v614
        %v616 = vand.u32 %v406, 4294901760
        %617 = vmatpush1.msra.mxu0 %v616
        %v618 = vand.u32 %v409, 4294901760
        %619 = vmatprep.subr.mxu0 %v618
        %v620 = vand.u32 %v408, 4294901760
        %621 = vmatpush1.msra.mxu0 %v620
        %v622 = vand.u32 %v411, 4294901760
        %623 = vmatprep.subr.mxu0 %v622
        %v624 = vand.u32 %v410, 4294901760
        %625 = vmatpush1.msra.mxu0 %v624
        %v626 = vand.u32 %v413, 4294901760
        %627 = vmatprep.subr.mxu0 %v626
        %v628 = vand.u32 %v412, 4294901760
        %629 = vmatpush1.msra.mxu0 %v628
        %v630 = vand.u32 %v415, 4294901760
        %631 = vmatprep.subr.mxu0 %v630
        %v632 = vand.u32 %v414, 4294901760
        %633 = vmatpush1.msra.mxu0 %v632
        %v634 = vand.u32 %v417, 4294901760
        %635 = vmatprep.subr.mxu0 %v634
        %v636 = vand.u32 %v416, 4294901760
        %637 = vmatpush1.msra.mxu0 %v636
        %v638 = vand.u32 %v419, 4294901760
        %639 = vmatprep.subr.mxu0 %v638
        %v640 = vand.u32 %v418, 4294901760
        %641 = vmatpush1.msra.mxu0 %v640
        %v642 = vand.u32 %v421, 4294901760
        %643 = vmatprep.subr.mxu0 %v642
        %v644 = vand.u32 %v420, 4294901760
        %645 = vmatpush1.msra.mxu0 %v644
        %v646 = vand.u32 %v423, 4294901760
        %647 = vmatprep.subr.mxu0 %v646
        %v648 = vand.u32 %v422, 4294901760
        %649 = vmatpush1.msra.mxu0 %v648
        %v650 = vand.u32 %v425, 4294901760
        %651 = vmatprep.subr.mxu0 %v650
        %v652 = vand.u32 %v424, 4294901760
        %653 = vmatpush1.msra.mxu0 %v652
        %v654 = vand.u32 %v427, 4294901760
        %655 = vmatprep.subr.mxu0 %v654
        %v656 = vand.u32 %v426, 4294901760
        %657 = vmatpush1.msra.mxu0 %v656
        %v658 = vand.u32 %v429, 4294901760
        %659 = vmatprep.subr.mxu0 %v658
        %v660 = vand.u32 %v428, 4294901760
        %661 = vmatpush1.msra.mxu0 %v660
        %v662 = vand.u32 %v431, 4294901760
        %663 = vmatprep.subr.mxu0 %v662
        %v664 = vand.u32 %v430, 4294901760
        %665 = vmatpush1.msra.mxu0 %v664
        %v666 = vand.u32 %v433, 4294901760
        %667 = vmatprep.subr.mxu0 %v666
        %v668 = vand.u32 %v432, 4294901760
        %669 = vmatpush1.msra.mxu0 %v668
        %v670 = vand.u32 %v435, 4294901760
        %671 = vmatprep.subr.mxu0 %v670
        %v672 = vand.u32 %v434, 4294901760
        %673 = vmatpush1.msra.mxu0 %v672
        %v674 = vand.u32 %v437, 4294901760
        %675 = vmatprep.subr.mxu0 %v674
        %v676 = vand.u32 %v436, 4294901760
        %677 = vmatpush1.msra.mxu0 %v676
        %v678 = vand.u32 %v439, 4294901760
        %679 = vmatprep.subr.mxu0 %v678
        %v680 = vand.u32 %v438, 4294901760
        %681 = vmatpush1.msra.mxu0 %v680
        %v682 = vand.u32 %v441, 4294901760
        %683 = vmatprep.subr.mxu0 %v682
        %v684 = vand.u32 %v440, 4294901760
        %685 = vmatpush1.msra.mxu0 %v684
        %v686 = vand.u32 %v443, 4294901760
        %687 = vmatprep.subr.mxu0 %v686
        %v688 = vand.u32 %v442, 4294901760
        %689 = vmatpush1.msra.mxu0 %v688
        %v690 = vand.u32 %v445, 4294901760
        %691 = vmatprep.subr.mxu0 %v690
        %v692 = vand.u32 %v444, 4294901760
        %693 = vmatpush1.msra.mxu0 %v692
        %v694 = vand.u32 %v447, 4294901760
        %695 = vmatprep.subr.mxu0 %v694
        %v696 = vand.u32 %v446, 4294901760
        %697 = vmatpush1.msra.mxu0 %v696
        %v698 = vand.u32 %v449, 4294901760
        %699 = vmatprep.subr.mxu0 %v698
        %v700 = vand.u32 %v448, 4294901760
        %701 = vmatpush1.msra.mxu0 %v700
        %v702 = vand.u32 %v451, 4294901760
        %703 = vmatprep.subr.mxu0 %v702
        %v704 = vand.u32 %v450, 4294901760
        %705 = vmatpush1.msra.mxu0 %v704
        %v706 = vand.u32 %v453, 4294901760
        %707 = vmatprep.subr.mxu0 %v706
        %v708 = vand.u32 %v452, 4294901760
        %709 = vmatpush1.msra.mxu0 %v708
        %v710 = vand.u32 %v325, 4294901760
        %v711 = vsub.f32 %v325, %v710
        %v712 = vand.u32 %v711, 4294901760
        %v713 = vsub.f32 %v711, %v712
        %v714 = vand.u32 %v713, 4294901760
        %715 = vmatprep.mubr.f32.mxu0 %v714
        %v716 = vand.u32 %v324, 4294901760
        %v717 = vsub.f32 %v324, %v716
        %v718 = vand.u32 %v717, 4294901760
        %v719 = vsub.f32 %v717, %v718
        %v720 = vand.u32 %v719, 4294901760
        %721 = vmatmul.mubr.f32.gmra.mrb[0].mxu0 %v720
        %v722 = vpop.f32.mrb[0].mxu0
        %v723 = vadd.f32 0.0, %v722
        %v724 = vpop.f32.mrb[0].mxu0
        %v725 = vadd.f32 0.0, %v724
        %v726 = vand.u32 %v331, 4294901760
        %v727 = vsub.f32 %v331, %v726
        %v728 = vand.u32 %v727, 4294901760
        %v729 = vsub.f32 %v727, %v728
        %v730 = vand.u32 %v729, 4294901760
        %731 = vmatprep.mubr.f32.mxu0 %v730
        %v732 = vand.u32 %v330, 4294901760
        %v733 = vsub.f32 %v330, %v732
        %v734 = vand.u32 %v733, 4294901760
        %v735 = vsub.f32 %v733, %v734
        %v736 = vand.u32 %v735, 4294901760
        %737 = vmatmul.mubr.f32.gmra.mrb[0].mxu0 %v736
        %v738 = vpop.f32.mrb[0].mxu0
        %v739 = vadd.f32 0.0, %v738
        %v740 = vpop.f32.mrb[0].mxu0
        %v741 = vadd.f32 0.0, %v740
        %v742 = vand.u32 %v337, 4294901760
        %v743 = vsub.f32 %v337, %v742
        %v744 = vand.u32 %v743, 4294901760
        %v745 = vsub.f32 %v743, %v744
        %v746 = vand.u32 %v745, 4294901760
        %747 = vmatprep.mubr.f32.mxu0 %v746
        %v748 = vand.u32 %v336, 4294901760
        %v749 = vsub.f32 %v336, %v748
        %v750 = vand.u32 %v749, 4294901760
        %v751 = vsub.f32 %v749, %v750
        %v752 = vand.u32 %v751, 4294901760
        %753 = vmatmul.mubr.f32.gmra.mrb[0].mxu0 %v752
        %v754 = vpop.f32.mrb[0].mxu0
        %v755 = vadd.f32 0.0, %v754
        %v756 = vpop.f32.mrb[0].mxu0
        %v757 = vadd.f32 0.0, %v756
        %v758 = vand.u32 %v343, 4294901760
        %v759 = vsub.f32 %v343, %v758
        %v760 = vand.u32 %v759, 4294901760
        %v761 = vsub.f32 %v759, %v760
        %v762 = vand.u32 %v761, 4294901760
        %763 = vmatprep.mubr.f32.mxu0 %v762
        %v764 = vand.u32 %v342, 4294901760
        %v765 = vsub.f32 %v342, %v764
        %v766 = vand.u32 %v765, 4294901760
        %v767 = vsub.f32 %v765, %v766
        %v768 = vand.u32 %v767, 4294901760
        %769 = vmatmul.mubr.f32.gmra.mrb[0].mxu0 %v768
        %v770 = vpop.f32.mrb[0].mxu0
        %v771 = vadd.f32 0.0, %v770
        %v772 = vpop.f32.mrb[0].mxu0
        %v773 = vadd.f32 0.0, %v772
        %v774 = vand.u32 %v349, 4294901760
        %v775 = vsub.f32 %v349, %v774
        %v776 = vand.u32 %v775, 4294901760
        %v777 = vsub.f32 %v775, %v776
        %v778 = vand.u32 %v777, 4294901760
        %779 = vmatprep.mubr.f32.mxu0 %v778
        %v780 = vand.u32 %v348, 4294901760
        %v781 = vsub.f32 %v348, %v780
        %v782 = vand.u32 %v781, 4294901760
        %v783 = vsub.f32 %v781, %v782
        %v784 = vand.u32 %v783, 4294901760
        %785 = vmatmul.mubr.f32.gmra.mrb[0].mxu0 %v784
        %v786 = vpop.f32.mrb[0].mxu0
        %v787 = vadd.f32 0.0, %v786
        %v788 = vpop.f32.mrb[0].mxu0
        %v789 = vadd.f32 0.0, %v788
        %v790 = vand.u32 %v355, 4294901760
        %v791 = vsub.f32 %v355, %v790
        %v792 = vand.u32 %v791, 4294901760
        %v793 = vsub.f32 %v791, %v792
        %v794 = vand.u32 %v793, 4294901760
        %795 = vmatprep.mubr.f32.mxu0 %v794
        %v796 = vand.u32 %v354, 4294901760
        %v797 = vsub.f32 %v354, %v796
        %v798 = vand.u32 %v797, 4294901760
        %v799 = vsub.f32 %v797, %v798
        %v800 = vand.u32 %v799, 4294901760
        %801 = vmatmul.mubr.f32.gmra.mrb[0].mxu0 %v800
        %v802 = vpop.f32.mrb[0].mxu0
        %v803 = vadd.f32 0.0, %v802
        %v804 = vpop.f32.mrb[0].mxu0
        %v805 = vadd.f32 0.0, %v804
        %v806 = vand.u32 %v361, 4294901760
        %v807 = vsub.f32 %v361, %v806
        %v808 = vand.u32 %v807, 4294901760
        %v809 = vsub.f32 %v807, %v808
        %v810 = vand.u32 %v809, 4294901760
        %811 = vmatprep.mubr.f32.mxu0 %v810
        %v812 = vand.u32 %v360, 4294901760
        %v813 = vsub.f32 %v360, %v812
        %v814 = vand.u32 %v813, 4294901760
        %v815 = vsub.f32 %v813, %v814
        %v816 = vand.u32 %v815, 4294901760
        %817 = vmatmul.mubr.f32.gmra.mrb[0].mxu0 %v816
        %v818 = vpop.f32.mrb[0].mxu0
        %v819 = vadd.f32 0.0, %v818
        %v820 = vpop.f32.mrb[0].mxu0
        %v821 = vadd.f32 0.0, %v820
        %v822 = vand.u32 %v367, 4294901760
        %v823 = vsub.f32 %v367, %v822
        %v824 = vand.u32 %v823, 4294901760
        %v825 = vsub.f32 %v823, %v824
        %v826 = vand.u32 %v825, 4294901760
        %827 = vmatprep.mubr.f32.mxu0 %v826
        %v828 = vand.u32 %v366, 4294901760
        %v829 = vsub.f32 %v366, %v828
        %v830 = vand.u32 %v829, 4294901760
        %v831 = vsub.f32 %v829, %v830
        %v832 = vand.u32 %v831, 4294901760
        %833 = vmatmul.mubr.f32.gmra.mrb[0].mxu0 %v832
        %v834 = vpop.f32.mrb[0].mxu0
        %v835 = vadd.f32 0.0, %v834
        %v836 = vpop.f32.mrb[0].mxu0
        %v837 = vadd.f32 0.0, %v836
        %v838 = vand.u32 %v373, 4294901760
        %v839 = vsub.f32 %v373, %v838
        %v840 = vand.u32 %v839, 4294901760
        %v841 = vsub.f32 %v839, %v840
        %v842 = vand.u32 %v841, 4294901760
        %843 = vmatprep.mubr.f32.mxu0 %v842
        %v844 = vand.u32 %v372, 4294901760
        %v845 = vsub.f32 %v372, %v844
        %v846 = vand.u32 %v845, 4294901760
        %v847 = vsub.f32 %v845, %v846
        %v848 = vand.u32 %v847, 4294901760
        %849 = vmatmul.mubr.f32.gmra.mrb[0].mxu0 %v848
        %v850 = vpop.f32.mrb[0].mxu0
        %v851 = vadd.f32 0.0, %v850
        %v852 = vpop.f32.mrb[0].mxu0
        %v853 = vadd.f32 0.0, %v852
        %v854 = vand.u32 %v379, 4294901760
        %v855 = vsub.f32 %v379, %v854
        %v856 = vand.u32 %v855, 4294901760
        %v857 = vsub.f32 %v855, %v856
        %v858 = vand.u32 %v857, 4294901760
        %859 = vmatprep.mubr.f32.mxu0 %v858
        %v860 = vand.u32 %v378, 4294901760
        %v861 = vsub.f32 %v378, %v860
        %v862 = vand.u32 %v861, 4294901760
        %v863 = vsub.f32 %v861, %v862
        %v864 = vand.u32 %v863, 4294901760
        %865 = vmatmul.mubr.f32.gmra.mrb[0].mxu0 %v864
        %v866 = vpop.f32.mrb[0].mxu0
        %v867 = vadd.f32 0.0, %v866
        %v868 = vpop.f32.mrb[0].mxu0
        %v869 = vadd.f32 0.0, %v868
        %v870 = vand.u32 %v385, 4294901760
        %v871 = vsub.f32 %v385, %v870
        %v872 = vand.u32 %v871, 4294901760
        %v873 = vsub.f32 %v871, %v872
        %v874 = vand.u32 %v873, 4294901760
        %875 = vmatprep.mubr.f32.mxu0 %v874
        %v876 = vand.u32 %v384, 4294901760
        %v877 = vsub.f32 %v384, %v876
        %v878 = vand.u32 %v877, 4294901760
        %v879 = vsub.f32 %v877, %v878
        %v880 = vand.u32 %v879, 4294901760
        %881 = vmatmul.mubr.f32.gmra.mrb[0].mxu0 %v880
        %v882 = vpop.f32.mrb[0].mxu0
        %v883 = vadd.f32 0.0, %v882
        %v884 = vpop.f32.mrb[0].mxu0
        %v885 = vadd.f32 0.0, %v884
        %886 = vdwg.mxu0
        %v887 = vand.u32 %v391, 4294901760
        %v888 = vsub.f32 %v391, %v887
        %v889 = vand.u32 %v888, 4294901760
        %v890 = vsub.f32 %v888, %v889
        %v891 = vand.u32 %v890, 4294901760
        %892 = vmatprep.subr.mxu0 %v891
        %v893 = vand.u32 %v390, 4294901760
        %v894 = vsub.f32 %v390, %v893
        %v895 = vand.u32 %v894, 4294901760
        %v896 = vsub.f32 %v894, %v895
        %v897 = vand.u32 %v896, 4294901760
        %898 = vmatpush1.msra.mxu0 %v897
        %v899 = vand.u32 %v393, 4294901760
        %v900 = vsub.f32 %v393, %v899
        %v901 = vand.u32 %v900, 4294901760
        %v902 = vsub.f32 %v900, %v901
        %v903 = vand.u32 %v902, 4294901760
        %904 = vmatprep.subr.mxu0 %v903
        %v905 = vand.u32 %v392, 4294901760
        %v906 = vsub.f32 %v392, %v905
        %v907 = vand.u32 %v906, 4294901760
        %v908 = vsub.f32 %v906, %v907
        %v909 = vand.u32 %v908, 4294901760
        %910 = vmatpush1.msra.mxu0 %v909
        %v911 = vand.u32 %v395, 4294901760
        %v912 = vsub.f32 %v395, %v911
        %v913 = vand.u32 %v912, 4294901760
        %v914 = vsub.f32 %v912, %v913
        %v915 = vand.u32 %v914, 4294901760
        %916 = vmatprep.subr.mxu0 %v915
        %v917 = vand.u32 %v394, 4294901760
        %v918 = vsub.f32 %v394, %v917
        %v919 = vand.u32 %v918, 4294901760
        %v920 = vsub.f32 %v918, %v919
        %v921 = vand.u32 %v920, 4294901760
        %922 = vmatpush1.msra.mxu0 %v921
        %v923 = vand.u32 %v397, 4294901760
        %v924 = vsub.f32 %v397, %v923
        %v925 = vand.u32 %v924, 4294901760
        %v926 = vsub.f32 %v924, %v925
        %v927 = vand.u32 %v926, 4294901760
        %928 = vmatprep.subr.mxu0 %v927
        %v929 = vand.u32 %v396, 4294901760
        %v930 = vsub.f32 %v396, %v929
        %v931 = vand.u32 %v930, 4294901760
        %v932 = vsub.f32 %v930, %v931
        %v933 = vand.u32 %v932, 4294901760
        %934 = vmatpush1.msra.mxu0 %v933
        %v935 = vand.u32 %v399, 4294901760
        %v936 = vsub.f32 %v399, %v935
        %v937 = vand.u32 %v936, 4294901760
        %v938 = vsub.f32 %v936, %v937
        %v939 = vand.u32 %v938, 4294901760
        %940 = vmatprep.subr.mxu0 %v939
        %v941 = vand.u32 %v398, 4294901760
        %v942 = vsub.f32 %v398, %v941
        %v943 = vand.u32 %v942, 4294901760
        %v944 = vsub.f32 %v942, %v943
        %v945 = vand.u32 %v944, 4294901760
        %946 = vmatpush1.msra.mxu0 %v945
        %v947 = vand.u32 %v401, 4294901760
        %v948 = vsub.f32 %v401, %v947
        %v949 = vand.u32 %v948, 4294901760
        %v950 = vsub.f32 %v948, %v949
        %v951 = vand.u32 %v950, 4294901760
        %952 = vmatprep.subr.mxu0 %v951
        %v953 = vand.u32 %v400, 4294901760
        %v954 = vsub.f32 %v400, %v953
        %v955 = vand.u32 %v954, 4294901760
        %v956 = vsub.f32 %v954, %v955
        %v957 = vand.u32 %v956, 4294901760
        %958 = vmatpush1.msra.mxu0 %v957
        %v959 = vand.u32 %v403, 4294901760
        %v960 = vsub.f32 %v403, %v959
        %v961 = vand.u32 %v960, 4294901760
        %v962 = vsub.f32 %v960, %v961
        %v963 = vand.u32 %v962, 4294901760
        %964 = vmatprep.subr.mxu0 %v963
        %v965 = vand.u32 %v402, 4294901760
        %v966 = vsub.f32 %v402, %v965
        %v967 = vand.u32 %v966, 4294901760
        %v968 = vsub.f32 %v966, %v967
        %v969 = vand.u32 %v968, 4294901760
        %970 = vmatpush1.msra.mxu0 %v969
        %v971 = vand.u32 %v405, 4294901760
        %v972 = vsub.f32 %v405, %v971
        %v973 = vand.u32 %v972, 4294901760
        %v974 = vsub.f32 %v972, %v973
        %v975 = vand.u32 %v974, 4294901760
        %976 = vmatprep.subr.mxu0 %v975
        %v977 = vand.u32 %v404, 4294901760
        %v978 = vsub.f32 %v404, %v977
        %v979 = vand.u32 %v978, 4294901760
        %v980 = vsub.f32 %v978, %v979
        %v981 = vand.u32 %v980, 4294901760
        %982 = vmatpush1.msra.mxu0 %v981
        %v983 = vand.u32 %v407, 4294901760
        %v984 = vsub.f32 %v407, %v983
        %v985 = vand.u32 %v984, 4294901760
        %v986 = vsub.f32 %v984, %v985
        %v987 = vand.u32 %v986, 4294901760
        %988 = vmatprep.subr.mxu0 %v987
        %v989 = vand.u32 %v406, 4294901760
        %v990 = vsub.f32 %v406, %v989
        %v991 = vand.u32 %v990, 4294901760
        %v992 = vsub.f32 %v990, %v991
        %v993 = vand.u32 %v992, 4294901760
        %994 = vmatpush1.msra.mxu0 %v993
        %v995 = vand.u32 %v409, 4294901760
        %v996 = vsub.f32 %v409, %v995
        %v997 = vand.u32 %v996, 4294901760
        %v998 = vsub.f32 %v996, %v997
        %v999 = vand.u32 %v998, 4294901760
        %1000 = vmatprep.subr.mxu0 %v999
        %v1001 = vand.u32 %v408, 4294901760
        %v1002 = vsub.f32 %v408, %v1001
        %v1003 = vand.u32 %v1002, 4294901760
        %v1004 = vsub.f32 %v1002, %v1003
        %v1005 = vand.u32 %v1004, 4294901760
        %1006 = vmatpush1.msra.mxu0 %v1005
        %v1007 = vand.u32 %v411, 4294901760
        %v1008 = vsub.f32 %v411, %v1007
        %v1009 = vand.u32 %v1008, 4294901760
        %v1010 = vsub.f32 %v1008, %v1009
        %v1011 = vand.u32 %v1010, 4294901760
        %1012 = vmatprep.subr.mxu0 %v1011
        %v1013 = vand.u32 %v410, 4294901760
        %v1014 = vsub.f32 %v410, %v1013
        %v1015 = vand.u32 %v1014, 4294901760
        %v1016 = vsub.f32 %v1014, %v1015
        %v1017 = vand.u32 %v1016, 4294901760
        %1018 = vmatpush1.msra.mxu0 %v1017
        %v1019 = vand.u32 %v413, 4294901760
        %v1020 = vsub.f32 %v413, %v1019
        %v1021 = vand.u32 %v1020, 4294901760
        %v1022 = vsub.f32 %v1020, %v1021
        %v1023 = vand.u32 %v1022, 4294901760
        %1024 = vmatprep.subr.mxu0 %v1023
        %v1025 = vand.u32 %v412, 4294901760
        %v1026 = vsub.f32 %v412, %v1025
        %v1027 = vand.u32 %v1026, 4294901760
        %v1028 = vsub.f32 %v1026, %v1027
        %v1029 = vand.u32 %v1028, 4294901760
        %1030 = vmatpush1.msra.mxu0 %v1029
        %v1031 = vand.u32 %v415, 4294901760
        %v1032 = vsub.f32 %v415, %v1031
        %v1033 = vand.u32 %v1032, 4294901760
        %v1034 = vsub.f32 %v1032, %v1033
        %v1035 = vand.u32 %v1034, 4294901760
        %1036 = vmatprep.subr.mxu0 %v1035
        %v1037 = vand.u32 %v414, 4294901760
        %v1038 = vsub.f32 %v414, %v1037
        %v1039 = vand.u32 %v1038, 4294901760
        %v1040 = vsub.f32 %v1038, %v1039
        %v1041 = vand.u32 %v1040, 4294901760
        %1042 = vmatpush1.msra.mxu0 %v1041
        %v1043 = vand.u32 %v417, 4294901760
        %v1044 = vsub.f32 %v417, %v1043
        %v1045 = vand.u32 %v1044, 4294901760
        %v1046 = vsub.f32 %v1044, %v1045
        %v1047 = vand.u32 %v1046, 4294901760
        %1048 = vmatprep.subr.mxu0 %v1047
        %v1049 = vand.u32 %v416, 4294901760
        %v1050 = vsub.f32 %v416, %v1049
        %v1051 = vand.u32 %v1050, 4294901760
        %v1052 = vsub.f32 %v1050, %v1051
        %v1053 = vand.u32 %v1052, 4294901760
        %1054 = vmatpush1.msra.mxu0 %v1053
        %v1055 = vand.u32 %v419, 4294901760
        %v1056 = vsub.f32 %v419, %v1055
        %v1057 = vand.u32 %v1056, 4294901760
        %v1058 = vsub.f32 %v1056, %v1057
        %v1059 = vand.u32 %v1058, 4294901760
        %1060 = vmatprep.subr.mxu0 %v1059
        %v1061 = vand.u32 %v418, 4294901760
        %v1062 = vsub.f32 %v418, %v1061
        %v1063 = vand.u32 %v1062, 4294901760
        %v1064 = vsub.f32 %v1062, %v1063
        %v1065 = vand.u32 %v1064, 4294901760
        %1066 = vmatpush1.msra.mxu0 %v1065
        %v1067 = vand.u32 %v421, 4294901760
        %v1068 = vsub.f32 %v421, %v1067
        %v1069 = vand.u32 %v1068, 4294901760
        %v1070 = vsub.f32 %v1068, %v1069
        %v1071 = vand.u32 %v1070, 4294901760
        %1072 = vmatprep.subr.mxu0 %v1071
        %v1073 = vand.u32 %v420, 4294901760
        %v1074 = vsub.f32 %v420, %v1073
        %v1075 = vand.u32 %v1074, 4294901760
        %v1076 = vsub.f32 %v1074, %v1075
        %v1077 = vand.u32 %v1076, 4294901760
        %1078 = vmatpush1.msra.mxu0 %v1077
        %v1079 = vand.u32 %v423, 4294901760
        %v1080 = vsub.f32 %v423, %v1079
        %v1081 = vand.u32 %v1080, 4294901760
        %v1082 = vsub.f32 %v1080, %v1081
        %v1083 = vand.u32 %v1082, 4294901760
        %1084 = vmatprep.subr.mxu0 %v1083
        %v1085 = vand.u32 %v422, 4294901760
        %v1086 = vsub.f32 %v422, %v1085
        %v1087 = vand.u32 %v1086, 4294901760
        %v1088 = vsub.f32 %v1086, %v1087
        %v1089 = vand.u32 %v1088, 4294901760
        %1090 = vmatpush1.msra.mxu0 %v1089
        %v1091 = vand.u32 %v425, 4294901760
        %v1092 = vsub.f32 %v425, %v1091
        %v1093 = vand.u32 %v1092, 4294901760
        %v1094 = vsub.f32 %v1092, %v1093
        %v1095 = vand.u32 %v1094, 4294901760
        %1096 = vmatprep.subr.mxu0 %v1095
        %v1097 = vand.u32 %v424, 4294901760
        %v1098 = vsub.f32 %v424, %v1097
        %v1099 = vand.u32 %v1098, 4294901760
        %v1100 = vsub.f32 %v1098, %v1099
        %v1101 = vand.u32 %v1100, 4294901760
        %1102 = vmatpush1.msra.mxu0 %v1101
        %v1103 = vand.u32 %v427, 4294901760
        %v1104 = vsub.f32 %v427, %v1103
        %v1105 = vand.u32 %v1104, 4294901760
        %v1106 = vsub.f32 %v1104, %v1105
        %v1107 = vand.u32 %v1106, 4294901760
        %1108 = vmatprep.subr.mxu0 %v1107
        %v1109 = vand.u32 %v426, 4294901760
        %v1110 = vsub.f32 %v426, %v1109
        %v1111 = vand.u32 %v1110, 4294901760
        %v1112 = vsub.f32 %v1110, %v1111
        %v1113 = vand.u32 %v1112, 4294901760
        %1114 = vmatpush1.msra.mxu0 %v1113
        %v1115 = vand.u32 %v429, 4294901760
        %v1116 = vsub.f32 %v429, %v1115
        %v1117 = vand.u32 %v1116, 4294901760
        %v1118 = vsub.f32 %v1116, %v1117
        %v1119 = vand.u32 %v1118, 4294901760
        %1120 = vmatprep.subr.mxu0 %v1119
        %v1121 = vand.u32 %v428, 4294901760
        %v1122 = vsub.f32 %v428, %v1121
        %v1123 = vand.u32 %v1122, 4294901760
        %v1124 = vsub.f32 %v1122, %v1123
        %v1125 = vand.u32 %v1124, 4294901760
        %1126 = vmatpush1.msra.mxu0 %v1125
        %v1127 = vand.u32 %v431, 4294901760
        %v1128 = vsub.f32 %v431, %v1127
        %v1129 = vand.u32 %v1128, 4294901760
        %v1130 = vsub.f32 %v1128, %v1129
        %v1131 = vand.u32 %v1130, 4294901760
        %1132 = vmatprep.subr.mxu0 %v1131
        %v1133 = vand.u32 %v430, 4294901760
        %v1134 = vsub.f32 %v430, %v1133
        %v1135 = vand.u32 %v1134, 4294901760
        %v1136 = vsub.f32 %v1134, %v1135
        %v1137 = vand.u32 %v1136, 4294901760
        %1138 = vmatpush1.msra.mxu0 %v1137
        %v1139 = vand.u32 %v433, 4294901760
        %v1140 = vsub.f32 %v433, %v1139
        %v1141 = vand.u32 %v1140, 4294901760
        %v1142 = vsub.f32 %v1140, %v1141
        %v1143 = vand.u32 %v1142, 4294901760
        %1144 = vmatprep.subr.mxu0 %v1143
        %v1145 = vand.u32 %v432, 4294901760
        %v1146 = vsub.f32 %v432, %v1145
        %v1147 = vand.u32 %v1146, 4294901760
        %v1148 = vsub.f32 %v1146, %v1147
        %v1149 = vand.u32 %v1148, 4294901760
        %1150 = vmatpush1.msra.mxu0 %v1149
        %v1151 = vand.u32 %v435, 4294901760
        %v1152 = vsub.f32 %v435, %v1151
        %v1153 = vand.u32 %v1152, 4294901760
        %v1154 = vsub.f32 %v1152, %v1153
        %v1155 = vand.u32 %v1154, 4294901760
        %1156 = vmatprep.subr.mxu0 %v1155
        %v1157 = vand.u32 %v434, 4294901760
        %v1158 = vsub.f32 %v434, %v1157
        %v1159 = vand.u32 %v1158, 4294901760
        %v1160 = vsub.f32 %v1158, %v1159
        %v1161 = vand.u32 %v1160, 4294901760
        %1162 = vmatpush1.msra.mxu0 %v1161
        %v1163 = vand.u32 %v437, 4294901760
        %v1164 = vsub.f32 %v437, %v1163
        %v1165 = vand.u32 %v1164, 4294901760
        %v1166 = vsub.f32 %v1164, %v1165
        %v1167 = vand.u32 %v1166, 4294901760
        %1168 = vmatprep.subr.mxu0 %v1167
        %v1169 = vand.u32 %v436, 4294901760
        %v1170 = vsub.f32 %v436, %v1169
        %v1171 = vand.u32 %v1170, 4294901760
        %v1172 = vsub.f32 %v1170, %v1171
        %v1173 = vand.u32 %v1172, 4294901760
        %1174 = vmatpush1.msra.mxu0 %v1173
        %v1175 = vand.u32 %v439, 4294901760
        %v1176 = vsub.f32 %v439, %v1175
        %v1177 = vand.u32 %v1176, 4294901760
        %v1178 = vsub.f32 %v1176, %v1177
        %v1179 = vand.u32 %v1178, 4294901760
        %1180 = vmatprep.subr.mxu0 %v1179
        %v1181 = vand.u32 %v438, 4294901760
        %v1182 = vsub.f32 %v438, %v1181
        %v1183 = vand.u32 %v1182, 4294901760
        %v1184 = vsub.f32 %v1182, %v1183
        %v1185 = vand.u32 %v1184, 4294901760
        %1186 = vmatpush1.msra.mxu0 %v1185
        %v1187 = vand.u32 %v441, 4294901760
        %v1188 = vsub.f32 %v441, %v1187
        %v1189 = vand.u32 %v1188, 4294901760
        %v1190 = vsub.f32 %v1188, %v1189
        %v1191 = vand.u32 %v1190, 4294901760
        %1192 = vmatprep.subr.mxu0 %v1191
        %v1193 = vand.u32 %v440, 4294901760
        %v1194 = vsub.f32 %v440, %v1193
        %v1195 = vand.u32 %v1194, 4294901760
        %v1196 = vsub.f32 %v1194, %v1195
        %v1197 = vand.u32 %v1196, 4294901760
        %1198 = vmatpush1.msra.mxu0 %v1197
        %v1199 = vand.u32 %v443, 4294901760
        %v1200 = vsub.f32 %v443, %v1199
        %v1201 = vand.u32 %v1200, 4294901760
        %v1202 = vsub.f32 %v1200, %v1201
        %v1203 = vand.u32 %v1202, 4294901760
        %1204 = vmatprep.subr.mxu0 %v1203
        %v1205 = vand.u32 %v442, 4294901760
        %v1206 = vsub.f32 %v442, %v1205
        %v1207 = vand.u32 %v1206, 4294901760
        %v1208 = vsub.f32 %v1206, %v1207
        %v1209 = vand.u32 %v1208, 4294901760
        %1210 = vmatpush1.msra.mxu0 %v1209
        %v1211 = vand.u32 %v445, 4294901760
        %v1212 = vsub.f32 %v445, %v1211
        %v1213 = vand.u32 %v1212, 4294901760
        %v1214 = vsub.f32 %v1212, %v1213
        %v1215 = vand.u32 %v1214, 4294901760
        %1216 = vmatprep.subr.mxu0 %v1215
        %v1217 = vand.u32 %v444, 4294901760
        %v1218 = vsub.f32 %v444, %v1217
        %v1219 = vand.u32 %v1218, 4294901760
        %v1220 = vsub.f32 %v1218, %v1219
        %v1221 = vand.u32 %v1220, 4294901760
        %1222 = vmatpush1.msra.mxu0 %v1221
        %v1223 = vand.u32 %v447, 4294901760
        %v1224 = vsub.f32 %v447, %v1223
        %v1225 = vand.u32 %v1224, 4294901760
        %v1226 = vsub.f32 %v1224, %v1225
        %v1227 = vand.u32 %v1226, 4294901760
        %1228 = vmatprep.subr.mxu0 %v1227
        %v1229 = vand.u32 %v446, 4294901760
        %v1230 = vsub.f32 %v446, %v1229
        %v1231 = vand.u32 %v1230, 4294901760
        %v1232 = vsub.f32 %v1230, %v1231
        %v1233 = vand.u32 %v1232, 4294901760
        %1234 = vmatpush1.msra.mxu0 %v1233
        %v1235 = vand.u32 %v449, 4294901760
        %v1236 = vsub.f32 %v449, %v1235
        %v1237 = vand.u32 %v1236, 4294901760
        %v1238 = vsub.f32 %v1236, %v1237
        %v1239 = vand.u32 %v1238, 4294901760
        %1240 = vmatprep.subr.mxu0 %v1239
        %v1241 = vand.u32 %v448, 4294901760
        %v1242 = vsub.f32 %v448, %v1241
        %v1243 = vand.u32 %v1242, 4294901760
        %v1244 = vsub.f32 %v1242, %v1243
        %v1245 = vand.u32 %v1244, 4294901760
        %1246 = vmatpush1.msra.mxu0 %v1245
        %v1247 = vand.u32 %v451, 4294901760
        %v1248 = vsub.f32 %v451, %v1247
        %v1249 = vand.u32 %v1248, 4294901760
        %v1250 = vsub.f32 %v1248, %v1249
        %v1251 = vand.u32 %v1250, 4294901760
        %1252 = vmatprep.subr.mxu0 %v1251
        %v1253 = vand.u32 %v450, 4294901760
        %v1254 = vsub.f32 %v450, %v1253
        %v1255 = vand.u32 %v1254, 4294901760
        %v1256 = vsub.f32 %v1254, %v1255
        %v1257 = vand.u32 %v1256, 4294901760
        %1258 = vmatpush1.msra.mxu0 %v1257
        %v1259 = vand.u32 %v453, 4294901760
        %v1260 = vsub.f32 %v453, %v1259
        %v1261 = vand.u32 %v1260, 4294901760
        %v1262 = vsub.f32 %v1260, %v1261
        %v1263 = vand.u32 %v1262, 4294901760
        %1264 = vmatprep.subr.mxu0 %v1263
        %v1265 = vand.u32 %v452, 4294901760
        %v1266 = vsub.f32 %v452, %v1265
        %v1267 = vand.u32 %v1266, 4294901760
        %v1268 = vsub.f32 %v1266, %v1267
        %v1269 = vand.u32 %v1268, 4294901760
        %1270 = vmatpush1.msra.mxu0 %v1269
        %v1271 = vand.u32 %v325, 4294901760
        %1272 = vmatprep.mubr.f32.mxu0 %v1271
        %v1273 = vand.u32 %v324, 4294901760
        %1274 = vmatmul.mubr.f32.gmra.mrb[0].mxu0 %v1273
        %v1275 = vpop.f32.mrb[0].mxu0
        %v1276 = vadd.f32 %v723, %v1275
        %v1277 = vpop.f32.mrb[0].mxu0
        %v1278 = vadd.f32 %v725, %v1277
        %v1279 = vand.u32 %v331, 4294901760
        %1280 = vmatprep.mubr.f32.mxu0 %v1279
        %v1281 = vand.u32 %v330, 4294901760
        %1282 = vmatmul.mubr.f32.gmra.mrb[0].mxu0 %v1281
        %v1283 = vpop.f32.mrb[0].mxu0
        %v1284 = vadd.f32 %v739, %v1283
        %v1285 = vpop.f32.mrb[0].mxu0
        %v1286 = vadd.f32 %v741, %v1285
        %v1287 = vand.u32 %v337, 4294901760
        %1288 = vmatprep.mubr.f32.mxu0 %v1287
        %v1289 = vand.u32 %v336, 4294901760
        %1290 = vmatmul.mubr.f32.gmra.mrb[0].mxu0 %v1289
        %v1291 = vpop.f32.mrb[0].mxu0
        %v1292 = vadd.f32 %v755, %v1291
        %v1293 = vpop.f32.mrb[0].mxu0
        %v1294 = vadd.f32 %v757, %v1293
        %v1295 = vand.u32 %v343, 4294901760
        %1296 = vmatprep.mubr.f32.mxu0 %v1295
        %v1297 = vand.u32 %v342, 4294901760
        %1298 = vmatmul.mubr.f32.gmra.mrb[0].mxu0 %v1297
        %v1299 = vpop.f32.mrb[0].mxu0
        %v1300 = vadd.f32 %v771, %v1299
        %v1301 = vpop.f32.mrb[0].mxu0
        %v1302 = vadd.f32 %v773, %v1301
        %v1303 = vand.u32 %v349, 4294901760
        %1304 = vmatprep.mubr.f32.mxu0 %v1303
        %v1305 = vand.u32 %v348, 4294901760
        %1306 = vmatmul.mubr.f32.gmra.mrb[0].mxu0 %v1305
        %v1307 = vpop.f32.mrb[0].mxu0
        %v1308 = vadd.f32 %v787, %v1307
        %v1309 = vpop.f32.mrb[0].mxu0
        %v1310 = vadd.f32 %v789, %v1309
        %v1311 = vand.u32 %v355, 4294901760
        %1312 = vmatprep.mubr.f32.mxu0 %v1311
        %v1313 = vand.u32 %v354, 4294901760
        %1314 = vmatmul.mubr.f32.gmra.mrb[0].mxu0 %v1313
        %v1315 = vpop.f32.mrb[0].mxu0
        %v1316 = vadd.f32 %v803, %v1315
        %v1317 = vpop.f32.mrb[0].mxu0
        %v1318 = vadd.f32 %v805, %v1317
        %v1319 = vand.u32 %v361, 4294901760
        %1320 = vmatprep.mubr.f32.mxu0 %v1319
        %v1321 = vand.u32 %v360, 4294901760
        %1322 = vmatmul.mubr.f32.gmra.mrb[0].mxu0 %v1321
        %v1323 = vpop.f32.mrb[0].mxu0
        %v1324 = vadd.f32 %v819, %v1323
        %v1325 = vpop.f32.mrb[0].mxu0
        %v1326 = vadd.f32 %v821, %v1325
        %v1327 = vand.u32 %v367, 4294901760
        %1328 = vmatprep.mubr.f32.mxu0 %v1327
        %v1329 = vand.u32 %v366, 4294901760
        %1330 = vmatmul.mubr.f32.gmra.mrb[0].mxu0 %v1329
        %v1331 = vpop.f32.mrb[0].mxu0
        %v1332 = vadd.f32 %v835, %v1331
        %v1333 = vpop.f32.mrb[0].mxu0
        %v1334 = vadd.f32 %v837, %v1333
        %v1335 = vand.u32 %v373, 4294901760
        %1336 = vmatprep.mubr.f32.mxu0 %v1335
        %v1337 = vand.u32 %v372, 4294901760
        %1338 = vmatmul.mubr.f32.gmra.mrb[0].mxu0 %v1337
        %v1339 = vpop.f32.mrb[0].mxu0
        %v1340 = vadd.f32 %v851, %v1339
        %v1341 = vpop.f32.mrb[0].mxu0
        %v1342 = vadd.f32 %v853, %v1341
        %v1343 = vand.u32 %v379, 4294901760
        %1344 = vmatprep.mubr.f32.mxu0 %v1343
        %v1345 = vand.u32 %v378, 4294901760
        %1346 = vmatmul.mubr.f32.gmra.mrb[0].mxu0 %v1345
        %v1347 = vpop.f32.mrb[0].mxu0
        %v1348 = vadd.f32 %v867, %v1347
        %v1349 = vpop.f32.mrb[0].mxu0
        %v1350 = vadd.f32 %v869, %v1349
        %v1351 = vand.u32 %v385, 4294901760
        %1352 = vmatprep.mubr.f32.mxu0 %v1351
        %v1353 = vand.u32 %v384, 4294901760
        %1354 = vmatmul.mubr.f32.gmra.mrb[0].mxu0 %v1353
        %v1355 = vpop.f32.mrb[0].mxu0
        %v1356 = vadd.f32 %v883, %v1355
        %v1357 = vpop.f32.mrb[0].mxu0
        %v1358 = vadd.f32 %v885, %v1357
        %1359 = vdwg.mxu0
        %v1360 = vand.u32 %v391, 4294901760
        %v1361 = vsub.f32 %v391, %v1360
        %1362 = vmatprep.subr.mxu0 %v1361
        %v1363 = vand.u32 %v390, 4294901760
        %v1364 = vsub.f32 %v390, %v1363
        %1365 = vmatpush1.msra.mxu0 %v1364
        %v1366 = vand.u32 %v393, 4294901760
        %v1367 = vsub.f32 %v393, %v1366
        %1368 = vmatprep.subr.mxu0 %v1367
        %v1369 = vand.u32 %v392, 4294901760
        %v1370 = vsub.f32 %v392, %v1369
        %1371 = vmatpush1.msra.mxu0 %v1370
        %v1372 = vand.u32 %v395, 4294901760
        %v1373 = vsub.f32 %v395, %v1372
        %1374 = vmatprep.subr.mxu0 %v1373
        %v1375 = vand.u32 %v394, 4294901760
        %v1376 = vsub.f32 %v394, %v1375
        %1377 = vmatpush1.msra.mxu0 %v1376
        %v1378 = vand.u32 %v397, 4294901760
        %v1379 = vsub.f32 %v397, %v1378
        %1380 = vmatprep.subr.mxu0 %v1379
        %v1381 = vand.u32 %v396, 4294901760
        %v1382 = vsub.f32 %v396, %v1381
        %1383 = vmatpush1.msra.mxu0 %v1382
        %v1384 = vand.u32 %v399, 4294901760
        %v1385 = vsub.f32 %v399, %v1384
        %1386 = vmatprep.subr.mxu0 %v1385
        %v1387 = vand.u32 %v398, 4294901760
        %v1388 = vsub.f32 %v398, %v1387
        %1389 = vmatpush1.msra.mxu0 %v1388
        %v1390 = vand.u32 %v401, 4294901760
        %v1391 = vsub.f32 %v401, %v1390
        %1392 = vmatprep.subr.mxu0 %v1391
        %v1393 = vand.u32 %v400, 4294901760
        %v1394 = vsub.f32 %v400, %v1393
        %1395 = vmatpush1.msra.mxu0 %v1394
        %v1396 = vand.u32 %v403, 4294901760
        %v1397 = vsub.f32 %v403, %v1396
        %1398 = vmatprep.subr.mxu0 %v1397
        %v1399 = vand.u32 %v402, 4294901760
        %v1400 = vsub.f32 %v402, %v1399
        %1401 = vmatpush1.msra.mxu0 %v1400
        %v1402 = vand.u32 %v405, 4294901760
        %v1403 = vsub.f32 %v405, %v1402
        %1404 = vmatprep.subr.mxu0 %v1403
        %v1405 = vand.u32 %v404, 4294901760
        %v1406 = vsub.f32 %v404, %v1405
        %1407 = vmatpush1.msra.mxu0 %v1406
        %v1408 = vand.u32 %v407, 4294901760
        %v1409 = vsub.f32 %v407, %v1408
        %1410 = vmatprep.subr.mxu0 %v1409
        %v1411 = vand.u32 %v406, 4294901760
        %v1412 = vsub.f32 %v406, %v1411
        %1413 = vmatpush1.msra.mxu0 %v1412
        %v1414 = vand.u32 %v409, 4294901760
        %v1415 = vsub.f32 %v409, %v1414
        %1416 = vmatprep.subr.mxu0 %v1415
        %v1417 = vand.u32 %v408, 4294901760
        %v1418 = vsub.f32 %v408, %v1417
        %1419 = vmatpush1.msra.mxu0 %v1418
        %v1420 = vand.u32 %v411, 4294901760
        %v1421 = vsub.f32 %v411, %v1420
        %1422 = vmatprep.subr.mxu0 %v1421
        %v1423 = vand.u32 %v410, 4294901760
        %v1424 = vsub.f32 %v410, %v1423
        %1425 = vmatpush1.msra.mxu0 %v1424
        %v1426 = vand.u32 %v413, 4294901760
        %v1427 = vsub.f32 %v413, %v1426
        %1428 = vmatprep.subr.mxu0 %v1427
        %v1429 = vand.u32 %v412, 4294901760
        %v1430 = vsub.f32 %v412, %v1429
        %1431 = vmatpush1.msra.mxu0 %v1430
        %v1432 = vand.u32 %v415, 4294901760
        %v1433 = vsub.f32 %v415, %v1432
        %1434 = vmatprep.subr.mxu0 %v1433
        %v1435 = vand.u32 %v414, 4294901760
        %v1436 = vsub.f32 %v414, %v1435
        %1437 = vmatpush1.msra.mxu0 %v1436
        %v1438 = vand.u32 %v417, 4294901760
        %v1439 = vsub.f32 %v417, %v1438
        %1440 = vmatprep.subr.mxu0 %v1439
        %v1441 = vand.u32 %v416, 4294901760
        %v1442 = vsub.f32 %v416, %v1441
        %1443 = vmatpush1.msra.mxu0 %v1442
        %v1444 = vand.u32 %v419, 4294901760
        %v1445 = vsub.f32 %v419, %v1444
        %1446 = vmatprep.subr.mxu0 %v1445
        %v1447 = vand.u32 %v418, 4294901760
        %v1448 = vsub.f32 %v418, %v1447
        %1449 = vmatpush1.msra.mxu0 %v1448
        %v1450 = vand.u32 %v421, 4294901760
        %v1451 = vsub.f32 %v421, %v1450
        %1452 = vmatprep.subr.mxu0 %v1451
        %v1453 = vand.u32 %v420, 4294901760
        %v1454 = vsub.f32 %v420, %v1453
        %1455 = vmatpush1.msra.mxu0 %v1454
        %v1456 = vand.u32 %v423, 4294901760
        %v1457 = vsub.f32 %v423, %v1456
        %1458 = vmatprep.subr.mxu0 %v1457
        %v1459 = vand.u32 %v422, 4294901760
        %v1460 = vsub.f32 %v422, %v1459
        %1461 = vmatpush1.msra.mxu0 %v1460
        %v1462 = vand.u32 %v425, 4294901760
        %v1463 = vsub.f32 %v425, %v1462
        %1464 = vmatprep.subr.mxu0 %v1463
        %v1465 = vand.u32 %v424, 4294901760
        %v1466 = vsub.f32 %v424, %v1465
        %1467 = vmatpush1.msra.mxu0 %v1466
        %v1468 = vand.u32 %v427, 4294901760
        %v1469 = vsub.f32 %v427, %v1468
        %1470 = vmatprep.subr.mxu0 %v1469
        %v1471 = vand.u32 %v426, 4294901760
        %v1472 = vsub.f32 %v426, %v1471
        %1473 = vmatpush1.msra.mxu0 %v1472
        %v1474 = vand.u32 %v429, 4294901760
        %v1475 = vsub.f32 %v429, %v1474
        %1476 = vmatprep.subr.mxu0 %v1475
        %v1477 = vand.u32 %v428, 4294901760
        %v1478 = vsub.f32 %v428, %v1477
        %1479 = vmatpush1.msra.mxu0 %v1478
        %v1480 = vand.u32 %v431, 4294901760
        %v1481 = vsub.f32 %v431, %v1480
        %1482 = vmatprep.subr.mxu0 %v1481
        %v1483 = vand.u32 %v430, 4294901760
        %v1484 = vsub.f32 %v430, %v1483
        %1485 = vmatpush1.msra.mxu0 %v1484
        %v1486 = vand.u32 %v433, 4294901760
        %v1487 = vsub.f32 %v433, %v1486
        %1488 = vmatprep.subr.mxu0 %v1487
        %v1489 = vand.u32 %v432, 4294901760
        %v1490 = vsub.f32 %v432, %v1489
        %1491 = vmatpush1.msra.mxu0 %v1490
        %v1492 = vand.u32 %v435, 4294901760
        %v1493 = vsub.f32 %v435, %v1492
        %1494 = vmatprep.subr.mxu0 %v1493
        %v1495 = vand.u32 %v434, 4294901760
        %v1496 = vsub.f32 %v434, %v1495
        %1497 = vmatpush1.msra.mxu0 %v1496
        %v1498 = vand.u32 %v437, 4294901760
        %v1499 = vsub.f32 %v437, %v1498
        %1500 = vmatprep.subr.mxu0 %v1499
        %v1501 = vand.u32 %v436, 4294901760
        %v1502 = vsub.f32 %v436, %v1501
        %1503 = vmatpush1.msra.mxu0 %v1502
        %v1504 = vand.u32 %v439, 4294901760
        %v1505 = vsub.f32 %v439, %v1504
        %1506 = vmatprep.subr.mxu0 %v1505
        %v1507 = vand.u32 %v438, 4294901760
        %v1508 = vsub.f32 %v438, %v1507
        %1509 = vmatpush1.msra.mxu0 %v1508
        %v1510 = vand.u32 %v441, 4294901760
        %v1511 = vsub.f32 %v441, %v1510
        %1512 = vmatprep.subr.mxu0 %v1511
        %v1513 = vand.u32 %v440, 4294901760
        %v1514 = vsub.f32 %v440, %v1513
        %1515 = vmatpush1.msra.mxu0 %v1514
        %v1516 = vand.u32 %v443, 4294901760
        %v1517 = vsub.f32 %v443, %v1516
        %1518 = vmatprep.subr.mxu0 %v1517
        %v1519 = vand.u32 %v442, 4294901760
        %v1520 = vsub.f32 %v442, %v1519
        %1521 = vmatpush1.msra.mxu0 %v1520
        %v1522 = vand.u32 %v445, 4294901760
        %v1523 = vsub.f32 %v445, %v1522
        %1524 = vmatprep.subr.mxu0 %v1523
        %v1525 = vand.u32 %v444, 4294901760
        %v1526 = vsub.f32 %v444, %v1525
        %1527 = vmatpush1.msra.mxu0 %v1526
        %v1528 = vand.u32 %v447, 4294901760
        %v1529 = vsub.f32 %v447, %v1528
        %1530 = vmatprep.subr.mxu0 %v1529
        %v1531 = vand.u32 %v446, 4294901760
        %v1532 = vsub.f32 %v446, %v1531
        %1533 = vmatpush1.msra.mxu0 %v1532
        %v1534 = vand.u32 %v449, 4294901760
        %v1535 = vsub.f32 %v449, %v1534
        %1536 = vmatprep.subr.mxu0 %v1535
        %v1537 = vand.u32 %v448, 4294901760
        %v1538 = vsub.f32 %v448, %v1537
        %1539 = vmatpush1.msra.mxu0 %v1538
        %v1540 = vand.u32 %v451, 4294901760
        %v1541 = vsub.f32 %v451, %v1540
        %1542 = vmatprep.subr.mxu0 %v1541
        %v1543 = vand.u32 %v450, 4294901760
        %v1544 = vsub.f32 %v450, %v1543
        %1545 = vmatpush1.msra.mxu0 %v1544
        %v1546 = vand.u32 %v453, 4294901760
        %v1547 = vsub.f32 %v453, %v1546
        %1548 = vmatprep.subr.mxu0 %v1547
        %v1549 = vand.u32 %v452, 4294901760
        %v1550 = vsub.f32 %v452, %v1549
        %1551 = vmatpush1.msra.mxu0 %v1550
        %v1552 = vand.u32 %v325, 4294901760
        %v1553 = vsub.f32 %v325, %v1552
        %1554 = vmatprep.mubr.f32.mxu0 %v1553
        %v1555 = vand.u32 %v324, 4294901760
        %v1556 = vsub.f32 %v324, %v1555
        %1557 = vmatmul.mubr.f32.gmra.mrb[0].mxu0 %v1556
        %v1558 = vpop.f32.mrb[0].mxu0
        %v1559 = vadd.f32 %v1276, %v1558
        %v1560 = vpop.f32.mrb[0].mxu0
        %v1561 = vadd.f32 %v1278, %v1560
        %v1562 = vand.u32 %v331, 4294901760
        %v1563 = vsub.f32 %v331, %v1562
        %1564 = vmatprep.mubr.f32.mxu0 %v1563
        %v1565 = vand.u32 %v330, 4294901760
        %v1566 = vsub.f32 %v330, %v1565
        %1567 = vmatmul.mubr.f32.gmra.mrb[0].mxu0 %v1566
        %v1568 = vpop.f32.mrb[0].mxu0
        %v1569 = vadd.f32 %v1284, %v1568
        %v1570 = vpop.f32.mrb[0].mxu0
        %v1571 = vadd.f32 %v1286, %v1570
        %v1572 = vand.u32 %v337, 4294901760
        %v1573 = vsub.f32 %v337, %v1572
        %1574 = vmatprep.mubr.f32.mxu0 %v1573
        %v1575 = vand.u32 %v336, 4294901760
        %v1576 = vsub.f32 %v336, %v1575
        %1577 = vmatmul.mubr.f32.gmra.mrb[0].mxu0 %v1576
        %v1578 = vpop.f32.mrb[0].mxu0
        %v1579 = vadd.f32 %v1292, %v1578
        %v1580 = vpop.f32.mrb[0].mxu0
        %v1581 = vadd.f32 %v1294, %v1580
        %v1582 = vand.u32 %v343, 4294901760
        %v1583 = vsub.f32 %v343, %v1582
        %1584 = vmatprep.mubr.f32.mxu0 %v1583
        %v1585 = vand.u32 %v342, 4294901760
        %v1586 = vsub.f32 %v342, %v1585
        %1587 = vmatmul.mubr.f32.gmra.mrb[0].mxu0 %v1586
        %v1588 = vpop.f32.mrb[0].mxu0
        %v1589 = vadd.f32 %v1300, %v1588
        %v1590 = vpop.f32.mrb[0].mxu0
        %v1591 = vadd.f32 %v1302, %v1590
        %v1592 = vand.u32 %v349, 4294901760
        %v1593 = vsub.f32 %v349, %v1592
        %1594 = vmatprep.mubr.f32.mxu0 %v1593
        %v1595 = vand.u32 %v348, 4294901760
        %v1596 = vsub.f32 %v348, %v1595
        %1597 = vmatmul.mubr.f32.gmra.mrb[0].mxu0 %v1596
        %v1598 = vpop.f32.mrb[0].mxu0
        %v1599 = vadd.f32 %v1308, %v1598
        %v1600 = vpop.f32.mrb[0].mxu0
        %v1601 = vadd.f32 %v1310, %v1600
        %v1602 = vand.u32 %v355, 4294901760
        %v1603 = vsub.f32 %v355, %v1602
        %1604 = vmatprep.mubr.f32.mxu0 %v1603
        %v1605 = vand.u32 %v354, 4294901760
        %v1606 = vsub.f32 %v354, %v1605
        %1607 = vmatmul.mubr.f32.gmra.mrb[0].mxu0 %v1606
        %v1608 = vpop.f32.mrb[0].mxu0
        %v1609 = vadd.f32 %v1316, %v1608
        %v1610 = vpop.f32.mrb[0].mxu0
        %v1611 = vadd.f32 %v1318, %v1610
        %v1612 = vand.u32 %v361, 4294901760
        %v1613 = vsub.f32 %v361, %v1612
        %1614 = vmatprep.mubr.f32.mxu0 %v1613
        %v1615 = vand.u32 %v360, 4294901760
        %v1616 = vsub.f32 %v360, %v1615
        %1617 = vmatmul.mubr.f32.gmra.mrb[0].mxu0 %v1616
        %v1618 = vpop.f32.mrb[0].mxu0
        %v1619 = vadd.f32 %v1324, %v1618
        %v1620 = vpop.f32.mrb[0].mxu0
        %v1621 = vadd.f32 %v1326, %v1620
        %v1622 = vand.u32 %v367, 4294901760
        %v1623 = vsub.f32 %v367, %v1622
        %1624 = vmatprep.mubr.f32.mxu0 %v1623
        %v1625 = vand.u32 %v366, 4294901760
        %v1626 = vsub.f32 %v366, %v1625
        %1627 = vmatmul.mubr.f32.gmra.mrb[0].mxu0 %v1626
        %v1628 = vpop.f32.mrb[0].mxu0
        %v1629 = vadd.f32 %v1332, %v1628
        %v1630 = vpop.f32.mrb[0].mxu0
        %v1631 = vadd.f32 %v1334, %v1630
        %v1632 = vand.u32 %v373, 4294901760
        %v1633 = vsub.f32 %v373, %v1632
        %1634 = vmatprep.mubr.f32.mxu0 %v1633
        %v1635 = vand.u32 %v372, 4294901760
        %v1636 = vsub.f32 %v372, %v1635
        %1637 = vmatmul.mubr.f32.gmra.mrb[0].mxu0 %v1636
        %v1638 = vpop.f32.mrb[0].mxu0
        %v1639 = vadd.f32 %v1340, %v1638
        %v1640 = vpop.f32.mrb[0].mxu0
        %v1641 = vadd.f32 %v1342, %v1640
        %v1642 = vand.u32 %v379, 4294901760
        %v1643 = vsub.f32 %v379, %v1642
        %1644 = vmatprep.mubr.f32.mxu0 %v1643
        %v1645 = vand.u32 %v378, 4294901760
        %v1646 = vsub.f32 %v378, %v1645
        %1647 = vmatmul.mubr.f32.gmra.mrb[0].mxu0 %v1646
        %v1648 = vpop.f32.mrb[0].mxu0
        %v1649 = vadd.f32 %v1348, %v1648
        %v1650 = vpop.f32.mrb[0].mxu0
        %v1651 = vadd.f32 %v1350, %v1650
        %v1652 = vand.u32 %v385, 4294901760
        %v1653 = vsub.f32 %v385, %v1652
        %1654 = vmatprep.mubr.f32.mxu0 %v1653
        %v1655 = vand.u32 %v384, 4294901760
        %v1656 = vsub.f32 %v384, %v1655
        %1657 = vmatmul.mubr.f32.gmra.mrb[0].mxu0 %v1656
        %v1658 = vpop.f32.mrb[0].mxu0
        %v1659 = vadd.f32 %v1356, %v1658
        %v1660 = vpop.f32.mrb[0].mxu0
        %v1661 = vadd.f32 %v1358, %v1660
        %1662 = vdwg.mxu0
        %v1663 = vand.u32 %v391, 4294901760
        %1664 = vmatprep.subr.mxu0 %v1663
        %v1665 = vand.u32 %v390, 4294901760
        %1666 = vmatpush1.msra.mxu0 %v1665
        %v1667 = vand.u32 %v393, 4294901760
        %1668 = vmatprep.subr.mxu0 %v1667
        %v1669 = vand.u32 %v392, 4294901760
        %1670 = vmatpush1.msra.mxu0 %v1669
        %v1671 = vand.u32 %v395, 4294901760
        %1672 = vmatprep.subr.mxu0 %v1671
        %v1673 = vand.u32 %v394, 4294901760
        %1674 = vmatpush1.msra.mxu0 %v1673
        %v1675 = vand.u32 %v397, 4294901760
        %1676 = vmatprep.subr.mxu0 %v1675
        %v1677 = vand.u32 %v396, 4294901760
        %1678 = vmatpush1.msra.mxu0 %v1677
        %v1679 = vand.u32 %v399, 4294901760
        %1680 = vmatprep.subr.mxu0 %v1679
        %v1681 = vand.u32 %v398, 4294901760
        %1682 = vmatpush1.msra.mxu0 %v1681
        %v1683 = vand.u32 %v401, 4294901760
        %1684 = vmatprep.subr.mxu0 %v1683
        %v1685 = vand.u32 %v400, 4294901760
        %1686 = vmatpush1.msra.mxu0 %v1685
        %v1687 = vand.u32 %v403, 4294901760
        %1688 = vmatprep.subr.mxu0 %v1687
        %v1689 = vand.u32 %v402, 4294901760
        %1690 = vmatpush1.msra.mxu0 %v1689
        %v1691 = vand.u32 %v405, 4294901760
        %1692 = vmatprep.subr.mxu0 %v1691
        %v1693 = vand.u32 %v404, 4294901760
        %1694 = vmatpush1.msra.mxu0 %v1693
        %v1695 = vand.u32 %v407, 4294901760
        %1696 = vmatprep.subr.mxu0 %v1695
        %v1697 = vand.u32 %v406, 4294901760
        %1698 = vmatpush1.msra.mxu0 %v1697
        %v1699 = vand.u32 %v409, 4294901760
        %1700 = vmatprep.subr.mxu0 %v1699
        %v1701 = vand.u32 %v408, 4294901760
        %1702 = vmatpush1.msra.mxu0 %v1701
        %v1703 = vand.u32 %v411, 4294901760
        %1704 = vmatprep.subr.mxu0 %v1703
        %v1705 = vand.u32 %v410, 4294901760
        %1706 = vmatpush1.msra.mxu0 %v1705
        %v1707 = vand.u32 %v413, 4294901760
        %1708 = vmatprep.subr.mxu0 %v1707
        %v1709 = vand.u32 %v412, 4294901760
        %1710 = vmatpush1.msra.mxu0 %v1709
        %v1711 = vand.u32 %v415, 4294901760
        %1712 = vmatprep.subr.mxu0 %v1711
        %v1713 = vand.u32 %v414, 4294901760
        %1714 = vmatpush1.msra.mxu0 %v1713
        %v1715 = vand.u32 %v417, 4294901760
        %1716 = vmatprep.subr.mxu0 %v1715
        %v1717 = vand.u32 %v416, 4294901760
        %1718 = vmatpush1.msra.mxu0 %v1717
        %v1719 = vand.u32 %v419, 4294901760
        %1720 = vmatprep.subr.mxu0 %v1719
        %v1721 = vand.u32 %v418, 4294901760
        %1722 = vmatpush1.msra.mxu0 %v1721
        %v1723 = vand.u32 %v421, 4294901760
        %1724 = vmatprep.subr.mxu0 %v1723
        %v1725 = vand.u32 %v420, 4294901760
        %1726 = vmatpush1.msra.mxu0 %v1725
        %v1727 = vand.u32 %v423, 4294901760
        %1728 = vmatprep.subr.mxu0 %v1727
        %v1729 = vand.u32 %v422, 4294901760
        %1730 = vmatpush1.msra.mxu0 %v1729
        %v1731 = vand.u32 %v425, 4294901760
        %1732 = vmatprep.subr.mxu0 %v1731
        %v1733 = vand.u32 %v424, 4294901760
        %1734 = vmatpush1.msra.mxu0 %v1733
        %v1735 = vand.u32 %v427, 4294901760
        %1736 = vmatprep.subr.mxu0 %v1735
        %v1737 = vand.u32 %v426, 4294901760
        %1738 = vmatpush1.msra.mxu0 %v1737
        %v1739 = vand.u32 %v429, 4294901760
        %1740 = vmatprep.subr.mxu0 %v1739
        %v1741 = vand.u32 %v428, 4294901760
        %1742 = vmatpush1.msra.mxu0 %v1741
        %v1743 = vand.u32 %v431, 4294901760
        %1744 = vmatprep.subr.mxu0 %v1743
        %v1745 = vand.u32 %v430, 4294901760
        %1746 = vmatpush1.msra.mxu0 %v1745
        %v1747 = vand.u32 %v433, 4294901760
        %1748 = vmatprep.subr.mxu0 %v1747
        %v1749 = vand.u32 %v432, 4294901760
        %1750 = vmatpush1.msra.mxu0 %v1749
        %v1751 = vand.u32 %v435, 4294901760
        %1752 = vmatprep.subr.mxu0 %v1751
        %v1753 = vand.u32 %v434, 4294901760
        %1754 = vmatpush1.msra.mxu0 %v1753
        %v1755 = vand.u32 %v437, 4294901760
        %1756 = vmatprep.subr.mxu0 %v1755
        %v1757 = vand.u32 %v436, 4294901760
        %1758 = vmatpush1.msra.mxu0 %v1757
        %v1759 = vand.u32 %v439, 4294901760
        %1760 = vmatprep.subr.mxu0 %v1759
        %v1761 = vand.u32 %v438, 4294901760
        %1762 = vmatpush1.msra.mxu0 %v1761
        %v1763 = vand.u32 %v441, 4294901760
        %1764 = vmatprep.subr.mxu0 %v1763
        %v1765 = vand.u32 %v440, 4294901760
        %1766 = vmatpush1.msra.mxu0 %v1765
        %v1767 = vand.u32 %v443, 4294901760
        %1768 = vmatprep.subr.mxu0 %v1767
        %v1769 = vand.u32 %v442, 4294901760
        %1770 = vmatpush1.msra.mxu0 %v1769
        %v1771 = vand.u32 %v445, 4294901760
        %1772 = vmatprep.subr.mxu0 %v1771
        %v1773 = vand.u32 %v444, 4294901760
        %1774 = vmatpush1.msra.mxu0 %v1773
        %v1775 = vand.u32 %v447, 4294901760
        %1776 = vmatprep.subr.mxu0 %v1775
        %v1777 = vand.u32 %v446, 4294901760
        %1778 = vmatpush1.msra.mxu0 %v1777
        %v1779 = vand.u32 %v449, 4294901760
        %1780 = vmatprep.subr.mxu0 %v1779
        %v1781 = vand.u32 %v448, 4294901760
        %1782 = vmatpush1.msra.mxu0 %v1781
        %v1783 = vand.u32 %v451, 4294901760
        %1784 = vmatprep.subr.mxu0 %v1783
        %v1785 = vand.u32 %v450, 4294901760
        %1786 = vmatpush1.msra.mxu0 %v1785
        %v1787 = vand.u32 %v453, 4294901760
        %1788 = vmatprep.subr.mxu0 %v1787
        %v1789 = vand.u32 %v452, 4294901760
        %1790 = vmatpush1.msra.mxu0 %v1789
        %v1791 = vand.u32 %v325, 4294901760
        %v1792 = vsub.f32 %v325, %v1791
        %v1793 = vand.u32 %v1792, 4294901760
        %1794 = vmatprep.mubr.f32.mxu0 %v1793
        %v1795 = vand.u32 %v324, 4294901760
        %v1796 = vsub.f32 %v324, %v1795
        %v1797 = vand.u32 %v1796, 4294901760
        %1798 = vmatmul.mubr.f32.gmra.mrb[0].mxu0 %v1797
        %v1799 = vpop.f32.mrb[0].mxu0
        %v1800 = vadd.f32 %v1559, %v1799
        %v1801 = vpop.f32.mrb[0].mxu0
        %v1802 = vadd.f32 %v1561, %v1801
        %v1803 = vand.u32 %v331, 4294901760
        %v1804 = vsub.f32 %v331, %v1803
        %v1805 = vand.u32 %v1804, 4294901760
        %1806 = vmatprep.mubr.f32.mxu0 %v1805
        %v1807 = vand.u32 %v330, 4294901760
        %v1808 = vsub.f32 %v330, %v1807
        %v1809 = vand.u32 %v1808, 4294901760
        %1810 = vmatmul.mubr.f32.gmra.mrb[0].mxu0 %v1809
        %v1811 = vpop.f32.mrb[0].mxu0
        %v1812 = vadd.f32 %v1569, %v1811
        %v1813 = vpop.f32.mrb[0].mxu0
        %v1814 = vadd.f32 %v1571, %v1813
        %v1815 = vand.u32 %v337, 4294901760
        %v1816 = vsub.f32 %v337, %v1815
        %v1817 = vand.u32 %v1816, 4294901760
        %1818 = vmatprep.mubr.f32.mxu0 %v1817
        %v1819 = vand.u32 %v336, 4294901760
        %v1820 = vsub.f32 %v336, %v1819
        %v1821 = vand.u32 %v1820, 4294901760
        %1822 = vmatmul.mubr.f32.gmra.mrb[0].mxu0 %v1821
        %v1823 = vpop.f32.mrb[0].mxu0
        %v1824 = vadd.f32 %v1579, %v1823
        %v1825 = vpop.f32.mrb[0].mxu0
        %v1826 = vadd.f32 %v1581, %v1825
        %v1827 = vand.u32 %v343, 4294901760
        %v1828 = vsub.f32 %v343, %v1827
        %v1829 = vand.u32 %v1828, 4294901760
        %1830 = vmatprep.mubr.f32.mxu0 %v1829
        %v1831 = vand.u32 %v342, 4294901760
        %v1832 = vsub.f32 %v342, %v1831
        %v1833 = vand.u32 %v1832, 4294901760
        %1834 = vmatmul.mubr.f32.gmra.mrb[0].mxu0 %v1833
        %v1835 = vpop.f32.mrb[0].mxu0
        %v1836 = vadd.f32 %v1589, %v1835
        %v1837 = vpop.f32.mrb[0].mxu0
        %v1838 = vadd.f32 %v1591, %v1837
        %v1839 = vand.u32 %v349, 4294901760
        %v1840 = vsub.f32 %v349, %v1839
        %v1841 = vand.u32 %v1840, 4294901760
        %1842 = vmatprep.mubr.f32.mxu0 %v1841
        %v1843 = vand.u32 %v348, 4294901760
        %v1844 = vsub.f32 %v348, %v1843
        %v1845 = vand.u32 %v1844, 4294901760
        %1846 = vmatmul.mubr.f32.gmra.mrb[0].mxu0 %v1845
        %v1847 = vpop.f32.mrb[0].mxu0
        %v1848 = vadd.f32 %v1599, %v1847
        %v1849 = vpop.f32.mrb[0].mxu0
        %v1850 = vadd.f32 %v1601, %v1849
        %v1851 = vand.u32 %v355, 4294901760
        %v1852 = vsub.f32 %v355, %v1851
        %v1853 = vand.u32 %v1852, 4294901760
        %1854 = vmatprep.mubr.f32.mxu0 %v1853
        %v1855 = vand.u32 %v354, 4294901760
        %v1856 = vsub.f32 %v354, %v1855
        %v1857 = vand.u32 %v1856, 4294901760
        %1858 = vmatmul.mubr.f32.gmra.mrb[0].mxu0 %v1857
        %v1859 = vpop.f32.mrb[0].mxu0
        %v1860 = vadd.f32 %v1609, %v1859
        %v1861 = vpop.f32.mrb[0].mxu0
        %v1862 = vadd.f32 %v1611, %v1861
        %v1863 = vand.u32 %v361, 4294901760
        %v1864 = vsub.f32 %v361, %v1863
        %v1865 = vand.u32 %v1864, 4294901760
        %1866 = vmatprep.mubr.f32.mxu0 %v1865
        %v1867 = vand.u32 %v360, 4294901760
        %v1868 = vsub.f32 %v360, %v1867
        %v1869 = vand.u32 %v1868, 4294901760
        %1870 = vmatmul.mubr.f32.gmra.mrb[0].mxu0 %v1869
        %v1871 = vpop.f32.mrb[0].mxu0
        %v1872 = vadd.f32 %v1619, %v1871
        %v1873 = vpop.f32.mrb[0].mxu0
        %v1874 = vadd.f32 %v1621, %v1873
        %v1875 = vand.u32 %v367, 4294901760
        %v1876 = vsub.f32 %v367, %v1875
        %v1877 = vand.u32 %v1876, 4294901760
        %1878 = vmatprep.mubr.f32.mxu0 %v1877
        %v1879 = vand.u32 %v366, 4294901760
        %v1880 = vsub.f32 %v366, %v1879
        %v1881 = vand.u32 %v1880, 4294901760
        %1882 = vmatmul.mubr.f32.gmra.mrb[0].mxu0 %v1881
        %v1883 = vpop.f32.mrb[0].mxu0
        %v1884 = vadd.f32 %v1629, %v1883
        %v1885 = vpop.f32.mrb[0].mxu0
        %v1886 = vadd.f32 %v1631, %v1885
        %v1887 = vand.u32 %v373, 4294901760
        %v1888 = vsub.f32 %v373, %v1887
        %v1889 = vand.u32 %v1888, 4294901760
        %1890 = vmatprep.mubr.f32.mxu0 %v1889
        %v1891 = vand.u32 %v372, 4294901760
        %v1892 = vsub.f32 %v372, %v1891
        %v1893 = vand.u32 %v1892, 4294901760
        %1894 = vmatmul.mubr.f32.gmra.mrb[0].mxu0 %v1893
        %v1895 = vpop.f32.mrb[0].mxu0
        %v1896 = vadd.f32 %v1639, %v1895
        %v1897 = vpop.f32.mrb[0].mxu0
        %v1898 = vadd.f32 %v1641, %v1897
        %v1899 = vand.u32 %v379, 4294901760
        %v1900 = vsub.f32 %v379, %v1899
        %v1901 = vand.u32 %v1900, 4294901760
        %1902 = vmatprep.mubr.f32.mxu0 %v1901
        %v1903 = vand.u32 %v378, 4294901760
        %v1904 = vsub.f32 %v378, %v1903
        %v1905 = vand.u32 %v1904, 4294901760
        %1906 = vmatmul.mubr.f32.gmra.mrb[0].mxu0 %v1905
        %v1907 = vpop.f32.mrb[0].mxu0
        %v1908 = vadd.f32 %v1649, %v1907
        %v1909 = vpop.f32.mrb[0].mxu0
        %v1910 = vadd.f32 %v1651, %v1909
        %v1911 = vand.u32 %v385, 4294901760
        %v1912 = vsub.f32 %v385, %v1911
        %v1913 = vand.u32 %v1912, 4294901760
        %1914 = vmatprep.mubr.f32.mxu0 %v1913
        %v1915 = vand.u32 %v384, 4294901760
        %v1916 = vsub.f32 %v384, %v1915
        %v1917 = vand.u32 %v1916, 4294901760
        %1918 = vmatmul.mubr.f32.gmra.mrb[0].mxu0 %v1917
        %v1919 = vpop.f32.mrb[0].mxu0
        %v1920 = vadd.f32 %v1659, %v1919
        %v1921 = vpop.f32.mrb[0].mxu0
        %v1922 = vadd.f32 %v1661, %v1921
        %1923 = vdwg.mxu0
        %v1924 = vand.u32 %v391, 4294901760
        %v1925 = vsub.f32 %v391, %v1924
        %v1926 = vand.u32 %v1925, 4294901760
        %1927 = vmatprep.subr.mxu0 %v1926
        %v1928 = vand.u32 %v390, 4294901760
        %v1929 = vsub.f32 %v390, %v1928
        %v1930 = vand.u32 %v1929, 4294901760
        %1931 = vmatpush1.msra.mxu0 %v1930
        %v1932 = vand.u32 %v393, 4294901760
        %v1933 = vsub.f32 %v393, %v1932
        %v1934 = vand.u32 %v1933, 4294901760
        %1935 = vmatprep.subr.mxu0 %v1934
        %v1936 = vand.u32 %v392, 4294901760
        %v1937 = vsub.f32 %v392, %v1936
        %v1938 = vand.u32 %v1937, 4294901760
        %1939 = vmatpush1.msra.mxu0 %v1938
        %v1940 = vand.u32 %v395, 4294901760
        %v1941 = vsub.f32 %v395, %v1940
        %v1942 = vand.u32 %v1941, 4294901760
        %1943 = vmatprep.subr.mxu0 %v1942
        %v1944 = vand.u32 %v394, 4294901760
        %v1945 = vsub.f32 %v394, %v1944
        %v1946 = vand.u32 %v1945, 4294901760
        %1947 = vmatpush1.msra.mxu0 %v1946
        %v1948 = vand.u32 %v397, 4294901760
        %v1949 = vsub.f32 %v397, %v1948
        %v1950 = vand.u32 %v1949, 4294901760
        %1951 = vmatprep.subr.mxu0 %v1950
        %v1952 = vand.u32 %v396, 4294901760
        %v1953 = vsub.f32 %v396, %v1952
        %v1954 = vand.u32 %v1953, 4294901760
        %1955 = vmatpush1.msra.mxu0 %v1954
        %v1956 = vand.u32 %v399, 4294901760
        %v1957 = vsub.f32 %v399, %v1956
        %v1958 = vand.u32 %v1957, 4294901760
        %1959 = vmatprep.subr.mxu0 %v1958
        %v1960 = vand.u32 %v398, 4294901760
        %v1961 = vsub.f32 %v398, %v1960
        %v1962 = vand.u32 %v1961, 4294901760
        %1963 = vmatpush1.msra.mxu0 %v1962
        %v1964 = vand.u32 %v401, 4294901760
        %v1965 = vsub.f32 %v401, %v1964
        %v1966 = vand.u32 %v1965, 4294901760
        %1967 = vmatprep.subr.mxu0 %v1966
        %v1968 = vand.u32 %v400, 4294901760
        %v1969 = vsub.f32 %v400, %v1968
        %v1970 = vand.u32 %v1969, 4294901760
        %1971 = vmatpush1.msra.mxu0 %v1970
        %v1972 = vand.u32 %v403, 4294901760
        %v1973 = vsub.f32 %v403, %v1972
        %v1974 = vand.u32 %v1973, 4294901760
        %1975 = vmatprep.subr.mxu0 %v1974
        %v1976 = vand.u32 %v402, 4294901760
        %v1977 = vsub.f32 %v402, %v1976
        %v1978 = vand.u32 %v1977, 4294901760
        %1979 = vmatpush1.msra.mxu0 %v1978
        %v1980 = vand.u32 %v405, 4294901760
        %v1981 = vsub.f32 %v405, %v1980
        %v1982 = vand.u32 %v1981, 4294901760
        %1983 = vmatprep.subr.mxu0 %v1982
        %v1984 = vand.u32 %v404, 4294901760
        %v1985 = vsub.f32 %v404, %v1984
        %v1986 = vand.u32 %v1985, 4294901760
        %1987 = vmatpush1.msra.mxu0 %v1986
        %v1988 = vand.u32 %v407, 4294901760
        %v1989 = vsub.f32 %v407, %v1988
        %v1990 = vand.u32 %v1989, 4294901760
        %1991 = vmatprep.subr.mxu0 %v1990
        %v1992 = vand.u32 %v406, 4294901760
        %v1993 = vsub.f32 %v406, %v1992
        %v1994 = vand.u32 %v1993, 4294901760
        %1995 = vmatpush1.msra.mxu0 %v1994
        %v1996 = vand.u32 %v409, 4294901760
        %v1997 = vsub.f32 %v409, %v1996
        %v1998 = vand.u32 %v1997, 4294901760
        %1999 = vmatprep.subr.mxu0 %v1998
        %v2000 = vand.u32 %v408, 4294901760
        %v2001 = vsub.f32 %v408, %v2000
        %v2002 = vand.u32 %v2001, 4294901760
        %2003 = vmatpush1.msra.mxu0 %v2002
        %v2004 = vand.u32 %v411, 4294901760
        %v2005 = vsub.f32 %v411, %v2004
        %v2006 = vand.u32 %v2005, 4294901760
        %2007 = vmatprep.subr.mxu0 %v2006
        %v2008 = vand.u32 %v410, 4294901760
        %v2009 = vsub.f32 %v410, %v2008
        %v2010 = vand.u32 %v2009, 4294901760
        %2011 = vmatpush1.msra.mxu0 %v2010
        %v2012 = vand.u32 %v413, 4294901760
        %v2013 = vsub.f32 %v413, %v2012
        %v2014 = vand.u32 %v2013, 4294901760
        %2015 = vmatprep.subr.mxu0 %v2014
        %v2016 = vand.u32 %v412, 4294901760
        %v2017 = vsub.f32 %v412, %v2016
        %v2018 = vand.u32 %v2017, 4294901760
        %2019 = vmatpush1.msra.mxu0 %v2018
        %v2020 = vand.u32 %v415, 4294901760
        %v2021 = vsub.f32 %v415, %v2020
        %v2022 = vand.u32 %v2021, 4294901760
        %2023 = vmatprep.subr.mxu0 %v2022
        %v2024 = vand.u32 %v414, 4294901760
        %v2025 = vsub.f32 %v414, %v2024
        %v2026 = vand.u32 %v2025, 4294901760
        %2027 = vmatpush1.msra.mxu0 %v2026
        %v2028 = vand.u32 %v417, 4294901760
        %v2029 = vsub.f32 %v417, %v2028
        %v2030 = vand.u32 %v2029, 4294901760
        %2031 = vmatprep.subr.mxu0 %v2030
        %v2032 = vand.u32 %v416, 4294901760
        %v2033 = vsub.f32 %v416, %v2032
        %v2034 = vand.u32 %v2033, 4294901760
        %2035 = vmatpush1.msra.mxu0 %v2034
        %v2036 = vand.u32 %v419, 4294901760
        %v2037 = vsub.f32 %v419, %v2036
        %v2038 = vand.u32 %v2037, 4294901760
        %2039 = vmatprep.subr.mxu0 %v2038
        %v2040 = vand.u32 %v418, 4294901760
        %v2041 = vsub.f32 %v418, %v2040
        %v2042 = vand.u32 %v2041, 4294901760
        %2043 = vmatpush1.msra.mxu0 %v2042
        %v2044 = vand.u32 %v421, 4294901760
        %v2045 = vsub.f32 %v421, %v2044
        %v2046 = vand.u32 %v2045, 4294901760
        %2047 = vmatprep.subr.mxu0 %v2046
        %v2048 = vand.u32 %v420, 4294901760
        %v2049 = vsub.f32 %v420, %v2048
        %v2050 = vand.u32 %v2049, 4294901760
        %2051 = vmatpush1.msra.mxu0 %v2050
        %v2052 = vand.u32 %v423, 4294901760
        %v2053 = vsub.f32 %v423, %v2052
        %v2054 = vand.u32 %v2053, 4294901760
        %2055 = vmatprep.subr.mxu0 %v2054
        %v2056 = vand.u32 %v422, 4294901760
        %v2057 = vsub.f32 %v422, %v2056
        %v2058 = vand.u32 %v2057, 4294901760
        %2059 = vmatpush1.msra.mxu0 %v2058
        %v2060 = vand.u32 %v425, 4294901760
        %v2061 = vsub.f32 %v425, %v2060
        %v2062 = vand.u32 %v2061, 4294901760
        %2063 = vmatprep.subr.mxu0 %v2062
        %v2064 = vand.u32 %v424, 4294901760
        %v2065 = vsub.f32 %v424, %v2064
        %v2066 = vand.u32 %v2065, 4294901760
        %2067 = vmatpush1.msra.mxu0 %v2066
        %v2068 = vand.u32 %v427, 4294901760
        %v2069 = vsub.f32 %v427, %v2068
        %v2070 = vand.u32 %v2069, 4294901760
        %2071 = vmatprep.subr.mxu0 %v2070
        %v2072 = vand.u32 %v426, 4294901760
        %v2073 = vsub.f32 %v426, %v2072
        %v2074 = vand.u32 %v2073, 4294901760
        %2075 = vmatpush1.msra.mxu0 %v2074
        %v2076 = vand.u32 %v429, 4294901760
        %v2077 = vsub.f32 %v429, %v2076
        %v2078 = vand.u32 %v2077, 4294901760
        %2079 = vmatprep.subr.mxu0 %v2078
        %v2080 = vand.u32 %v428, 4294901760
        %v2081 = vsub.f32 %v428, %v2080
        %v2082 = vand.u32 %v2081, 4294901760
        %2083 = vmatpush1.msra.mxu0 %v2082
        %v2084 = vand.u32 %v431, 4294901760
        %v2085 = vsub.f32 %v431, %v2084
        %v2086 = vand.u32 %v2085, 4294901760
        %2087 = vmatprep.subr.mxu0 %v2086
        %v2088 = vand.u32 %v430, 4294901760
        %v2089 = vsub.f32 %v430, %v2088
        %v2090 = vand.u32 %v2089, 4294901760
        %2091 = vmatpush1.msra.mxu0 %v2090
        %v2092 = vand.u32 %v433, 4294901760
        %v2093 = vsub.f32 %v433, %v2092
        %v2094 = vand.u32 %v2093, 4294901760
        %2095 = vmatprep.subr.mxu0 %v2094
        %v2096 = vand.u32 %v432, 4294901760
        %v2097 = vsub.f32 %v432, %v2096
        %v2098 = vand.u32 %v2097, 4294901760
        %2099 = vmatpush1.msra.mxu0 %v2098
        %v2100 = vand.u32 %v435, 4294901760
        %v2101 = vsub.f32 %v435, %v2100
        %v2102 = vand.u32 %v2101, 4294901760
        %2103 = vmatprep.subr.mxu0 %v2102
        %v2104 = vand.u32 %v434, 4294901760
        %v2105 = vsub.f32 %v434, %v2104
        %v2106 = vand.u32 %v2105, 4294901760
        %2107 = vmatpush1.msra.mxu0 %v2106
        %v2108 = vand.u32 %v437, 4294901760
        %v2109 = vsub.f32 %v437, %v2108
        %v2110 = vand.u32 %v2109, 4294901760
        %2111 = vmatprep.subr.mxu0 %v2110
        %v2112 = vand.u32 %v436, 4294901760
        %v2113 = vsub.f32 %v436, %v2112
        %v2114 = vand.u32 %v2113, 4294901760
        %2115 = vmatpush1.msra.mxu0 %v2114
        %v2116 = vand.u32 %v439, 4294901760
        %v2117 = vsub.f32 %v439, %v2116
        %v2118 = vand.u32 %v2117, 4294901760
        %2119 = vmatprep.subr.mxu0 %v2118
        %v2120 = vand.u32 %v438, 4294901760
        %v2121 = vsub.f32 %v438, %v2120
        %v2122 = vand.u32 %v2121, 4294901760
        %2123 = vmatpush1.msra.mxu0 %v2122
        %v2124 = vand.u32 %v441, 4294901760
        %v2125 = vsub.f32 %v441, %v2124
        %v2126 = vand.u32 %v2125, 4294901760
        %2127 = vmatprep.subr.mxu0 %v2126
        %v2128 = vand.u32 %v440, 4294901760
        %v2129 = vsub.f32 %v440, %v2128
        %v2130 = vand.u32 %v2129, 4294901760
        %2131 = vmatpush1.msra.mxu0 %v2130
        %v2132 = vand.u32 %v443, 4294901760
        %v2133 = vsub.f32 %v443, %v2132
        %v2134 = vand.u32 %v2133, 4294901760
        %2135 = vmatprep.subr.mxu0 %v2134
        %v2136 = vand.u32 %v442, 4294901760
        %v2137 = vsub.f32 %v442, %v2136
        %v2138 = vand.u32 %v2137, 4294901760
        %2139 = vmatpush1.msra.mxu0 %v2138
        %v2140 = vand.u32 %v445, 4294901760
        %v2141 = vsub.f32 %v445, %v2140
        %v2142 = vand.u32 %v2141, 4294901760
        %2143 = vmatprep.subr.mxu0 %v2142
        %v2144 = vand.u32 %v444, 4294901760
        %v2145 = vsub.f32 %v444, %v2144
        %v2146 = vand.u32 %v2145, 4294901760
        %2147 = vmatpush1.msra.mxu0 %v2146
        %v2148 = vand.u32 %v447, 4294901760
        %v2149 = vsub.f32 %v447, %v2148
        %v2150 = vand.u32 %v2149, 4294901760
        %2151 = vmatprep.subr.mxu0 %v2150
        %v2152 = vand.u32 %v446, 4294901760
        %v2153 = vsub.f32 %v446, %v2152
        %v2154 = vand.u32 %v2153, 4294901760
        %2155 = vmatpush1.msra.mxu0 %v2154
        %v2156 = vand.u32 %v449, 4294901760
        %v2157 = vsub.f32 %v449, %v2156
        %v2158 = vand.u32 %v2157, 4294901760
        %2159 = vmatprep.subr.mxu0 %v2158
        %v2160 = vand.u32 %v448, 4294901760
        %v2161 = vsub.f32 %v448, %v2160
        %v2162 = vand.u32 %v2161, 4294901760
        %2163 = vmatpush1.msra.mxu0 %v2162
        %v2164 = vand.u32 %v451, 4294901760
        %v2165 = vsub.f32 %v451, %v2164
        %v2166 = vand.u32 %v2165, 4294901760
        %2167 = vmatprep.subr.mxu0 %v2166
        %v2168 = vand.u32 %v450, 4294901760
        %v2169 = vsub.f32 %v450, %v2168
        %v2170 = vand.u32 %v2169, 4294901760
        %2171 = vmatpush1.msra.mxu0 %v2170
        %v2172 = vand.u32 %v453, 4294901760
        %v2173 = vsub.f32 %v453, %v2172
        %v2174 = vand.u32 %v2173, 4294901760
        %2175 = vmatprep.subr.mxu0 %v2174
        %v2176 = vand.u32 %v452, 4294901760
        %v2177 = vsub.f32 %v452, %v2176
        %v2178 = vand.u32 %v2177, 4294901760
        %2179 = vmatpush1.msra.mxu0 %v2178
        %v2180 = vand.u32 %v325, 4294901760
        %2181 = vmatprep.mubr.f32.mxu0 %v2180
        %v2182 = vand.u32 %v324, 4294901760
        %2183 = vmatmul.mubr.f32.gmra.mrb[0].mxu0 %v2182
        %v2184 = vpop.f32.mrb[0].mxu0
        %v2185 = vadd.f32 %v1800, %v2184
        %v2186 = vpop.f32.mrb[0].mxu0
        %v2187 = vadd.f32 %v1802, %v2186
        %v2188 = vand.u32 %v331, 4294901760
        %2189 = vmatprep.mubr.f32.mxu0 %v2188
        %v2190 = vand.u32 %v330, 4294901760
        %2191 = vmatmul.mubr.f32.gmra.mrb[0].mxu0 %v2190
        %v2192 = vpop.f32.mrb[0].mxu0
        %v2193 = vadd.f32 %v1812, %v2192
        %v2194 = vpop.f32.mrb[0].mxu0
        %v2195 = vadd.f32 %v1814, %v2194
        %v2196 = vand.u32 %v337, 4294901760
        %2197 = vmatprep.mubr.f32.mxu0 %v2196
        %v2198 = vand.u32 %v336, 4294901760
        %2199 = vmatmul.mubr.f32.gmra.mrb[0].mxu0 %v2198
        %v2200 = vpop.f32.mrb[0].mxu0
        %v2201 = vadd.f32 %v1824, %v2200
        %v2202 = vpop.f32.mrb[0].mxu0
        %v2203 = vadd.f32 %v1826, %v2202
        %v2204 = vand.u32 %v343, 4294901760
        %2205 = vmatprep.mubr.f32.mxu0 %v2204
        %v2206 = vand.u32 %v342, 4294901760
        %2207 = vmatmul.mubr.f32.gmra.mrb[0].mxu0 %v2206
        %v2208 = vpop.f32.mrb[0].mxu0
        %v2209 = vadd.f32 %v1836, %v2208
        %v2210 = vpop.f32.mrb[0].mxu0
        %v2211 = vadd.f32 %v1838, %v2210
        %v2212 = vand.u32 %v349, 4294901760
        %2213 = vmatprep.mubr.f32.mxu0 %v2212
        %v2214 = vand.u32 %v348, 4294901760
        %2215 = vmatmul.mubr.f32.gmra.mrb[0].mxu0 %v2214
        %v2216 = vpop.f32.mrb[0].mxu0
        %v2217 = vadd.f32 %v1848, %v2216
        %v2218 = vpop.f32.mrb[0].mxu0
        %v2219 = vadd.f32 %v1850, %v2218
        %v2220 = vand.u32 %v355, 4294901760
        %2221 = vmatprep.mubr.f32.mxu0 %v2220
        %v2222 = vand.u32 %v354, 4294901760
        %2223 = vmatmul.mubr.f32.gmra.mrb[0].mxu0 %v2222
        %v2224 = vpop.f32.mrb[0].mxu0
        %v2225 = vadd.f32 %v1860, %v2224
        %v2226 = vpop.f32.mrb[0].mxu0
        %v2227 = vadd.f32 %v1862, %v2226
        %v2228 = vand.u32 %v361, 4294901760
        %2229 = vmatprep.mubr.f32.mxu0 %v2228
        %v2230 = vand.u32 %v360, 4294901760
        %2231 = vmatmul.mubr.f32.gmra.mrb[0].mxu0 %v2230
        %v2232 = vpop.f32.mrb[0].mxu0
        %v2233 = vadd.f32 %v1872, %v2232
        %v2234 = vpop.f32.mrb[0].mxu0
        %v2235 = vadd.f32 %v1874, %v2234
        %v2236 = vand.u32 %v367, 4294901760
        %2237 = vmatprep.mubr.f32.mxu0 %v2236
        %v2238 = vand.u32 %v366, 4294901760
        %2239 = vmatmul.mubr.f32.gmra.mrb[0].mxu0 %v2238
        %v2240 = vpop.f32.mrb[0].mxu0
        %v2241 = vadd.f32 %v1884, %v2240
        %v2242 = vpop.f32.mrb[0].mxu0
        %v2243 = vadd.f32 %v1886, %v2242
        %v2244 = vand.u32 %v373, 4294901760
        %2245 = vmatprep.mubr.f32.mxu0 %v2244
        %v2246 = vand.u32 %v372, 4294901760
        %2247 = vmatmul.mubr.f32.gmra.mrb[0].mxu0 %v2246
        %v2248 = vpop.f32.mrb[0].mxu0
        %v2249 = vadd.f32 %v1896, %v2248
        %v2250 = vpop.f32.mrb[0].mxu0
        %v2251 = vadd.f32 %v1898, %v2250
        %v2252 = vand.u32 %v379, 4294901760
        %2253 = vmatprep.mubr.f32.mxu0 %v2252
        %v2254 = vand.u32 %v378, 4294901760
        %2255 = vmatmul.mubr.f32.gmra.mrb[0].mxu0 %v2254
        %v2256 = vpop.f32.mrb[0].mxu0
        %v2257 = vadd.f32 %v1908, %v2256
        %v2258 = vpop.f32.mrb[0].mxu0
        %v2259 = vadd.f32 %v1910, %v2258
        %v2260 = vand.u32 %v385, 4294901760
        %2261 = vmatprep.mubr.f32.mxu0 %v2260
        %v2262 = vand.u32 %v384, 4294901760
        %2263 = vmatmul.mubr.f32.gmra.mrb[0].mxu0 %v2262
        %v2264 = vpop.f32.mrb[0].mxu0
        %v2265 = vadd.f32 %v1920, %v2264
        %v2266 = vpop.f32.mrb[0].mxu0
        %v2267 = vadd.f32 %v1922, %v2266
        %2268 = vdwg.mxu0
        %v2269 = vand.u32 %v391, 4294901760
        %2270 = vmatprep.subr.mxu0 %v2269
        %v2271 = vand.u32 %v390, 4294901760
        %2272 = vmatpush1.msra.mxu0 %v2271
        %v2273 = vand.u32 %v393, 4294901760
        %2274 = vmatprep.subr.mxu0 %v2273
        %v2275 = vand.u32 %v392, 4294901760
        %2276 = vmatpush1.msra.mxu0 %v2275
        %v2277 = vand.u32 %v395, 4294901760
        %2278 = vmatprep.subr.mxu0 %v2277
        %v2279 = vand.u32 %v394, 4294901760
        %2280 = vmatpush1.msra.mxu0 %v2279
        %v2281 = vand.u32 %v397, 4294901760
        %2282 = vmatprep.subr.mxu0 %v2281
        %v2283 = vand.u32 %v396, 4294901760
        %2284 = vmatpush1.msra.mxu0 %v2283
        %v2285 = vand.u32 %v399, 4294901760
        %2286 = vmatprep.subr.mxu0 %v2285
        %v2287 = vand.u32 %v398, 4294901760
        %2288 = vmatpush1.msra.mxu0 %v2287
        %v2289 = vand.u32 %v401, 4294901760
        %2290 = vmatprep.subr.mxu0 %v2289
        %v2291 = vand.u32 %v400, 4294901760
        %2292 = vmatpush1.msra.mxu0 %v2291
        %v2293 = vand.u32 %v403, 4294901760
        %2294 = vmatprep.subr.mxu0 %v2293
        %v2295 = vand.u32 %v402, 4294901760
        %2296 = vmatpush1.msra.mxu0 %v2295
        %v2297 = vand.u32 %v405, 4294901760
        %2298 = vmatprep.subr.mxu0 %v2297
        %v2299 = vand.u32 %v404, 4294901760
        %2300 = vmatpush1.msra.mxu0 %v2299
        %v2301 = vand.u32 %v407, 4294901760
        %2302 = vmatprep.subr.mxu0 %v2301
        %v2303 = vand.u32 %v406, 4294901760
        %2304 = vmatpush1.msra.mxu0 %v2303
        %v2305 = vand.u32 %v409, 4294901760
        %2306 = vmatprep.subr.mxu0 %v2305
        %v2307 = vand.u32 %v408, 4294901760
        %2308 = vmatpush1.msra.mxu0 %v2307
        %v2309 = vand.u32 %v411, 4294901760
        %2310 = vmatprep.subr.mxu0 %v2309
        %v2311 = vand.u32 %v410, 4294901760
        %2312 = vmatpush1.msra.mxu0 %v2311
        %v2313 = vand.u32 %v413, 4294901760
        %2314 = vmatprep.subr.mxu0 %v2313
        %v2315 = vand.u32 %v412, 4294901760
        %2316 = vmatpush1.msra.mxu0 %v2315
        %v2317 = vand.u32 %v415, 4294901760
        %2318 = vmatprep.subr.mxu0 %v2317
        %v2319 = vand.u32 %v414, 4294901760
        %2320 = vmatpush1.msra.mxu0 %v2319
        %v2321 = vand.u32 %v417, 4294901760
        %2322 = vmatprep.subr.mxu0 %v2321
        %v2323 = vand.u32 %v416, 4294901760
        %2324 = vmatpush1.msra.mxu0 %v2323
        %v2325 = vand.u32 %v419, 4294901760
        %2326 = vmatprep.subr.mxu0 %v2325
        %v2327 = vand.u32 %v418, 4294901760
        %2328 = vmatpush1.msra.mxu0 %v2327
        %v2329 = vand.u32 %v421, 4294901760
        %2330 = vmatprep.subr.mxu0 %v2329
        %v2331 = vand.u32 %v420, 4294901760
        %2332 = vmatpush1.msra.mxu0 %v2331
        %v2333 = vand.u32 %v423, 4294901760
        %2334 = vmatprep.subr.mxu0 %v2333
        %v2335 = vand.u32 %v422, 4294901760
        %2336 = vmatpush1.msra.mxu0 %v2335
        %v2337 = vand.u32 %v425, 4294901760
        %2338 = vmatprep.subr.mxu0 %v2337
        %v2339 = vand.u32 %v424, 4294901760
        %2340 = vmatpush1.msra.mxu0 %v2339
        %v2341 = vand.u32 %v427, 4294901760
        %2342 = vmatprep.subr.mxu0 %v2341
        %v2343 = vand.u32 %v426, 4294901760
        %2344 = vmatpush1.msra.mxu0 %v2343
        %v2345 = vand.u32 %v429, 4294901760
        %2346 = vmatprep.subr.mxu0 %v2345
        %v2347 = vand.u32 %v428, 4294901760
        %2348 = vmatpush1.msra.mxu0 %v2347
        %v2349 = vand.u32 %v431, 4294901760
        %2350 = vmatprep.subr.mxu0 %v2349
        %v2351 = vand.u32 %v430, 4294901760
        %2352 = vmatpush1.msra.mxu0 %v2351
        %v2353 = vand.u32 %v433, 4294901760
        %2354 = vmatprep.subr.mxu0 %v2353
        %v2355 = vand.u32 %v432, 4294901760
        %2356 = vmatpush1.msra.mxu0 %v2355
        %v2357 = vand.u32 %v435, 4294901760
        %2358 = vmatprep.subr.mxu0 %v2357
        %v2359 = vand.u32 %v434, 4294901760
        %2360 = vmatpush1.msra.mxu0 %v2359
        %v2361 = vand.u32 %v437, 4294901760
        %2362 = vmatprep.subr.mxu0 %v2361
        %v2363 = vand.u32 %v436, 4294901760
        %2364 = vmatpush1.msra.mxu0 %v2363
        %v2365 = vand.u32 %v439, 4294901760
        %2366 = vmatprep.subr.mxu0 %v2365
        %v2367 = vand.u32 %v438, 4294901760
        %2368 = vmatpush1.msra.mxu0 %v2367
        %v2369 = vand.u32 %v441, 4294901760
        %2370 = vmatprep.subr.mxu0 %v2369
        %v2371 = vand.u32 %v440, 4294901760
        %2372 = vmatpush1.msra.mxu0 %v2371
        %v2373 = vand.u32 %v443, 4294901760
        %2374 = vmatprep.subr.mxu0 %v2373
        %v2375 = vand.u32 %v442, 4294901760
        %2376 = vmatpush1.msra.mxu0 %v2375
        %v2377 = vand.u32 %v445, 4294901760
        %2378 = vmatprep.subr.mxu0 %v2377
        %v2379 = vand.u32 %v444, 4294901760
        %2380 = vmatpush1.msra.mxu0 %v2379
        %v2381 = vand.u32 %v447, 4294901760
        %2382 = vmatprep.subr.mxu0 %v2381
        %v2383 = vand.u32 %v446, 4294901760
        %2384 = vmatpush1.msra.mxu0 %v2383
        %v2385 = vand.u32 %v449, 4294901760
        %2386 = vmatprep.subr.mxu0 %v2385
        %v2387 = vand.u32 %v448, 4294901760
        %2388 = vmatpush1.msra.mxu0 %v2387
        %v2389 = vand.u32 %v451, 4294901760
        %2390 = vmatprep.subr.mxu0 %v2389
        %v2391 = vand.u32 %v450, 4294901760
        %2392 = vmatpush1.msra.mxu0 %v2391
        %v2393 = vand.u32 %v453, 4294901760
        %2394 = vmatprep.subr.mxu0 %v2393
        %v2395 = vand.u32 %v452, 4294901760
        %2396 = vmatpush1.msra.mxu0 %v2395
        %v2397 = vand.u32 %v325, 4294901760
        %2398 = vmatprep.mubr.f32.mxu0 %v2397
        %v2399 = vand.u32 %v324, 4294901760
        %2400 = vmatmul.mubr.f32.gmra.mrb[0].mxu0 %v2399
        %v2401 = vpop.f32.mrb[0].mxu0
        %v2402 = vadd.f32 %v2185, %v2401
        %v2403 = vpop.f32.mrb[0].mxu0
        %v2404 = vadd.f32 %v2187, %v2403
        %v2405 = vand.u32 %v331, 4294901760
        %2406 = vmatprep.mubr.f32.mxu0 %v2405
        %v2407 = vand.u32 %v330, 4294901760
        %2408 = vmatmul.mubr.f32.gmra.mrb[0].mxu0 %v2407
        %v2409 = vpop.f32.mrb[0].mxu0
        %v2410 = vadd.f32 %v2193, %v2409
        %v2411 = vpop.f32.mrb[0].mxu0
        %v2412 = vadd.f32 %v2195, %v2411
        %v2413 = vand.u32 %v337, 4294901760
        %2414 = vmatprep.mubr.f32.mxu0 %v2413
        %v2415 = vand.u32 %v336, 4294901760
        %2416 = vmatmul.mubr.f32.gmra.mrb[0].mxu0 %v2415
        %v2417 = vpop.f32.mrb[0].mxu0
        %v2418 = vadd.f32 %v2201, %v2417
        %v2419 = vpop.f32.mrb[0].mxu0
        %v2420 = vadd.f32 %v2203, %v2419
        %v2421 = vand.u32 %v343, 4294901760
        %2422 = vmatprep.mubr.f32.mxu0 %v2421
        %v2423 = vand.u32 %v342, 4294901760
        %2424 = vmatmul.mubr.f32.gmra.mrb[0].mxu0 %v2423
        %v2425 = vpop.f32.mrb[0].mxu0
        %v2426 = vadd.f32 %v2209, %v2425
        %v2427 = vpop.f32.mrb[0].mxu0
        %v2428 = vadd.f32 %v2211, %v2427
        %v2429 = vand.u32 %v349, 4294901760
        %2430 = vmatprep.mubr.f32.mxu0 %v2429
        %v2431 = vand.u32 %v348, 4294901760
        %2432 = vmatmul.mubr.f32.gmra.mrb[0].mxu0 %v2431
        %v2433 = vpop.f32.mrb[0].mxu0
        %v2434 = vadd.f32 %v2217, %v2433
        %v2435 = vpop.f32.mrb[0].mxu0
        %v2436 = vadd.f32 %v2219, %v2435
        %v2437 = vand.u32 %v355, 4294901760
        %2438 = vmatprep.mubr.f32.mxu0 %v2437
        %v2439 = vand.u32 %v354, 4294901760
        %2440 = vmatmul.mubr.f32.gmra.mrb[0].mxu0 %v2439
        %v2441 = vpop.f32.mrb[0].mxu0
        %v2442 = vadd.f32 %v2225, %v2441
        %v2443 = vpop.f32.mrb[0].mxu0
        %v2444 = vadd.f32 %v2227, %v2443
        %v2445 = vand.u32 %v361, 4294901760
        %2446 = vmatprep.mubr.f32.mxu0 %v2445
        %v2447 = vand.u32 %v360, 4294901760
        %2448 = vmatmul.mubr.f32.gmra.mrb[0].mxu0 %v2447
        %v2449 = vpop.f32.mrb[0].mxu0
        %v2450 = vadd.f32 %v2233, %v2449
        %v2451 = vpop.f32.mrb[0].mxu0
        %v2452 = vadd.f32 %v2235, %v2451
        %v2453 = vand.u32 %v367, 4294901760
        %2454 = vmatprep.mubr.f32.mxu0 %v2453
        %v2455 = vand.u32 %v366, 4294901760
        %2456 = vmatmul.mubr.f32.gmra.mrb[0].mxu0 %v2455
        %v2457 = vpop.f32.mrb[0].mxu0
        %v2458 = vadd.f32 %v2241, %v2457
        %v2459 = vpop.f32.mrb[0].mxu0
        %v2460 = vadd.f32 %v2243, %v2459
        %v2461 = vand.u32 %v373, 4294901760
        %2462 = vmatprep.mubr.f32.mxu0 %v2461
        %v2463 = vand.u32 %v372, 4294901760
        %2464 = vmatmul.mubr.f32.gmra.mrb[0].mxu0 %v2463
        %v2465 = vpop.f32.mrb[0].mxu0
        %v2466 = vadd.f32 %v2249, %v2465
        %v2467 = vpop.f32.mrb[0].mxu0
        %v2468 = vadd.f32 %v2251, %v2467
        %v2469 = vand.u32 %v379, 4294901760
        %2470 = vmatprep.mubr.f32.mxu0 %v2469
        %v2471 = vand.u32 %v378, 4294901760
        %2472 = vmatmul.mubr.f32.gmra.mrb[0].mxu0 %v2471
        %v2473 = vpop.f32.mrb[0].mxu0
        %v2474 = vadd.f32 %v2257, %v2473
        %v2475 = vpop.f32.mrb[0].mxu0
        %v2476 = vadd.f32 %v2259, %v2475
        %v2477 = vand.u32 %v385, 4294901760
        %2478 = vmatprep.mubr.f32.mxu0 %v2477
        %v2479 = vand.u32 %v384, 4294901760
        %2480 = vmatmul.mubr.f32.gmra.mrb[0].mxu0 %v2479
        %v2481 = vpop.f32.mrb[0].mxu0
        %v2482 = vadd.f32 %v2265, %v2481
        %v2483 = vpop.f32.mrb[0].mxu0
        %v2484 = vadd.f32 %v2267, %v2483
        %2485 = vdwg.mxu0
        %v2486 = vand.u32 %v455, 4294901760
        %2487 = vmatprep.subr.mxu0 %v2486
        %v2488 = vand.u32 %v454, 4294901760
        %2489 = vmatpush1.msra.mxu0 %v2488
        %v2490 = vand.u32 %v457, 4294901760
        %2491 = vmatprep.subr.mxu0 %v2490
        %v2492 = vand.u32 %v456, 4294901760
        %2493 = vmatpush1.msra.mxu0 %v2492
        %v2494 = vand.u32 %v459, 4294901760
        %2495 = vmatprep.subr.mxu0 %v2494
        %v2496 = vand.u32 %v458, 4294901760
        %2497 = vmatpush1.msra.mxu0 %v2496
        %v2498 = vand.u32 %v461, 4294901760
        %2499 = vmatprep.subr.mxu0 %v2498
        %v2500 = vand.u32 %v460, 4294901760
        %2501 = vmatpush1.msra.mxu0 %v2500
        %v2502 = vand.u32 %v463, 4294901760
        %2503 = vmatprep.subr.mxu0 %v2502
        %v2504 = vand.u32 %v462, 4294901760
        %2505 = vmatpush1.msra.mxu0 %v2504
        %v2506 = vand.u32 %v465, 4294901760
        %2507 = vmatprep.subr.mxu0 %v2506
        %v2508 = vand.u32 %v464, 4294901760
        %2509 = vmatpush1.msra.mxu0 %v2508
        %v2510 = vand.u32 %v467, 4294901760
        %2511 = vmatprep.subr.mxu0 %v2510
        %v2512 = vand.u32 %v466, 4294901760
        %2513 = vmatpush1.msra.mxu0 %v2512
        %v2514 = vand.u32 %v469, 4294901760
        %2515 = vmatprep.subr.mxu0 %v2514
        %v2516 = vand.u32 %v468, 4294901760
        %2517 = vmatpush1.msra.mxu0 %v2516
        %v2518 = vand.u32 %v471, 4294901760
        %2519 = vmatprep.subr.mxu0 %v2518
        %v2520 = vand.u32 %v470, 4294901760
        %2521 = vmatpush1.msra.mxu0 %v2520
        %v2522 = vand.u32 %v473, 4294901760
        %2523 = vmatprep.subr.mxu0 %v2522
        %v2524 = vand.u32 %v472, 4294901760
        %2525 = vmatpush1.msra.mxu0 %v2524
        %v2526 = vand.u32 %v475, 4294901760
        %2527 = vmatprep.subr.mxu0 %v2526
        %v2528 = vand.u32 %v474, 4294901760
        %2529 = vmatpush1.msra.mxu0 %v2528
        %v2530 = vand.u32 %v477, 4294901760
        %2531 = vmatprep.subr.mxu0 %v2530
        %v2532 = vand.u32 %v476, 4294901760
        %2533 = vmatpush1.msra.mxu0 %v2532
        %v2534 = vand.u32 %v479, 4294901760
        %2535 = vmatprep.subr.mxu0 %v2534
        %v2536 = vand.u32 %v478, 4294901760
        %2537 = vmatpush1.msra.mxu0 %v2536
        %v2538 = vand.u32 %v481, 4294901760
        %2539 = vmatprep.subr.mxu0 %v2538
        %v2540 = vand.u32 %v480, 4294901760
        %2541 = vmatpush1.msra.mxu0 %v2540
        %v2542 = vand.u32 %v483, 4294901760
        %2543 = vmatprep.subr.mxu0 %v2542
        %v2544 = vand.u32 %v482, 4294901760
        %2545 = vmatpush1.msra.mxu0 %v2544
        %v2546 = vand.u32 %v485, 4294901760
        %2547 = vmatprep.subr.mxu0 %v2546
        %v2548 = vand.u32 %v484, 4294901760
        %2549 = vmatpush1.msra.mxu0 %v2548
        %v2550 = vand.u32 %v487, 4294901760
        %2551 = vmatprep.subr.mxu0 %v2550
        %v2552 = vand.u32 %v486, 4294901760
        %2553 = vmatpush1.msra.mxu0 %v2552
        %v2554 = vand.u32 %v489, 4294901760
        %2555 = vmatprep.subr.mxu0 %v2554
        %v2556 = vand.u32 %v488, 4294901760
        %2557 = vmatpush1.msra.mxu0 %v2556
        %v2558 = vand.u32 %v491, 4294901760
        %2559 = vmatprep.subr.mxu0 %v2558
        %v2560 = vand.u32 %v490, 4294901760
        %2561 = vmatpush1.msra.mxu0 %v2560
        %v2562 = vand.u32 %v493, 4294901760
        %2563 = vmatprep.subr.mxu0 %v2562
        %v2564 = vand.u32 %v492, 4294901760
        %2565 = vmatpush1.msra.mxu0 %v2564
        %v2566 = vand.u32 %v495, 4294901760
        %2567 = vmatprep.subr.mxu0 %v2566
        %v2568 = vand.u32 %v494, 4294901760
        %2569 = vmatpush1.msra.mxu0 %v2568
        %v2570 = vand.u32 %v497, 4294901760
        %2571 = vmatprep.subr.mxu0 %v2570
        %v2572 = vand.u32 %v496, 4294901760
        %2573 = vmatpush1.msra.mxu0 %v2572
        %v2574 = vand.u32 %v499, 4294901760
        %2575 = vmatprep.subr.mxu0 %v2574
        %v2576 = vand.u32 %v498, 4294901760
        %2577 = vmatpush1.msra.mxu0 %v2576
        %v2578 = vand.u32 %v501, 4294901760
        %2579 = vmatprep.subr.mxu0 %v2578
        %v2580 = vand.u32 %v500, 4294901760
        %2581 = vmatpush1.msra.mxu0 %v2580
        %v2582 = vand.u32 %v503, 4294901760
        %2583 = vmatprep.subr.mxu0 %v2582
        %v2584 = vand.u32 %v502, 4294901760
        %2585 = vmatpush1.msra.mxu0 %v2584
        %v2586 = vand.u32 %v505, 4294901760
        %2587 = vmatprep.subr.mxu0 %v2586
        %v2588 = vand.u32 %v504, 4294901760
        %2589 = vmatpush1.msra.mxu0 %v2588
        %v2590 = vand.u32 %v507, 4294901760
        %2591 = vmatprep.subr.mxu0 %v2590
        %v2592 = vand.u32 %v506, 4294901760
        %2593 = vmatpush1.msra.mxu0 %v2592
        %v2594 = vand.u32 %v509, 4294901760
        %2595 = vmatprep.subr.mxu0 %v2594
        %v2596 = vand.u32 %v508, 4294901760
        %2597 = vmatpush1.msra.mxu0 %v2596
        %v2598 = vand.u32 %v511, 4294901760
        %2599 = vmatprep.subr.mxu0 %v2598
        %v2600 = vand.u32 %v510, 4294901760
        %2601 = vmatpush1.msra.mxu0 %v2600
        %v2602 = vand.u32 %v513, 4294901760
        %2603 = vmatprep.subr.mxu0 %v2602
        %v2604 = vand.u32 %v512, 4294901760
        %2605 = vmatpush1.msra.mxu0 %v2604
        %v2606 = vand.u32 %v515, 4294901760
        %2607 = vmatprep.subr.mxu0 %v2606
        %v2608 = vand.u32 %v514, 4294901760
        %2609 = vmatpush1.msra.mxu0 %v2608
        %v2610 = vand.u32 %v517, 4294901760
        %2611 = vmatprep.subr.mxu0 %v2610
        %v2612 = vand.u32 %v516, 4294901760
        %2613 = vmatpush1.msra.mxu0 %v2612
        %v2614 = vand.u32 %v327, 4294901760
        %v2615 = vsub.f32 %v327, %v2614
        %v2616 = vand.u32 %v2615, 4294901760
        %v2617 = vsub.f32 %v2615, %v2616
        %v2618 = vand.u32 %v2617, 4294901760
        %2619 = vmatprep.mubr.f32.mxu0 %v2618
        %v2620 = vand.u32 %v326, 4294901760
        %v2621 = vsub.f32 %v326, %v2620
        %v2622 = vand.u32 %v2621, 4294901760
        %v2623 = vsub.f32 %v2621, %v2622
        %v2624 = vand.u32 %v2623, 4294901760
        %2625 = vmatmul.mubr.f32.gmra.mrb[0].mxu0 %v2624
        %v2626 = vpop.f32.mrb[0].mxu0
        %v2627 = vadd.f32 %v2402, %v2626
        %v2628 = vpop.f32.mrb[0].mxu0
        %v2629 = vadd.f32 %v2404, %v2628
        %v2630 = vand.u32 %v333, 4294901760
        %v2631 = vsub.f32 %v333, %v2630
        %v2632 = vand.u32 %v2631, 4294901760
        %v2633 = vsub.f32 %v2631, %v2632
        %v2634 = vand.u32 %v2633, 4294901760
        %2635 = vmatprep.mubr.f32.mxu0 %v2634
        %v2636 = vand.u32 %v332, 4294901760
        %v2637 = vsub.f32 %v332, %v2636
        %v2638 = vand.u32 %v2637, 4294901760
        %v2639 = vsub.f32 %v2637, %v2638
        %v2640 = vand.u32 %v2639, 4294901760
        %2641 = vmatmul.mubr.f32.gmra.mrb[0].mxu0 %v2640
        %v2642 = vpop.f32.mrb[0].mxu0
        %v2643 = vadd.f32 %v2410, %v2642
        %v2644 = vpop.f32.mrb[0].mxu0
        %v2645 = vadd.f32 %v2412, %v2644
        %v2646 = vand.u32 %v339, 4294901760
        %v2647 = vsub.f32 %v339, %v2646
        %v2648 = vand.u32 %v2647, 4294901760
        %v2649 = vsub.f32 %v2647, %v2648
        %v2650 = vand.u32 %v2649, 4294901760
        %2651 = vmatprep.mubr.f32.mxu0 %v2650
        %v2652 = vand.u32 %v338, 4294901760
        %v2653 = vsub.f32 %v338, %v2652
        %v2654 = vand.u32 %v2653, 4294901760
        %v2655 = vsub.f32 %v2653, %v2654
        %v2656 = vand.u32 %v2655, 4294901760
        %2657 = vmatmul.mubr.f32.gmra.mrb[0].mxu0 %v2656
        %v2658 = vpop.f32.mrb[0].mxu0
        %v2659 = vadd.f32 %v2418, %v2658
        %v2660 = vpop.f32.mrb[0].mxu0
        %v2661 = vadd.f32 %v2420, %v2660
        %v2662 = vand.u32 %v345, 4294901760
        %v2663 = vsub.f32 %v345, %v2662
        %v2664 = vand.u32 %v2663, 4294901760
        %v2665 = vsub.f32 %v2663, %v2664
        %v2666 = vand.u32 %v2665, 4294901760
        %2667 = vmatprep.mubr.f32.mxu0 %v2666
        %v2668 = vand.u32 %v344, 4294901760
        %v2669 = vsub.f32 %v344, %v2668
        %v2670 = vand.u32 %v2669, 4294901760
        %v2671 = vsub.f32 %v2669, %v2670
        %v2672 = vand.u32 %v2671, 4294901760
        %2673 = vmatmul.mubr.f32.gmra.mrb[0].mxu0 %v2672
        %v2674 = vpop.f32.mrb[0].mxu0
        %v2675 = vadd.f32 %v2426, %v2674
        %v2676 = vpop.f32.mrb[0].mxu0
        %v2677 = vadd.f32 %v2428, %v2676
        %v2678 = vand.u32 %v351, 4294901760
        %v2679 = vsub.f32 %v351, %v2678
        %v2680 = vand.u32 %v2679, 4294901760
        %v2681 = vsub.f32 %v2679, %v2680
        %v2682 = vand.u32 %v2681, 4294901760
        %2683 = vmatprep.mubr.f32.mxu0 %v2682
        %v2684 = vand.u32 %v350, 4294901760
        %v2685 = vsub.f32 %v350, %v2684
        %v2686 = vand.u32 %v2685, 4294901760
        %v2687 = vsub.f32 %v2685, %v2686
        %v2688 = vand.u32 %v2687, 4294901760
        %2689 = vmatmul.mubr.f32.gmra.mrb[0].mxu0 %v2688
        %v2690 = vpop.f32.mrb[0].mxu0
        %v2691 = vadd.f32 %v2434, %v2690
        %v2692 = vpop.f32.mrb[0].mxu0
        %v2693 = vadd.f32 %v2436, %v2692
        %v2694 = vand.u32 %v357, 4294901760
        %v2695 = vsub.f32 %v357, %v2694
        %v2696 = vand.u32 %v2695, 4294901760
        %v2697 = vsub.f32 %v2695, %v2696
        %v2698 = vand.u32 %v2697, 4294901760
        %2699 = vmatprep.mubr.f32.mxu0 %v2698
        %v2700 = vand.u32 %v356, 4294901760
        %v2701 = vsub.f32 %v356, %v2700
        %v2702 = vand.u32 %v2701, 4294901760
        %v2703 = vsub.f32 %v2701, %v2702
        %v2704 = vand.u32 %v2703, 4294901760
        %2705 = vmatmul.mubr.f32.gmra.mrb[0].mxu0 %v2704
        %v2706 = vpop.f32.mrb[0].mxu0
        %v2707 = vadd.f32 %v2442, %v2706
        %v2708 = vpop.f32.mrb[0].mxu0
        %v2709 = vadd.f32 %v2444, %v2708
        %v2710 = vand.u32 %v363, 4294901760
        %v2711 = vsub.f32 %v363, %v2710
        %v2712 = vand.u32 %v2711, 4294901760
        %v2713 = vsub.f32 %v2711, %v2712
        %v2714 = vand.u32 %v2713, 4294901760
        %2715 = vmatprep.mubr.f32.mxu0 %v2714
        %v2716 = vand.u32 %v362, 4294901760
        %v2717 = vsub.f32 %v362, %v2716
        %v2718 = vand.u32 %v2717, 4294901760
        %v2719 = vsub.f32 %v2717, %v2718
        %v2720 = vand.u32 %v2719, 4294901760
        %2721 = vmatmul.mubr.f32.gmra.mrb[0].mxu0 %v2720
        %v2722 = vpop.f32.mrb[0].mxu0
        %v2723 = vadd.f32 %v2450, %v2722
        %v2724 = vpop.f32.mrb[0].mxu0
        %v2725 = vadd.f32 %v2452, %v2724
        %v2726 = vand.u32 %v369, 4294901760
        %v2727 = vsub.f32 %v369, %v2726
        %v2728 = vand.u32 %v2727, 4294901760
        %v2729 = vsub.f32 %v2727, %v2728
        %v2730 = vand.u32 %v2729, 4294901760
        %2731 = vmatprep.mubr.f32.mxu0 %v2730
        %v2732 = vand.u32 %v368, 4294901760
        %v2733 = vsub.f32 %v368, %v2732
        %v2734 = vand.u32 %v2733, 4294901760
        %v2735 = vsub.f32 %v2733, %v2734
        %v2736 = vand.u32 %v2735, 4294901760
        %2737 = vmatmul.mubr.f32.gmra.mrb[0].mxu0 %v2736
        %v2738 = vpop.f32.mrb[0].mxu0
        %v2739 = vadd.f32 %v2458, %v2738
        %v2740 = vpop.f32.mrb[0].mxu0
        %v2741 = vadd.f32 %v2460, %v2740
        %v2742 = vand.u32 %v375, 4294901760
        %v2743 = vsub.f32 %v375, %v2742
        %v2744 = vand.u32 %v2743, 4294901760
        %v2745 = vsub.f32 %v2743, %v2744
        %v2746 = vand.u32 %v2745, 4294901760
        %2747 = vmatprep.mubr.f32.mxu0 %v2746
        %v2748 = vand.u32 %v374, 4294901760
        %v2749 = vsub.f32 %v374, %v2748
        %v2750 = vand.u32 %v2749, 4294901760
        %v2751 = vsub.f32 %v2749, %v2750
        %v2752 = vand.u32 %v2751, 4294901760
        %2753 = vmatmul.mubr.f32.gmra.mrb[0].mxu0 %v2752
        %v2754 = vpop.f32.mrb[0].mxu0
        %v2755 = vadd.f32 %v2466, %v2754
        %v2756 = vpop.f32.mrb[0].mxu0
        %v2757 = vadd.f32 %v2468, %v2756
        %v2758 = vand.u32 %v381, 4294901760
        %v2759 = vsub.f32 %v381, %v2758
        %v2760 = vand.u32 %v2759, 4294901760
        %v2761 = vsub.f32 %v2759, %v2760
        %v2762 = vand.u32 %v2761, 4294901760
        %2763 = vmatprep.mubr.f32.mxu0 %v2762
        %v2764 = vand.u32 %v380, 4294901760
        %v2765 = vsub.f32 %v380, %v2764
        %v2766 = vand.u32 %v2765, 4294901760
        %v2767 = vsub.f32 %v2765, %v2766
        %v2768 = vand.u32 %v2767, 4294901760
        %2769 = vmatmul.mubr.f32.gmra.mrb[0].mxu0 %v2768
        %v2770 = vpop.f32.mrb[0].mxu0
        %v2771 = vadd.f32 %v2474, %v2770
        %v2772 = vpop.f32.mrb[0].mxu0
        %v2773 = vadd.f32 %v2476, %v2772
        %v2774 = vand.u32 %v387, 4294901760
        %v2775 = vsub.f32 %v387, %v2774
        %v2776 = vand.u32 %v2775, 4294901760
        %v2777 = vsub.f32 %v2775, %v2776
        %v2778 = vand.u32 %v2777, 4294901760
        %2779 = vmatprep.mubr.f32.mxu0 %v2778
        %v2780 = vand.u32 %v386, 4294901760
        %v2781 = vsub.f32 %v386, %v2780
        %v2782 = vand.u32 %v2781, 4294901760
        %v2783 = vsub.f32 %v2781, %v2782
        %v2784 = vand.u32 %v2783, 4294901760
        %2785 = vmatmul.mubr.f32.gmra.mrb[0].mxu0 %v2784
        %v2786 = vpop.f32.mrb[0].mxu0
        %v2787 = vadd.f32 %v2482, %v2786
        %v2788 = vpop.f32.mrb[0].mxu0
        %v2789 = vadd.f32 %v2484, %v2788
        %2790 = vdwg.mxu0
        %v2791 = vand.u32 %v455, 4294901760
        %v2792 = vsub.f32 %v455, %v2791
        %v2793 = vand.u32 %v2792, 4294901760
        %v2794 = vsub.f32 %v2792, %v2793
        %v2795 = vand.u32 %v2794, 4294901760
        %2796 = vmatprep.subr.mxu0 %v2795
        %v2797 = vand.u32 %v454, 4294901760
        %v2798 = vsub.f32 %v454, %v2797
        %v2799 = vand.u32 %v2798, 4294901760
        %v2800 = vsub.f32 %v2798, %v2799
        %v2801 = vand.u32 %v2800, 4294901760
        %2802 = vmatpush1.msra.mxu0 %v2801
        %v2803 = vand.u32 %v457, 4294901760
        %v2804 = vsub.f32 %v457, %v2803
        %v2805 = vand.u32 %v2804, 4294901760
        %v2806 = vsub.f32 %v2804, %v2805
        %v2807 = vand.u32 %v2806, 4294901760
        %2808 = vmatprep.subr.mxu0 %v2807
        %v2809 = vand.u32 %v456, 4294901760
        %v2810 = vsub.f32 %v456, %v2809
        %v2811 = vand.u32 %v2810, 4294901760
        %v2812 = vsub.f32 %v2810, %v2811
        %v2813 = vand.u32 %v2812, 4294901760
        %2814 = vmatpush1.msra.mxu0 %v2813
        %v2815 = vand.u32 %v459, 4294901760
        %v2816 = vsub.f32 %v459, %v2815
        %v2817 = vand.u32 %v2816, 4294901760
        %v2818 = vsub.f32 %v2816, %v2817
        %v2819 = vand.u32 %v2818, 4294901760
        %2820 = vmatprep.subr.mxu0 %v2819
        %v2821 = vand.u32 %v458, 4294901760
        %v2822 = vsub.f32 %v458, %v2821
        %v2823 = vand.u32 %v2822, 4294901760
        %v2824 = vsub.f32 %v2822, %v2823
        %v2825 = vand.u32 %v2824, 4294901760
        %2826 = vmatpush1.msra.mxu0 %v2825
        %v2827 = vand.u32 %v461, 4294901760
        %v2828 = vsub.f32 %v461, %v2827
        %v2829 = vand.u32 %v2828, 4294901760
        %v2830 = vsub.f32 %v2828, %v2829
        %v2831 = vand.u32 %v2830, 4294901760
        %2832 = vmatprep.subr.mxu0 %v2831
        %v2833 = vand.u32 %v460, 4294901760
        %v2834 = vsub.f32 %v460, %v2833
        %v2835 = vand.u32 %v2834, 4294901760
        %v2836 = vsub.f32 %v2834, %v2835
        %v2837 = vand.u32 %v2836, 4294901760
        %2838 = vmatpush1.msra.mxu0 %v2837
        %v2839 = vand.u32 %v463, 4294901760
        %v2840 = vsub.f32 %v463, %v2839
        %v2841 = vand.u32 %v2840, 4294901760
        %v2842 = vsub.f32 %v2840, %v2841
        %v2843 = vand.u32 %v2842, 4294901760
        %2844 = vmatprep.subr.mxu0 %v2843
        %v2845 = vand.u32 %v462, 4294901760
        %v2846 = vsub.f32 %v462, %v2845
        %v2847 = vand.u32 %v2846, 4294901760
        %v2848 = vsub.f32 %v2846, %v2847
        %v2849 = vand.u32 %v2848, 4294901760
        %2850 = vmatpush1.msra.mxu0 %v2849
        %v2851 = vand.u32 %v465, 4294901760
        %v2852 = vsub.f32 %v465, %v2851
        %v2853 = vand.u32 %v2852, 4294901760
        %v2854 = vsub.f32 %v2852, %v2853
        %v2855 = vand.u32 %v2854, 4294901760
        %2856 = vmatprep.subr.mxu0 %v2855
        %v2857 = vand.u32 %v464, 4294901760
        %v2858 = vsub.f32 %v464, %v2857
        %v2859 = vand.u32 %v2858, 4294901760
        %v2860 = vsub.f32 %v2858, %v2859
        %v2861 = vand.u32 %v2860, 4294901760
        %2862 = vmatpush1.msra.mxu0 %v2861
        %v2863 = vand.u32 %v467, 4294901760
        %v2864 = vsub.f32 %v467, %v2863
        %v2865 = vand.u32 %v2864, 4294901760
        %v2866 = vsub.f32 %v2864, %v2865
        %v2867 = vand.u32 %v2866, 4294901760
        %2868 = vmatprep.subr.mxu0 %v2867
        %v2869 = vand.u32 %v466, 4294901760
        %v2870 = vsub.f32 %v466, %v2869
        %v2871 = vand.u32 %v2870, 4294901760
        %v2872 = vsub.f32 %v2870, %v2871
        %v2873 = vand.u32 %v2872, 4294901760
        %2874 = vmatpush1.msra.mxu0 %v2873
        %v2875 = vand.u32 %v469, 4294901760
        %v2876 = vsub.f32 %v469, %v2875
        %v2877 = vand.u32 %v2876, 4294901760
        %v2878 = vsub.f32 %v2876, %v2877
        %v2879 = vand.u32 %v2878, 4294901760
        %2880 = vmatprep.subr.mxu0 %v2879
        %v2881 = vand.u32 %v468, 4294901760
        %v2882 = vsub.f32 %v468, %v2881
        %v2883 = vand.u32 %v2882, 4294901760
        %v2884 = vsub.f32 %v2882, %v2883
        %v2885 = vand.u32 %v2884, 4294901760
        %2886 = vmatpush1.msra.mxu0 %v2885
        %v2887 = vand.u32 %v471, 4294901760
        %v2888 = vsub.f32 %v471, %v2887
        %v2889 = vand.u32 %v2888, 4294901760
        %v2890 = vsub.f32 %v2888, %v2889
        %v2891 = vand.u32 %v2890, 4294901760
        %2892 = vmatprep.subr.mxu0 %v2891
        %v2893 = vand.u32 %v470, 4294901760
        %v2894 = vsub.f32 %v470, %v2893
        %v2895 = vand.u32 %v2894, 4294901760
        %v2896 = vsub.f32 %v2894, %v2895
        %v2897 = vand.u32 %v2896, 4294901760
        %2898 = vmatpush1.msra.mxu0 %v2897
        %v2899 = vand.u32 %v473, 4294901760
        %v2900 = vsub.f32 %v473, %v2899
        %v2901 = vand.u32 %v2900, 4294901760
        %v2902 = vsub.f32 %v2900, %v2901
        %v2903 = vand.u32 %v2902, 4294901760
        %2904 = vmatprep.subr.mxu0 %v2903
        %v2905 = vand.u32 %v472, 4294901760
        %v2906 = vsub.f32 %v472, %v2905
        %v2907 = vand.u32 %v2906, 4294901760
        %v2908 = vsub.f32 %v2906, %v2907
        %v2909 = vand.u32 %v2908, 4294901760
        %2910 = vmatpush1.msra.mxu0 %v2909
        %v2911 = vand.u32 %v475, 4294901760
        %v2912 = vsub.f32 %v475, %v2911
        %v2913 = vand.u32 %v2912, 4294901760
        %v2914 = vsub.f32 %v2912, %v2913
        %v2915 = vand.u32 %v2914, 4294901760
        %2916 = vmatprep.subr.mxu0 %v2915
        %v2917 = vand.u32 %v474, 4294901760
        %v2918 = vsub.f32 %v474, %v2917
        %v2919 = vand.u32 %v2918, 4294901760
        %v2920 = vsub.f32 %v2918, %v2919
        %v2921 = vand.u32 %v2920, 4294901760
        %2922 = vmatpush1.msra.mxu0 %v2921
        %v2923 = vand.u32 %v477, 4294901760
        %v2924 = vsub.f32 %v477, %v2923
        %v2925 = vand.u32 %v2924, 4294901760
        %v2926 = vsub.f32 %v2924, %v2925
        %v2927 = vand.u32 %v2926, 4294901760
        %2928 = vmatprep.subr.mxu0 %v2927
        %v2929 = vand.u32 %v476, 4294901760
        %v2930 = vsub.f32 %v476, %v2929
        %v2931 = vand.u32 %v2930, 4294901760
        %v2932 = vsub.f32 %v2930, %v2931
        %v2933 = vand.u32 %v2932, 4294901760
        %2934 = vmatpush1.msra.mxu0 %v2933
        %v2935 = vand.u32 %v479, 4294901760
        %v2936 = vsub.f32 %v479, %v2935
        %v2937 = vand.u32 %v2936, 4294901760
        %v2938 = vsub.f32 %v2936, %v2937
        %v2939 = vand.u32 %v2938, 4294901760
        %2940 = vmatprep.subr.mxu0 %v2939
        %v2941 = vand.u32 %v478, 4294901760
        %v2942 = vsub.f32 %v478, %v2941
        %v2943 = vand.u32 %v2942, 4294901760
        %v2944 = vsub.f32 %v2942, %v2943
        %v2945 = vand.u32 %v2944, 4294901760
        %2946 = vmatpush1.msra.mxu0 %v2945
        %v2947 = vand.u32 %v481, 4294901760
        %v2948 = vsub.f32 %v481, %v2947
        %v2949 = vand.u32 %v2948, 4294901760
        %v2950 = vsub.f32 %v2948, %v2949
        %v2951 = vand.u32 %v2950, 4294901760
        %2952 = vmatprep.subr.mxu0 %v2951
        %v2953 = vand.u32 %v480, 4294901760
        %v2954 = vsub.f32 %v480, %v2953
        %v2955 = vand.u32 %v2954, 4294901760
        %v2956 = vsub.f32 %v2954, %v2955
        %v2957 = vand.u32 %v2956, 4294901760
        %2958 = vmatpush1.msra.mxu0 %v2957
        %v2959 = vand.u32 %v483, 4294901760
        %v2960 = vsub.f32 %v483, %v2959
        %v2961 = vand.u32 %v2960, 4294901760
        %v2962 = vsub.f32 %v2960, %v2961
        %v2963 = vand.u32 %v2962, 4294901760
        %2964 = vmatprep.subr.mxu0 %v2963
        %v2965 = vand.u32 %v482, 4294901760
        %v2966 = vsub.f32 %v482, %v2965
        %v2967 = vand.u32 %v2966, 4294901760
        %v2968 = vsub.f32 %v2966, %v2967
        %v2969 = vand.u32 %v2968, 4294901760
        %2970 = vmatpush1.msra.mxu0 %v2969
        %v2971 = vand.u32 %v485, 4294901760
        %v2972 = vsub.f32 %v485, %v2971
        %v2973 = vand.u32 %v2972, 4294901760
        %v2974 = vsub.f32 %v2972, %v2973
        %v2975 = vand.u32 %v2974, 4294901760
        %2976 = vmatprep.subr.mxu0 %v2975
        %v2977 = vand.u32 %v484, 4294901760
        %v2978 = vsub.f32 %v484, %v2977
        %v2979 = vand.u32 %v2978, 4294901760
        %v2980 = vsub.f32 %v2978, %v2979
        %v2981 = vand.u32 %v2980, 4294901760
        %2982 = vmatpush1.msra.mxu0 %v2981
        %v2983 = vand.u32 %v487, 4294901760
        %v2984 = vsub.f32 %v487, %v2983
        %v2985 = vand.u32 %v2984, 4294901760
        %v2986 = vsub.f32 %v2984, %v2985
        %v2987 = vand.u32 %v2986, 4294901760
        %2988 = vmatprep.subr.mxu0 %v2987
        %v2989 = vand.u32 %v486, 4294901760
        %v2990 = vsub.f32 %v486, %v2989
        %v2991 = vand.u32 %v2990, 4294901760
        %v2992 = vsub.f32 %v2990, %v2991
        %v2993 = vand.u32 %v2992, 4294901760
        %2994 = vmatpush1.msra.mxu0 %v2993
        %v2995 = vand.u32 %v489, 4294901760
        %v2996 = vsub.f32 %v489, %v2995
        %v2997 = vand.u32 %v2996, 4294901760
        %v2998 = vsub.f32 %v2996, %v2997
        %v2999 = vand.u32 %v2998, 4294901760
        %3000 = vmatprep.subr.mxu0 %v2999
        %v3001 = vand.u32 %v488, 4294901760
        %v3002 = vsub.f32 %v488, %v3001
        %v3003 = vand.u32 %v3002, 4294901760
        %v3004 = vsub.f32 %v3002, %v3003
        %v3005 = vand.u32 %v3004, 4294901760
        %3006 = vmatpush1.msra.mxu0 %v3005
        %v3007 = vand.u32 %v491, 4294901760
        %v3008 = vsub.f32 %v491, %v3007
        %v3009 = vand.u32 %v3008, 4294901760
        %v3010 = vsub.f32 %v3008, %v3009
        %v3011 = vand.u32 %v3010, 4294901760
        %3012 = vmatprep.subr.mxu0 %v3011
        %v3013 = vand.u32 %v490, 4294901760
        %v3014 = vsub.f32 %v490, %v3013
        %v3015 = vand.u32 %v3014, 4294901760
        %v3016 = vsub.f32 %v3014, %v3015
        %v3017 = vand.u32 %v3016, 4294901760
        %3018 = vmatpush1.msra.mxu0 %v3017
        %v3019 = vand.u32 %v493, 4294901760
        %v3020 = vsub.f32 %v493, %v3019
        %v3021 = vand.u32 %v3020, 4294901760
        %v3022 = vsub.f32 %v3020, %v3021
        %v3023 = vand.u32 %v3022, 4294901760
        %3024 = vmatprep.subr.mxu0 %v3023
        %v3025 = vand.u32 %v492, 4294901760
        %v3026 = vsub.f32 %v492, %v3025
        %v3027 = vand.u32 %v3026, 4294901760
        %v3028 = vsub.f32 %v3026, %v3027
        %v3029 = vand.u32 %v3028, 4294901760
        %3030 = vmatpush1.msra.mxu0 %v3029
        %v3031 = vand.u32 %v495, 4294901760
        %v3032 = vsub.f32 %v495, %v3031
        %v3033 = vand.u32 %v3032, 4294901760
        %v3034 = vsub.f32 %v3032, %v3033
        %v3035 = vand.u32 %v3034, 4294901760
        %3036 = vmatprep.subr.mxu0 %v3035
        %v3037 = vand.u32 %v494, 4294901760
        %v3038 = vsub.f32 %v494, %v3037
        %v3039 = vand.u32 %v3038, 4294901760
        %v3040 = vsub.f32 %v3038, %v3039
        %v3041 = vand.u32 %v3040, 4294901760
        %3042 = vmatpush1.msra.mxu0 %v3041
        %v3043 = vand.u32 %v497, 4294901760
        %v3044 = vsub.f32 %v497, %v3043
        %v3045 = vand.u32 %v3044, 4294901760
        %v3046 = vsub.f32 %v3044, %v3045
        %v3047 = vand.u32 %v3046, 4294901760
        %3048 = vmatprep.subr.mxu0 %v3047
        %v3049 = vand.u32 %v496, 4294901760
        %v3050 = vsub.f32 %v496, %v3049
        %v3051 = vand.u32 %v3050, 4294901760
        %v3052 = vsub.f32 %v3050, %v3051
        %v3053 = vand.u32 %v3052, 4294901760
        %3054 = vmatpush1.msra.mxu0 %v3053
        %v3055 = vand.u32 %v499, 4294901760
        %v3056 = vsub.f32 %v499, %v3055
        %v3057 = vand.u32 %v3056, 4294901760
        %v3058 = vsub.f32 %v3056, %v3057
        %v3059 = vand.u32 %v3058, 4294901760
        %3060 = vmatprep.subr.mxu0 %v3059
        %v3061 = vand.u32 %v498, 4294901760
        %v3062 = vsub.f32 %v498, %v3061
        %v3063 = vand.u32 %v3062, 4294901760
        %v3064 = vsub.f32 %v3062, %v3063
        %v3065 = vand.u32 %v3064, 4294901760
        %3066 = vmatpush1.msra.mxu0 %v3065
        %v3067 = vand.u32 %v501, 4294901760
        %v3068 = vsub.f32 %v501, %v3067
        %v3069 = vand.u32 %v3068, 4294901760
        %v3070 = vsub.f32 %v3068, %v3069
        %v3071 = vand.u32 %v3070, 4294901760
        %3072 = vmatprep.subr.mxu0 %v3071
        %v3073 = vand.u32 %v500, 4294901760
        %v3074 = vsub.f32 %v500, %v3073
        %v3075 = vand.u32 %v3074, 4294901760
        %v3076 = vsub.f32 %v3074, %v3075
        %v3077 = vand.u32 %v3076, 4294901760
        %3078 = vmatpush1.msra.mxu0 %v3077
        %v3079 = vand.u32 %v503, 4294901760
        %v3080 = vsub.f32 %v503, %v3079
        %v3081 = vand.u32 %v3080, 4294901760
        %v3082 = vsub.f32 %v3080, %v3081
        %v3083 = vand.u32 %v3082, 4294901760
        %3084 = vmatprep.subr.mxu0 %v3083
        %v3085 = vand.u32 %v502, 4294901760
        %v3086 = vsub.f32 %v502, %v3085
        %v3087 = vand.u32 %v3086, 4294901760
        %v3088 = vsub.f32 %v3086, %v3087
        %v3089 = vand.u32 %v3088, 4294901760
        %3090 = vmatpush1.msra.mxu0 %v3089
        %v3091 = vand.u32 %v505, 4294901760
        %v3092 = vsub.f32 %v505, %v3091
        %v3093 = vand.u32 %v3092, 4294901760
        %v3094 = vsub.f32 %v3092, %v3093
        %v3095 = vand.u32 %v3094, 4294901760
        %3096 = vmatprep.subr.mxu0 %v3095
        %v3097 = vand.u32 %v504, 4294901760
        %v3098 = vsub.f32 %v504, %v3097
        %v3099 = vand.u32 %v3098, 4294901760
        %v3100 = vsub.f32 %v3098, %v3099
        %v3101 = vand.u32 %v3100, 4294901760
        %3102 = vmatpush1.msra.mxu0 %v3101
        %v3103 = vand.u32 %v507, 4294901760
        %v3104 = vsub.f32 %v507, %v3103
        %v3105 = vand.u32 %v3104, 4294901760
        %v3106 = vsub.f32 %v3104, %v3105
        %v3107 = vand.u32 %v3106, 4294901760
        %3108 = vmatprep.subr.mxu0 %v3107
        %v3109 = vand.u32 %v506, 4294901760
        %v3110 = vsub.f32 %v506, %v3109
        %v3111 = vand.u32 %v3110, 4294901760
        %v3112 = vsub.f32 %v3110, %v3111
        %v3113 = vand.u32 %v3112, 4294901760
        %3114 = vmatpush1.msra.mxu0 %v3113
        %v3115 = vand.u32 %v509, 4294901760
        %v3116 = vsub.f32 %v509, %v3115
        %v3117 = vand.u32 %v3116, 4294901760
        %v3118 = vsub.f32 %v3116, %v3117
        %v3119 = vand.u32 %v3118, 4294901760
        %3120 = vmatprep.subr.mxu0 %v3119
        %v3121 = vand.u32 %v508, 4294901760
        %v3122 = vsub.f32 %v508, %v3121
        %v3123 = vand.u32 %v3122, 4294901760
        %v3124 = vsub.f32 %v3122, %v3123
        %v3125 = vand.u32 %v3124, 4294901760
        %3126 = vmatpush1.msra.mxu0 %v3125
        %v3127 = vand.u32 %v511, 4294901760
        %v3128 = vsub.f32 %v511, %v3127
        %v3129 = vand.u32 %v3128, 4294901760
        %v3130 = vsub.f32 %v3128, %v3129
        %v3131 = vand.u32 %v3130, 4294901760
        %3132 = vmatprep.subr.mxu0 %v3131
        %v3133 = vand.u32 %v510, 4294901760
        %v3134 = vsub.f32 %v510, %v3133
        %v3135 = vand.u32 %v3134, 4294901760
        %v3136 = vsub.f32 %v3134, %v3135
        %v3137 = vand.u32 %v3136, 4294901760
        %3138 = vmatpush1.msra.mxu0 %v3137
        %v3139 = vand.u32 %v513, 4294901760
        %v3140 = vsub.f32 %v513, %v3139
        %v3141 = vand.u32 %v3140, 4294901760
        %v3142 = vsub.f32 %v3140, %v3141
        %v3143 = vand.u32 %v3142, 4294901760
        %3144 = vmatprep.subr.mxu0 %v3143
        %v3145 = vand.u32 %v512, 4294901760
        %v3146 = vsub.f32 %v512, %v3145
        %v3147 = vand.u32 %v3146, 4294901760
        %v3148 = vsub.f32 %v3146, %v3147
        %v3149 = vand.u32 %v3148, 4294901760
        %3150 = vmatpush1.msra.mxu0 %v3149
        %v3151 = vand.u32 %v515, 4294901760
        %v3152 = vsub.f32 %v515, %v3151
        %v3153 = vand.u32 %v3152, 4294901760
        %v3154 = vsub.f32 %v3152, %v3153
        %v3155 = vand.u32 %v3154, 4294901760
        %3156 = vmatprep.subr.mxu0 %v3155
        %v3157 = vand.u32 %v514, 4294901760
        %v3158 = vsub.f32 %v514, %v3157
        %v3159 = vand.u32 %v3158, 4294901760
        %v3160 = vsub.f32 %v3158, %v3159
        %v3161 = vand.u32 %v3160, 4294901760
        %3162 = vmatpush1.msra.mxu0 %v3161
        %v3163 = vand.u32 %v517, 4294901760
        %v3164 = vsub.f32 %v517, %v3163
        %v3165 = vand.u32 %v3164, 4294901760
        %v3166 = vsub.f32 %v3164, %v3165
        %v3167 = vand.u32 %v3166, 4294901760
        %3168 = vmatprep.subr.mxu0 %v3167
        %v3169 = vand.u32 %v516, 4294901760
        %v3170 = vsub.f32 %v516, %v3169
        %v3171 = vand.u32 %v3170, 4294901760
        %v3172 = vsub.f32 %v3170, %v3171
        %v3173 = vand.u32 %v3172, 4294901760
        %3174 = vmatpush1.msra.mxu0 %v3173
        %v3175 = vand.u32 %v327, 4294901760
        %3176 = vmatprep.mubr.f32.mxu0 %v3175
        %v3177 = vand.u32 %v326, 4294901760
        %3178 = vmatmul.mubr.f32.gmra.mrb[0].mxu0 %v3177
        %v3179 = vpop.f32.mrb[0].mxu0
        %v3180 = vadd.f32 %v2627, %v3179
        %v3181 = vpop.f32.mrb[0].mxu0
        %v3182 = vadd.f32 %v2629, %v3181
        %v3183 = vand.u32 %v333, 4294901760
        %3184 = vmatprep.mubr.f32.mxu0 %v3183
        %v3185 = vand.u32 %v332, 4294901760
        %3186 = vmatmul.mubr.f32.gmra.mrb[0].mxu0 %v3185
        %v3187 = vpop.f32.mrb[0].mxu0
        %v3188 = vadd.f32 %v2643, %v3187
        %v3189 = vpop.f32.mrb[0].mxu0
        %v3190 = vadd.f32 %v2645, %v3189
        %v3191 = vand.u32 %v339, 4294901760
        %3192 = vmatprep.mubr.f32.mxu0 %v3191
        %v3193 = vand.u32 %v338, 4294901760
        %3194 = vmatmul.mubr.f32.gmra.mrb[0].mxu0 %v3193
        %v3195 = vpop.f32.mrb[0].mxu0
        %v3196 = vadd.f32 %v2659, %v3195
        %v3197 = vpop.f32.mrb[0].mxu0
        %v3198 = vadd.f32 %v2661, %v3197
        %v3199 = vand.u32 %v345, 4294901760
        %3200 = vmatprep.mubr.f32.mxu0 %v3199
        %v3201 = vand.u32 %v344, 4294901760
        %3202 = vmatmul.mubr.f32.gmra.mrb[0].mxu0 %v3201
        %v3203 = vpop.f32.mrb[0].mxu0
        %v3204 = vadd.f32 %v2675, %v3203
        %v3205 = vpop.f32.mrb[0].mxu0
        %v3206 = vadd.f32 %v2677, %v3205
        %v3207 = vand.u32 %v351, 4294901760
        %3208 = vmatprep.mubr.f32.mxu0 %v3207
        %v3209 = vand.u32 %v350, 4294901760
        %3210 = vmatmul.mubr.f32.gmra.mrb[0].mxu0 %v3209
        %v3211 = vpop.f32.mrb[0].mxu0
        %v3212 = vadd.f32 %v2691, %v3211
        %v3213 = vpop.f32.mrb[0].mxu0
        %v3214 = vadd.f32 %v2693, %v3213
        %v3215 = vand.u32 %v357, 4294901760
        %3216 = vmatprep.mubr.f32.mxu0 %v3215
        %v3217 = vand.u32 %v356, 4294901760
        %3218 = vmatmul.mubr.f32.gmra.mrb[0].mxu0 %v3217
        %v3219 = vpop.f32.mrb[0].mxu0
        %v3220 = vadd.f32 %v2707, %v3219
        %v3221 = vpop.f32.mrb[0].mxu0
        %v3222 = vadd.f32 %v2709, %v3221
        %v3223 = vand.u32 %v363, 4294901760
        %3224 = vmatprep.mubr.f32.mxu0 %v3223
        %v3225 = vand.u32 %v362, 4294901760
        %3226 = vmatmul.mubr.f32.gmra.mrb[0].mxu0 %v3225
        %v3227 = vpop.f32.mrb[0].mxu0
        %v3228 = vadd.f32 %v2723, %v3227
        %v3229 = vpop.f32.mrb[0].mxu0
        %v3230 = vadd.f32 %v2725, %v3229
        %v3231 = vand.u32 %v369, 4294901760
        %3232 = vmatprep.mubr.f32.mxu0 %v3231
        %v3233 = vand.u32 %v368, 4294901760
        %3234 = vmatmul.mubr.f32.gmra.mrb[0].mxu0 %v3233
        %v3235 = vpop.f32.mrb[0].mxu0
        %v3236 = vadd.f32 %v2739, %v3235
        %v3237 = vpop.f32.mrb[0].mxu0
        %v3238 = vadd.f32 %v2741, %v3237
        %v3239 = vand.u32 %v375, 4294901760
        %3240 = vmatprep.mubr.f32.mxu0 %v3239
        %v3241 = vand.u32 %v374, 4294901760
        %3242 = vmatmul.mubr.f32.gmra.mrb[0].mxu0 %v3241
        %v3243 = vpop.f32.mrb[0].mxu0
        %v3244 = vadd.f32 %v2755, %v3243
        %v3245 = vpop.f32.mrb[0].mxu0
        %v3246 = vadd.f32 %v2757, %v3245
        %v3247 = vand.u32 %v381, 4294901760
        %3248 = vmatprep.mubr.f32.mxu0 %v3247
        %v3249 = vand.u32 %v380, 4294901760
        %3250 = vmatmul.mubr.f32.gmra.mrb[0].mxu0 %v3249
        %v3251 = vpop.f32.mrb[0].mxu0
        %v3252 = vadd.f32 %v2771, %v3251
        %v3253 = vpop.f32.mrb[0].mxu0
        %v3254 = vadd.f32 %v2773, %v3253
        %v3255 = vand.u32 %v387, 4294901760
        %3256 = vmatprep.mubr.f32.mxu0 %v3255
        %v3257 = vand.u32 %v386, 4294901760
        %3258 = vmatmul.mubr.f32.gmra.mrb[0].mxu0 %v3257
        %v3259 = vpop.f32.mrb[0].mxu0
        %v3260 = vadd.f32 %v2787, %v3259
        %v3261 = vpop.f32.mrb[0].mxu0
        %v3262 = vadd.f32 %v2789, %v3261
        %3263 = vdwg.mxu0
        %v3264 = vand.u32 %v455, 4294901760
        %v3265 = vsub.f32 %v455, %v3264
        %3266 = vmatprep.subr.mxu0 %v3265
        %v3267 = vand.u32 %v454, 4294901760
        %v3268 = vsub.f32 %v454, %v3267
        %3269 = vmatpush1.msra.mxu0 %v3268
        %v3270 = vand.u32 %v457, 4294901760
        %v3271 = vsub.f32 %v457, %v3270
        %3272 = vmatprep.subr.mxu0 %v3271
        %v3273 = vand.u32 %v456, 4294901760
        %v3274 = vsub.f32 %v456, %v3273
        %3275 = vmatpush1.msra.mxu0 %v3274
        %v3276 = vand.u32 %v459, 4294901760
        %v3277 = vsub.f32 %v459, %v3276
        %3278 = vmatprep.subr.mxu0 %v3277
        %v3279 = vand.u32 %v458, 4294901760
        %v3280 = vsub.f32 %v458, %v3279
        %3281 = vmatpush1.msra.mxu0 %v3280
        %v3282 = vand.u32 %v461, 4294901760
        %v3283 = vsub.f32 %v461, %v3282
        %3284 = vmatprep.subr.mxu0 %v3283
        %v3285 = vand.u32 %v460, 4294901760
        %v3286 = vsub.f32 %v460, %v3285
        %3287 = vmatpush1.msra.mxu0 %v3286
        %v3288 = vand.u32 %v463, 4294901760
        %v3289 = vsub.f32 %v463, %v3288
        %3290 = vmatprep.subr.mxu0 %v3289
        %v3291 = vand.u32 %v462, 4294901760
        %v3292 = vsub.f32 %v462, %v3291
        %3293 = vmatpush1.msra.mxu0 %v3292
        %v3294 = vand.u32 %v465, 4294901760
        %v3295 = vsub.f32 %v465, %v3294
        %3296 = vmatprep.subr.mxu0 %v3295
        %v3297 = vand.u32 %v464, 4294901760
        %v3298 = vsub.f32 %v464, %v3297
        %3299 = vmatpush1.msra.mxu0 %v3298
        %v3300 = vand.u32 %v467, 4294901760
        %v3301 = vsub.f32 %v467, %v3300
        %3302 = vmatprep.subr.mxu0 %v3301
        %v3303 = vand.u32 %v466, 4294901760
        %v3304 = vsub.f32 %v466, %v3303
        %3305 = vmatpush1.msra.mxu0 %v3304
        %v3306 = vand.u32 %v469, 4294901760
        %v3307 = vsub.f32 %v469, %v3306
        %3308 = vmatprep.subr.mxu0 %v3307
        %v3309 = vand.u32 %v468, 4294901760
        %v3310 = vsub.f32 %v468, %v3309
        %3311 = vmatpush1.msra.mxu0 %v3310
        %v3312 = vand.u32 %v471, 4294901760
        %v3313 = vsub.f32 %v471, %v3312
        %3314 = vmatprep.subr.mxu0 %v3313
        %v3315 = vand.u32 %v470, 4294901760
        %v3316 = vsub.f32 %v470, %v3315
        %3317 = vmatpush1.msra.mxu0 %v3316
        %v3318 = vand.u32 %v473, 4294901760
        %v3319 = vsub.f32 %v473, %v3318
        %3320 = vmatprep.subr.mxu0 %v3319
        %v3321 = vand.u32 %v472, 4294901760
        %v3322 = vsub.f32 %v472, %v3321
        %3323 = vmatpush1.msra.mxu0 %v3322
        %v3324 = vand.u32 %v475, 4294901760
        %v3325 = vsub.f32 %v475, %v3324
        %3326 = vmatprep.subr.mxu0 %v3325
        %v3327 = vand.u32 %v474, 4294901760
        %v3328 = vsub.f32 %v474, %v3327
        %3329 = vmatpush1.msra.mxu0 %v3328
        %v3330 = vand.u32 %v477, 4294901760
        %v3331 = vsub.f32 %v477, %v3330
        %3332 = vmatprep.subr.mxu0 %v3331
        %v3333 = vand.u32 %v476, 4294901760
        %v3334 = vsub.f32 %v476, %v3333
        %3335 = vmatpush1.msra.mxu0 %v3334
        %v3336 = vand.u32 %v479, 4294901760
        %v3337 = vsub.f32 %v479, %v3336
        %3338 = vmatprep.subr.mxu0 %v3337
        %v3339 = vand.u32 %v478, 4294901760
        %v3340 = vsub.f32 %v478, %v3339
        %3341 = vmatpush1.msra.mxu0 %v3340
        %v3342 = vand.u32 %v481, 4294901760
        %v3343 = vsub.f32 %v481, %v3342
        %3344 = vmatprep.subr.mxu0 %v3343
        %v3345 = vand.u32 %v480, 4294901760
        %v3346 = vsub.f32 %v480, %v3345
        %3347 = vmatpush1.msra.mxu0 %v3346
        %v3348 = vand.u32 %v483, 4294901760
        %v3349 = vsub.f32 %v483, %v3348
        %3350 = vmatprep.subr.mxu0 %v3349
        %v3351 = vand.u32 %v482, 4294901760
        %v3352 = vsub.f32 %v482, %v3351
        %3353 = vmatpush1.msra.mxu0 %v3352
        %v3354 = vand.u32 %v485, 4294901760
        %v3355 = vsub.f32 %v485, %v3354
        %3356 = vmatprep.subr.mxu0 %v3355
        %v3357 = vand.u32 %v484, 4294901760
        %v3358 = vsub.f32 %v484, %v3357
        %3359 = vmatpush1.msra.mxu0 %v3358
        %v3360 = vand.u32 %v487, 4294901760
        %v3361 = vsub.f32 %v487, %v3360
        %3362 = vmatprep.subr.mxu0 %v3361
        %v3363 = vand.u32 %v486, 4294901760
        %v3364 = vsub.f32 %v486, %v3363
        %3365 = vmatpush1.msra.mxu0 %v3364
        %v3366 = vand.u32 %v489, 4294901760
        %v3367 = vsub.f32 %v489, %v3366
        %3368 = vmatprep.subr.mxu0 %v3367
        %v3369 = vand.u32 %v488, 4294901760
        %v3370 = vsub.f32 %v488, %v3369
        %3371 = vmatpush1.msra.mxu0 %v3370
        %v3372 = vand.u32 %v491, 4294901760
        %v3373 = vsub.f32 %v491, %v3372
        %3374 = vmatprep.subr.mxu0 %v3373
        %v3375 = vand.u32 %v490, 4294901760
        %v3376 = vsub.f32 %v490, %v3375
        %3377 = vmatpush1.msra.mxu0 %v3376
        %v3378 = vand.u32 %v493, 4294901760
        %v3379 = vsub.f32 %v493, %v3378
        %3380 = vmatprep.subr.mxu0 %v3379
        %v3381 = vand.u32 %v492, 4294901760
        %v3382 = vsub.f32 %v492, %v3381
        %3383 = vmatpush1.msra.mxu0 %v3382
        %v3384 = vand.u32 %v495, 4294901760
        %v3385 = vsub.f32 %v495, %v3384
        %3386 = vmatprep.subr.mxu0 %v3385
        %v3387 = vand.u32 %v494, 4294901760
        %v3388 = vsub.f32 %v494, %v3387
        %3389 = vmatpush1.msra.mxu0 %v3388
        %v3390 = vand.u32 %v497, 4294901760
        %v3391 = vsub.f32 %v497, %v3390
        %3392 = vmatprep.subr.mxu0 %v3391
        %v3393 = vand.u32 %v496, 4294901760
        %v3394 = vsub.f32 %v496, %v3393
        %3395 = vmatpush1.msra.mxu0 %v3394
        %v3396 = vand.u32 %v499, 4294901760
        %v3397 = vsub.f32 %v499, %v3396
        %3398 = vmatprep.subr.mxu0 %v3397
        %v3399 = vand.u32 %v498, 4294901760
        %v3400 = vsub.f32 %v498, %v3399
        %3401 = vmatpush1.msra.mxu0 %v3400
        %v3402 = vand.u32 %v501, 4294901760
        %v3403 = vsub.f32 %v501, %v3402
        %3404 = vmatprep.subr.mxu0 %v3403
        %v3405 = vand.u32 %v500, 4294901760
        %v3406 = vsub.f32 %v500, %v3405
        %3407 = vmatpush1.msra.mxu0 %v3406
        %v3408 = vand.u32 %v503, 4294901760
        %v3409 = vsub.f32 %v503, %v3408
        %3410 = vmatprep.subr.mxu0 %v3409
        %v3411 = vand.u32 %v502, 4294901760
        %v3412 = vsub.f32 %v502, %v3411
        %3413 = vmatpush1.msra.mxu0 %v3412
        %v3414 = vand.u32 %v505, 4294901760
        %v3415 = vsub.f32 %v505, %v3414
        %3416 = vmatprep.subr.mxu0 %v3415
        %v3417 = vand.u32 %v504, 4294901760
        %v3418 = vsub.f32 %v504, %v3417
        %3419 = vmatpush1.msra.mxu0 %v3418
        %v3420 = vand.u32 %v507, 4294901760
        %v3421 = vsub.f32 %v507, %v3420
        %3422 = vmatprep.subr.mxu0 %v3421
        %v3423 = vand.u32 %v506, 4294901760
        %v3424 = vsub.f32 %v506, %v3423
        %3425 = vmatpush1.msra.mxu0 %v3424
        %v3426 = vand.u32 %v509, 4294901760
        %v3427 = vsub.f32 %v509, %v3426
        %3428 = vmatprep.subr.mxu0 %v3427
        %v3429 = vand.u32 %v508, 4294901760
        %v3430 = vsub.f32 %v508, %v3429
        %3431 = vmatpush1.msra.mxu0 %v3430
        %v3432 = vand.u32 %v511, 4294901760
        %v3433 = vsub.f32 %v511, %v3432
        %3434 = vmatprep.subr.mxu0 %v3433
        %v3435 = vand.u32 %v510, 4294901760
        %v3436 = vsub.f32 %v510, %v3435
        %3437 = vmatpush1.msra.mxu0 %v3436
        %v3438 = vand.u32 %v513, 4294901760
        %v3439 = vsub.f32 %v513, %v3438
        %3440 = vmatprep.subr.mxu0 %v3439
        %v3441 = vand.u32 %v512, 4294901760
        %v3442 = vsub.f32 %v512, %v3441
        %3443 = vmatpush1.msra.mxu0 %v3442
        %v3444 = vand.u32 %v515, 4294901760
        %v3445 = vsub.f32 %v515, %v3444
        %3446 = vmatprep.subr.mxu0 %v3445
        %v3447 = vand.u32 %v514, 4294901760
        %v3448 = vsub.f32 %v514, %v3447
        %3449 = vmatpush1.msra.mxu0 %v3448
        %v3450 = vand.u32 %v517, 4294901760
        %v3451 = vsub.f32 %v517, %v3450
        %3452 = vmatprep.subr.mxu0 %v3451
        %v3453 = vand.u32 %v516, 4294901760
        %v3454 = vsub.f32 %v516, %v3453
        %3455 = vmatpush1.msra.mxu0 %v3454
        %v3456 = vand.u32 %v327, 4294901760
        %v3457 = vsub.f32 %v327, %v3456
        %3458 = vmatprep.mubr.f32.mxu0 %v3457
        %v3459 = vand.u32 %v326, 4294901760
        %v3460 = vsub.f32 %v326, %v3459
        %3461 = vmatmul.mubr.f32.gmra.mrb[0].mxu0 %v3460
        %v3462 = vpop.f32.mrb[0].mxu0
        %v3463 = vadd.f32 %v3180, %v3462
        %v3464 = vpop.f32.mrb[0].mxu0
        %v3465 = vadd.f32 %v3182, %v3464
        %v3466 = vand.u32 %v333, 4294901760
        %v3467 = vsub.f32 %v333, %v3466
        %3468 = vmatprep.mubr.f32.mxu0 %v3467
        %v3469 = vand.u32 %v332, 4294901760
        %v3470 = vsub.f32 %v332, %v3469
        %3471 = vmatmul.mubr.f32.gmra.mrb[0].mxu0 %v3470
        %v3472 = vpop.f32.mrb[0].mxu0
        %v3473 = vadd.f32 %v3188, %v3472
        %v3474 = vpop.f32.mrb[0].mxu0
        %v3475 = vadd.f32 %v3190, %v3474
        %v3476 = vand.u32 %v339, 4294901760
        %v3477 = vsub.f32 %v339, %v3476
        %3478 = vmatprep.mubr.f32.mxu0 %v3477
        %v3479 = vand.u32 %v338, 4294901760
        %v3480 = vsub.f32 %v338, %v3479
        %3481 = vmatmul.mubr.f32.gmra.mrb[0].mxu0 %v3480
        %v3482 = vpop.f32.mrb[0].mxu0
        %v3483 = vadd.f32 %v3196, %v3482
        %v3484 = vpop.f32.mrb[0].mxu0
        %v3485 = vadd.f32 %v3198, %v3484
        %v3486 = vand.u32 %v345, 4294901760
        %v3487 = vsub.f32 %v345, %v3486
        %3488 = vmatprep.mubr.f32.mxu0 %v3487
        %v3489 = vand.u32 %v344, 4294901760
        %v3490 = vsub.f32 %v344, %v3489
        %3491 = vmatmul.mubr.f32.gmra.mrb[0].mxu0 %v3490
        %v3492 = vpop.f32.mrb[0].mxu0
        %v3493 = vadd.f32 %v3204, %v3492
        %v3494 = vpop.f32.mrb[0].mxu0
        %v3495 = vadd.f32 %v3206, %v3494
        %v3496 = vand.u32 %v351, 4294901760
        %v3497 = vsub.f32 %v351, %v3496
        %3498 = vmatprep.mubr.f32.mxu0 %v3497
        %v3499 = vand.u32 %v350, 4294901760
        %v3500 = vsub.f32 %v350, %v3499
        %3501 = vmatmul.mubr.f32.gmra.mrb[0].mxu0 %v3500
        %v3502 = vpop.f32.mrb[0].mxu0
        %v3503 = vadd.f32 %v3212, %v3502
        %v3504 = vpop.f32.mrb[0].mxu0
        %v3505 = vadd.f32 %v3214, %v3504
        %v3506 = vand.u32 %v357, 4294901760
        %v3507 = vsub.f32 %v357, %v3506
        %3508 = vmatprep.mubr.f32.mxu0 %v3507
        %v3509 = vand.u32 %v356, 4294901760
        %v3510 = vsub.f32 %v356, %v3509
        %3511 = vmatmul.mubr.f32.gmra.mrb[0].mxu0 %v3510
        %v3512 = vpop.f32.mrb[0].mxu0
        %v3513 = vadd.f32 %v3220, %v3512
        %v3514 = vpop.f32.mrb[0].mxu0
        %v3515 = vadd.f32 %v3222, %v3514
        %v3516 = vand.u32 %v363, 4294901760
        %v3517 = vsub.f32 %v363, %v3516
        %3518 = vmatprep.mubr.f32.mxu0 %v3517
        %v3519 = vand.u32 %v362, 4294901760
        %v3520 = vsub.f32 %v362, %v3519
        %3521 = vmatmul.mubr.f32.gmra.mrb[0].mxu0 %v3520
        %v3522 = vpop.f32.mrb[0].mxu0
        %v3523 = vadd.f32 %v3228, %v3522
        %v3524 = vpop.f32.mrb[0].mxu0
        %v3525 = vadd.f32 %v3230, %v3524
        %v3526 = vand.u32 %v369, 4294901760
        %v3527 = vsub.f32 %v369, %v3526
        %3528 = vmatprep.mubr.f32.mxu0 %v3527
        %v3529 = vand.u32 %v368, 4294901760
        %v3530 = vsub.f32 %v368, %v3529
        %3531 = vmatmul.mubr.f32.gmra.mrb[0].mxu0 %v3530
        %v3532 = vpop.f32.mrb[0].mxu0
        %v3533 = vadd.f32 %v3236, %v3532
        %v3534 = vpop.f32.mrb[0].mxu0
        %v3535 = vadd.f32 %v3238, %v3534
        %v3536 = vand.u32 %v375, 4294901760
        %v3537 = vsub.f32 %v375, %v3536
        %3538 = vmatprep.mubr.f32.mxu0 %v3537
        %v3539 = vand.u32 %v374, 4294901760
        %v3540 = vsub.f32 %v374, %v3539
        %3541 = vmatmul.mubr.f32.gmra.mrb[0].mxu0 %v3540
        %v3542 = vpop.f32.mrb[0].mxu0
        %v3543 = vadd.f32 %v3244, %v3542
        %v3544 = vpop.f32.mrb[0].mxu0
        %v3545 = vadd.f32 %v3246, %v3544
        %v3546 = vand.u32 %v381, 4294901760
        %v3547 = vsub.f32 %v381, %v3546
        %3548 = vmatprep.mubr.f32.mxu0 %v3547
        %v3549 = vand.u32 %v380, 4294901760
        %v3550 = vsub.f32 %v380, %v3549
        %3551 = vmatmul.mubr.f32.gmra.mrb[0].mxu0 %v3550
        %v3552 = vpop.f32.mrb[0].mxu0
        %v3553 = vadd.f32 %v3252, %v3552
        %v3554 = vpop.f32.mrb[0].mxu0
        %v3555 = vadd.f32 %v3254, %v3554
        %v3556 = vand.u32 %v387, 4294901760
        %v3557 = vsub.f32 %v387, %v3556
        %3558 = vmatprep.mubr.f32.mxu0 %v3557
        %v3559 = vand.u32 %v386, 4294901760
        %v3560 = vsub.f32 %v386, %v3559
        %3561 = vmatmul.mubr.f32.gmra.mrb[0].mxu0 %v3560
        %v3562 = vpop.f32.mrb[0].mxu0
        %v3563 = vadd.f32 %v3260, %v3562
        %v3564 = vpop.f32.mrb[0].mxu0
        %v3565 = vadd.f32 %v3262, %v3564
        %3566 = vdwg.mxu0
        %v3567 = vand.u32 %v455, 4294901760
        %3568 = vmatprep.subr.mxu0 %v3567
        %v3569 = vand.u32 %v454, 4294901760
        %3570 = vmatpush1.msra.mxu0 %v3569
        %v3571 = vand.u32 %v457, 4294901760
        %3572 = vmatprep.subr.mxu0 %v3571
        %v3573 = vand.u32 %v456, 4294901760
        %3574 = vmatpush1.msra.mxu0 %v3573
        %v3575 = vand.u32 %v459, 4294901760
        %3576 = vmatprep.subr.mxu0 %v3575
        %v3577 = vand.u32 %v458, 4294901760
        %3578 = vmatpush1.msra.mxu0 %v3577
        %v3579 = vand.u32 %v461, 4294901760
        %3580 = vmatprep.subr.mxu0 %v3579
        %v3581 = vand.u32 %v460, 4294901760
        %3582 = vmatpush1.msra.mxu0 %v3581
        %v3583 = vand.u32 %v463, 4294901760
        %3584 = vmatprep.subr.mxu0 %v3583
        %v3585 = vand.u32 %v462, 4294901760
        %3586 = vmatpush1.msra.mxu0 %v3585
        %v3587 = vand.u32 %v465, 4294901760
        %3588 = vmatprep.subr.mxu0 %v3587
        %v3589 = vand.u32 %v464, 4294901760
        %3590 = vmatpush1.msra.mxu0 %v3589
        %v3591 = vand.u32 %v467, 4294901760
        %3592 = vmatprep.subr.mxu0 %v3591
        %v3593 = vand.u32 %v466, 4294901760
        %3594 = vmatpush1.msra.mxu0 %v3593
        %v3595 = vand.u32 %v469, 4294901760
        %3596 = vmatprep.subr.mxu0 %v3595
        %v3597 = vand.u32 %v468, 4294901760
        %3598 = vmatpush1.msra.mxu0 %v3597
        %v3599 = vand.u32 %v471, 4294901760
        %3600 = vmatprep.subr.mxu0 %v3599
        %v3601 = vand.u32 %v470, 4294901760
        %3602 = vmatpush1.msra.mxu0 %v3601
        %v3603 = vand.u32 %v473, 4294901760
        %3604 = vmatprep.subr.mxu0 %v3603
        %v3605 = vand.u32 %v472, 4294901760
        %3606 = vmatpush1.msra.mxu0 %v3605
        %v3607 = vand.u32 %v475, 4294901760
        %3608 = vmatprep.subr.mxu0 %v3607
        %v3609 = vand.u32 %v474, 4294901760
        %3610 = vmatpush1.msra.mxu0 %v3609
        %v3611 = vand.u32 %v477, 4294901760
        %3612 = vmatprep.subr.mxu0 %v3611
        %v3613 = vand.u32 %v476, 4294901760
        %3614 = vmatpush1.msra.mxu0 %v3613
        %v3615 = vand.u32 %v479, 4294901760
        %3616 = vmatprep.subr.mxu0 %v3615
        %v3617 = vand.u32 %v478, 4294901760
        %3618 = vmatpush1.msra.mxu0 %v3617
        %v3619 = vand.u32 %v481, 4294901760
        %3620 = vmatprep.subr.mxu0 %v3619
        %v3621 = vand.u32 %v480, 4294901760
        %3622 = vmatpush1.msra.mxu0 %v3621
        %v3623 = vand.u32 %v483, 4294901760
        %3624 = vmatprep.subr.mxu0 %v3623
        %v3625 = vand.u32 %v482, 4294901760
        %3626 = vmatpush1.msra.mxu0 %v3625
        %v3627 = vand.u32 %v485, 4294901760
        %3628 = vmatprep.subr.mxu0 %v3627
        %v3629 = vand.u32 %v484, 4294901760
        %3630 = vmatpush1.msra.mxu0 %v3629
        %v3631 = vand.u32 %v487, 4294901760
        %3632 = vmatprep.subr.mxu0 %v3631
        %v3633 = vand.u32 %v486, 4294901760
        %3634 = vmatpush1.msra.mxu0 %v3633
        %v3635 = vand.u32 %v489, 4294901760
        %3636 = vmatprep.subr.mxu0 %v3635
        %v3637 = vand.u32 %v488, 4294901760
        %3638 = vmatpush1.msra.mxu0 %v3637
        %v3639 = vand.u32 %v491, 4294901760
        %3640 = vmatprep.subr.mxu0 %v3639
        %v3641 = vand.u32 %v490, 4294901760
        %3642 = vmatpush1.msra.mxu0 %v3641
        %v3643 = vand.u32 %v493, 4294901760
        %3644 = vmatprep.subr.mxu0 %v3643
        %v3645 = vand.u32 %v492, 4294901760
        %3646 = vmatpush1.msra.mxu0 %v3645
        %v3647 = vand.u32 %v495, 4294901760
        %3648 = vmatprep.subr.mxu0 %v3647
        %v3649 = vand.u32 %v494, 4294901760
        %3650 = vmatpush1.msra.mxu0 %v3649
        %v3651 = vand.u32 %v497, 4294901760
        %3652 = vmatprep.subr.mxu0 %v3651
        %v3653 = vand.u32 %v496, 4294901760
        %3654 = vmatpush1.msra.mxu0 %v3653
        %v3655 = vand.u32 %v499, 4294901760
        %3656 = vmatprep.subr.mxu0 %v3655
        %v3657 = vand.u32 %v498, 4294901760
        %3658 = vmatpush1.msra.mxu0 %v3657
        %v3659 = vand.u32 %v501, 4294901760
        %3660 = vmatprep.subr.mxu0 %v3659
        %v3661 = vand.u32 %v500, 4294901760
        %3662 = vmatpush1.msra.mxu0 %v3661
        %v3663 = vand.u32 %v503, 4294901760
        %3664 = vmatprep.subr.mxu0 %v3663
        %v3665 = vand.u32 %v502, 4294901760
        %3666 = vmatpush1.msra.mxu0 %v3665
        %v3667 = vand.u32 %v505, 4294901760
        %3668 = vmatprep.subr.mxu0 %v3667
        %v3669 = vand.u32 %v504, 4294901760
        %3670 = vmatpush1.msra.mxu0 %v3669
        %v3671 = vand.u32 %v507, 4294901760
        %3672 = vmatprep.subr.mxu0 %v3671
        %v3673 = vand.u32 %v506, 4294901760
        %3674 = vmatpush1.msra.mxu0 %v3673
        %v3675 = vand.u32 %v509, 4294901760
        %3676 = vmatprep.subr.mxu0 %v3675
        %v3677 = vand.u32 %v508, 4294901760
        %3678 = vmatpush1.msra.mxu0 %v3677
        %v3679 = vand.u32 %v511, 4294901760
        %3680 = vmatprep.subr.mxu0 %v3679
        %v3681 = vand.u32 %v510, 4294901760
        %3682 = vmatpush1.msra.mxu0 %v3681
        %v3683 = vand.u32 %v513, 4294901760
        %3684 = vmatprep.subr.mxu0 %v3683
        %v3685 = vand.u32 %v512, 4294901760
        %3686 = vmatpush1.msra.mxu0 %v3685
        %v3687 = vand.u32 %v515, 4294901760
        %3688 = vmatprep.subr.mxu0 %v3687
        %v3689 = vand.u32 %v514, 4294901760
        %3690 = vmatpush1.msra.mxu0 %v3689
        %v3691 = vand.u32 %v517, 4294901760
        %3692 = vmatprep.subr.mxu0 %v3691
        %v3693 = vand.u32 %v516, 4294901760
        %3694 = vmatpush1.msra.mxu0 %v3693
        %v3695 = vand.u32 %v327, 4294901760
        %v3696 = vsub.f32 %v327, %v3695
        %v3697 = vand.u32 %v3696, 4294901760
        %3698 = vmatprep.mubr.f32.mxu0 %v3697
        %v3699 = vand.u32 %v326, 4294901760
        %v3700 = vsub.f32 %v326, %v3699
        %v3701 = vand.u32 %v3700, 4294901760
        %3702 = vmatmul.mubr.f32.gmra.mrb[0].mxu0 %v3701
        %v3703 = vpop.f32.mrb[0].mxu0
        %v3704 = vadd.f32 %v3463, %v3703
        %v3705 = vpop.f32.mrb[0].mxu0
        %v3706 = vadd.f32 %v3465, %v3705
        %v3707 = vand.u32 %v333, 4294901760
        %v3708 = vsub.f32 %v333, %v3707
        %v3709 = vand.u32 %v3708, 4294901760
        %3710 = vmatprep.mubr.f32.mxu0 %v3709
        %v3711 = vand.u32 %v332, 4294901760
        %v3712 = vsub.f32 %v332, %v3711
        %v3713 = vand.u32 %v3712, 4294901760
        %3714 = vmatmul.mubr.f32.gmra.mrb[0].mxu0 %v3713
        %v3715 = vpop.f32.mrb[0].mxu0
        %v3716 = vadd.f32 %v3473, %v3715
        %v3717 = vpop.f32.mrb[0].mxu0
        %v3718 = vadd.f32 %v3475, %v3717
        %v3719 = vand.u32 %v339, 4294901760
        %v3720 = vsub.f32 %v339, %v3719
        %v3721 = vand.u32 %v3720, 4294901760
        %3722 = vmatprep.mubr.f32.mxu0 %v3721
        %v3723 = vand.u32 %v338, 4294901760
        %v3724 = vsub.f32 %v338, %v3723
        %v3725 = vand.u32 %v3724, 4294901760
        %3726 = vmatmul.mubr.f32.gmra.mrb[0].mxu0 %v3725
        %v3727 = vpop.f32.mrb[0].mxu0
        %v3728 = vadd.f32 %v3483, %v3727
        %v3729 = vpop.f32.mrb[0].mxu0
        %v3730 = vadd.f32 %v3485, %v3729
        %v3731 = vand.u32 %v345, 4294901760
        %v3732 = vsub.f32 %v345, %v3731
        %v3733 = vand.u32 %v3732, 4294901760
        %3734 = vmatprep.mubr.f32.mxu0 %v3733
        %v3735 = vand.u32 %v344, 4294901760
        %v3736 = vsub.f32 %v344, %v3735
        %v3737 = vand.u32 %v3736, 4294901760
        %3738 = vmatmul.mubr.f32.gmra.mrb[0].mxu0 %v3737
        %v3739 = vpop.f32.mrb[0].mxu0
        %v3740 = vadd.f32 %v3493, %v3739
        %v3741 = vpop.f32.mrb[0].mxu0
        %v3742 = vadd.f32 %v3495, %v3741
        %v3743 = vand.u32 %v351, 4294901760
        %v3744 = vsub.f32 %v351, %v3743
        %v3745 = vand.u32 %v3744, 4294901760
        %3746 = vmatprep.mubr.f32.mxu0 %v3745
        %v3747 = vand.u32 %v350, 4294901760
        %v3748 = vsub.f32 %v350, %v3747
        %v3749 = vand.u32 %v3748, 4294901760
        %3750 = vmatmul.mubr.f32.gmra.mrb[0].mxu0 %v3749
        %v3751 = vpop.f32.mrb[0].mxu0
        %v3752 = vadd.f32 %v3503, %v3751
        %v3753 = vpop.f32.mrb[0].mxu0
        %v3754 = vadd.f32 %v3505, %v3753
        %v3755 = vand.u32 %v357, 4294901760
        %v3756 = vsub.f32 %v357, %v3755
        %v3757 = vand.u32 %v3756, 4294901760
        %3758 = vmatprep.mubr.f32.mxu0 %v3757
        %v3759 = vand.u32 %v356, 4294901760
        %v3760 = vsub.f32 %v356, %v3759
        %v3761 = vand.u32 %v3760, 4294901760
        %3762 = vmatmul.mubr.f32.gmra.mrb[0].mxu0 %v3761
        %v3763 = vpop.f32.mrb[0].mxu0
        %v3764 = vadd.f32 %v3513, %v3763
        %v3765 = vpop.f32.mrb[0].mxu0
        %v3766 = vadd.f32 %v3515, %v3765
        %v3767 = vand.u32 %v363, 4294901760
        %v3768 = vsub.f32 %v363, %v3767
        %v3769 = vand.u32 %v3768, 4294901760
        %3770 = vmatprep.mubr.f32.mxu0 %v3769
        %v3771 = vand.u32 %v362, 4294901760
        %v3772 = vsub.f32 %v362, %v3771
        %v3773 = vand.u32 %v3772, 4294901760
        %3774 = vmatmul.mubr.f32.gmra.mrb[0].mxu0 %v3773
        %v3775 = vpop.f32.mrb[0].mxu0
        %v3776 = vadd.f32 %v3523, %v3775
        %v3777 = vpop.f32.mrb[0].mxu0
        %v3778 = vadd.f32 %v3525, %v3777
        %v3779 = vand.u32 %v369, 4294901760
        %v3780 = vsub.f32 %v369, %v3779
        %v3781 = vand.u32 %v3780, 4294901760
        %3782 = vmatprep.mubr.f32.mxu0 %v3781
        %v3783 = vand.u32 %v368, 4294901760
        %v3784 = vsub.f32 %v368, %v3783
        %v3785 = vand.u32 %v3784, 4294901760
        %3786 = vmatmul.mubr.f32.gmra.mrb[0].mxu0 %v3785
        %v3787 = vpop.f32.mrb[0].mxu0
        %v3788 = vadd.f32 %v3533, %v3787
        %v3789 = vpop.f32.mrb[0].mxu0
        %v3790 = vadd.f32 %v3535, %v3789
        %v3791 = vand.u32 %v375, 4294901760
        %v3792 = vsub.f32 %v375, %v3791
        %v3793 = vand.u32 %v3792, 4294901760
        %3794 = vmatprep.mubr.f32.mxu0 %v3793
        %v3795 = vand.u32 %v374, 4294901760
        %v3796 = vsub.f32 %v374, %v3795
        %v3797 = vand.u32 %v3796, 4294901760
        %3798 = vmatmul.mubr.f32.gmra.mrb[0].mxu0 %v3797
        %v3799 = vpop.f32.mrb[0].mxu0
        %v3800 = vadd.f32 %v3543, %v3799
        %v3801 = vpop.f32.mrb[0].mxu0
        %v3802 = vadd.f32 %v3545, %v3801
        %v3803 = vand.u32 %v381, 4294901760
        %v3804 = vsub.f32 %v381, %v3803
        %v3805 = vand.u32 %v3804, 4294901760
        %3806 = vmatprep.mubr.f32.mxu0 %v3805
        %v3807 = vand.u32 %v380, 4294901760
        %v3808 = vsub.f32 %v380, %v3807
        %v3809 = vand.u32 %v3808, 4294901760
        %3810 = vmatmul.mubr.f32.gmra.mrb[0].mxu0 %v3809
        %v3811 = vpop.f32.mrb[0].mxu0
        %v3812 = vadd.f32 %v3553, %v3811
        %v3813 = vpop.f32.mrb[0].mxu0
        %v3814 = vadd.f32 %v3555, %v3813
        %v3815 = vand.u32 %v387, 4294901760
        %v3816 = vsub.f32 %v387, %v3815
        %v3817 = vand.u32 %v3816, 4294901760
        %3818 = vmatprep.mubr.f32.mxu0 %v3817
        %v3819 = vand.u32 %v386, 4294901760
        %v3820 = vsub.f32 %v386, %v3819
        %v3821 = vand.u32 %v3820, 4294901760
        %3822 = vmatmul.mubr.f32.gmra.mrb[0].mxu0 %v3821
        %v3823 = vpop.f32.mrb[0].mxu0
        %v3824 = vadd.f32 %v3563, %v3823
        %v3825 = vpop.f32.mrb[0].mxu0
        %v3826 = vadd.f32 %v3565, %v3825
        %3827 = vdwg.mxu0
        %v3828 = vand.u32 %v455, 4294901760
        %v3829 = vsub.f32 %v455, %v3828
        %v3830 = vand.u32 %v3829, 4294901760
        %3831 = vmatprep.subr.mxu0 %v3830
        %v3832 = vand.u32 %v454, 4294901760
        %v3833 = vsub.f32 %v454, %v3832
        %v3834 = vand.u32 %v3833, 4294901760
        %3835 = vmatpush1.msra.mxu0 %v3834
        %v3836 = vand.u32 %v457, 4294901760
        %v3837 = vsub.f32 %v457, %v3836
        %v3838 = vand.u32 %v3837, 4294901760
        %3839 = vmatprep.subr.mxu0 %v3838
        %v3840 = vand.u32 %v456, 4294901760
        %v3841 = vsub.f32 %v456, %v3840
        %v3842 = vand.u32 %v3841, 4294901760
        %3843 = vmatpush1.msra.mxu0 %v3842
        %v3844 = vand.u32 %v459, 4294901760
        %v3845 = vsub.f32 %v459, %v3844
        %v3846 = vand.u32 %v3845, 4294901760
        %3847 = vmatprep.subr.mxu0 %v3846
        %v3848 = vand.u32 %v458, 4294901760
        %v3849 = vsub.f32 %v458, %v3848
        %v3850 = vand.u32 %v3849, 4294901760
        %3851 = vmatpush1.msra.mxu0 %v3850
        %v3852 = vand.u32 %v461, 4294901760
        %v3853 = vsub.f32 %v461, %v3852
        %v3854 = vand.u32 %v3853, 4294901760
        %3855 = vmatprep.subr.mxu0 %v3854
        %v3856 = vand.u32 %v460, 4294901760
        %v3857 = vsub.f32 %v460, %v3856
        %v3858 = vand.u32 %v3857, 4294901760
        %3859 = vmatpush1.msra.mxu0 %v3858
        %v3860 = vand.u32 %v463, 4294901760
        %v3861 = vsub.f32 %v463, %v3860
        %v3862 = vand.u32 %v3861, 4294901760
        %3863 = vmatprep.subr.mxu0 %v3862
        %v3864 = vand.u32 %v462, 4294901760
        %v3865 = vsub.f32 %v462, %v3864
        %v3866 = vand.u32 %v3865, 4294901760
        %3867 = vmatpush1.msra.mxu0 %v3866
        %v3868 = vand.u32 %v465, 4294901760
        %v3869 = vsub.f32 %v465, %v3868
        %v3870 = vand.u32 %v3869, 4294901760
        %3871 = vmatprep.subr.mxu0 %v3870
        %v3872 = vand.u32 %v464, 4294901760
        %v3873 = vsub.f32 %v464, %v3872
        %v3874 = vand.u32 %v3873, 4294901760
        %3875 = vmatpush1.msra.mxu0 %v3874
        %v3876 = vand.u32 %v467, 4294901760
        %v3877 = vsub.f32 %v467, %v3876
        %v3878 = vand.u32 %v3877, 4294901760
        %3879 = vmatprep.subr.mxu0 %v3878
        %v3880 = vand.u32 %v466, 4294901760
        %v3881 = vsub.f32 %v466, %v3880
        %v3882 = vand.u32 %v3881, 4294901760
        %3883 = vmatpush1.msra.mxu0 %v3882
        %v3884 = vand.u32 %v469, 4294901760
        %v3885 = vsub.f32 %v469, %v3884
        %v3886 = vand.u32 %v3885, 4294901760
        %3887 = vmatprep.subr.mxu0 %v3886
        %v3888 = vand.u32 %v468, 4294901760
        %v3889 = vsub.f32 %v468, %v3888
        %v3890 = vand.u32 %v3889, 4294901760
        %3891 = vmatpush1.msra.mxu0 %v3890
        %v3892 = vand.u32 %v471, 4294901760
        %v3893 = vsub.f32 %v471, %v3892
        %v3894 = vand.u32 %v3893, 4294901760
        %3895 = vmatprep.subr.mxu0 %v3894
        %v3896 = vand.u32 %v470, 4294901760
        %v3897 = vsub.f32 %v470, %v3896
        %v3898 = vand.u32 %v3897, 4294901760
        %3899 = vmatpush1.msra.mxu0 %v3898
        %v3900 = vand.u32 %v473, 4294901760
        %v3901 = vsub.f32 %v473, %v3900
        %v3902 = vand.u32 %v3901, 4294901760
        %3903 = vmatprep.subr.mxu0 %v3902
        %v3904 = vand.u32 %v472, 4294901760
        %v3905 = vsub.f32 %v472, %v3904
        %v3906 = vand.u32 %v3905, 4294901760
        %3907 = vmatpush1.msra.mxu0 %v3906
        %v3908 = vand.u32 %v475, 4294901760
        %v3909 = vsub.f32 %v475, %v3908
        %v3910 = vand.u32 %v3909, 4294901760
        %3911 = vmatprep.subr.mxu0 %v3910
        %v3912 = vand.u32 %v474, 4294901760
        %v3913 = vsub.f32 %v474, %v3912
        %v3914 = vand.u32 %v3913, 4294901760
        %3915 = vmatpush1.msra.mxu0 %v3914
        %v3916 = vand.u32 %v477, 4294901760
        %v3917 = vsub.f32 %v477, %v3916
        %v3918 = vand.u32 %v3917, 4294901760
        %3919 = vmatprep.subr.mxu0 %v3918
        %v3920 = vand.u32 %v476, 4294901760
        %v3921 = vsub.f32 %v476, %v3920
        %v3922 = vand.u32 %v3921, 4294901760
        %3923 = vmatpush1.msra.mxu0 %v3922
        %v3924 = vand.u32 %v479, 4294901760
        %v3925 = vsub.f32 %v479, %v3924
        %v3926 = vand.u32 %v3925, 4294901760
        %3927 = vmatprep.subr.mxu0 %v3926
        %v3928 = vand.u32 %v478, 4294901760
        %v3929 = vsub.f32 %v478, %v3928
        %v3930 = vand.u32 %v3929, 4294901760
        %3931 = vmatpush1.msra.mxu0 %v3930
        %v3932 = vand.u32 %v481, 4294901760
        %v3933 = vsub.f32 %v481, %v3932
        %v3934 = vand.u32 %v3933, 4294901760
        %3935 = vmatprep.subr.mxu0 %v3934
        %v3936 = vand.u32 %v480, 4294901760
        %v3937 = vsub.f32 %v480, %v3936
        %v3938 = vand.u32 %v3937, 4294901760
        %3939 = vmatpush1.msra.mxu0 %v3938
        %v3940 = vand.u32 %v483, 4294901760
        %v3941 = vsub.f32 %v483, %v3940
        %v3942 = vand.u32 %v3941, 4294901760
        %3943 = vmatprep.subr.mxu0 %v3942
        %v3944 = vand.u32 %v482, 4294901760
        %v3945 = vsub.f32 %v482, %v3944
        %v3946 = vand.u32 %v3945, 4294901760
        %3947 = vmatpush1.msra.mxu0 %v3946
        %v3948 = vand.u32 %v485, 4294901760
        %v3949 = vsub.f32 %v485, %v3948
        %v3950 = vand.u32 %v3949, 4294901760
        %3951 = vmatprep.subr.mxu0 %v3950
        %v3952 = vand.u32 %v484, 4294901760
        %v3953 = vsub.f32 %v484, %v3952
        %v3954 = vand.u32 %v3953, 4294901760
        %3955 = vmatpush1.msra.mxu0 %v3954
        %v3956 = vand.u32 %v487, 4294901760
        %v3957 = vsub.f32 %v487, %v3956
        %v3958 = vand.u32 %v3957, 4294901760
        %3959 = vmatprep.subr.mxu0 %v3958
        %v3960 = vand.u32 %v486, 4294901760
        %v3961 = vsub.f32 %v486, %v3960
        %v3962 = vand.u32 %v3961, 4294901760
        %3963 = vmatpush1.msra.mxu0 %v3962
        %v3964 = vand.u32 %v489, 4294901760
        %v3965 = vsub.f32 %v489, %v3964
        %v3966 = vand.u32 %v3965, 4294901760
        %3967 = vmatprep.subr.mxu0 %v3966
        %v3968 = vand.u32 %v488, 4294901760
        %v3969 = vsub.f32 %v488, %v3968
        %v3970 = vand.u32 %v3969, 4294901760
        %3971 = vmatpush1.msra.mxu0 %v3970
        %v3972 = vand.u32 %v491, 4294901760
        %v3973 = vsub.f32 %v491, %v3972
        %v3974 = vand.u32 %v3973, 4294901760
        %3975 = vmatprep.subr.mxu0 %v3974
        %v3976 = vand.u32 %v490, 4294901760
        %v3977 = vsub.f32 %v490, %v3976
        %v3978 = vand.u32 %v3977, 4294901760
        %3979 = vmatpush1.msra.mxu0 %v3978
        %v3980 = vand.u32 %v493, 4294901760
        %v3981 = vsub.f32 %v493, %v3980
        %v3982 = vand.u32 %v3981, 4294901760
        %3983 = vmatprep.subr.mxu0 %v3982
        %v3984 = vand.u32 %v492, 4294901760
        %v3985 = vsub.f32 %v492, %v3984
        %v3986 = vand.u32 %v3985, 4294901760
        %3987 = vmatpush1.msra.mxu0 %v3986
        %v3988 = vand.u32 %v495, 4294901760
        %v3989 = vsub.f32 %v495, %v3988
        %v3990 = vand.u32 %v3989, 4294901760
        %3991 = vmatprep.subr.mxu0 %v3990
        %v3992 = vand.u32 %v494, 4294901760
        %v3993 = vsub.f32 %v494, %v3992
        %v3994 = vand.u32 %v3993, 4294901760
        %3995 = vmatpush1.msra.mxu0 %v3994
        %v3996 = vand.u32 %v497, 4294901760
        %v3997 = vsub.f32 %v497, %v3996
        %v3998 = vand.u32 %v3997, 4294901760
        %3999 = vmatprep.subr.mxu0 %v3998
        %v4000 = vand.u32 %v496, 4294901760
        %v4001 = vsub.f32 %v496, %v4000
        %v4002 = vand.u32 %v4001, 4294901760
        %4003 = vmatpush1.msra.mxu0 %v4002
        %v4004 = vand.u32 %v499, 4294901760
        %v4005 = vsub.f32 %v499, %v4004
        %v4006 = vand.u32 %v4005, 4294901760
        %4007 = vmatprep.subr.mxu0 %v4006
        %v4008 = vand.u32 %v498, 4294901760
        %v4009 = vsub.f32 %v498, %v4008
        %v4010 = vand.u32 %v4009, 4294901760
        %4011 = vmatpush1.msra.mxu0 %v4010
        %v4012 = vand.u32 %v501, 4294901760
        %v4013 = vsub.f32 %v501, %v4012
        %v4014 = vand.u32 %v4013, 4294901760
        %4015 = vmatprep.subr.mxu0 %v4014
        %v4016 = vand.u32 %v500, 4294901760
        %v4017 = vsub.f32 %v500, %v4016
        %v4018 = vand.u32 %v4017, 4294901760
        %4019 = vmatpush1.msra.mxu0 %v4018
        %v4020 = vand.u32 %v503, 4294901760
        %v4021 = vsub.f32 %v503, %v4020
        %v4022 = vand.u32 %v4021, 4294901760
        %4023 = vmatprep.subr.mxu0 %v4022
        %v4024 = vand.u32 %v502, 4294901760
        %v4025 = vsub.f32 %v502, %v4024
        %v4026 = vand.u32 %v4025, 4294901760
        %4027 = vmatpush1.msra.mxu0 %v4026
        %v4028 = vand.u32 %v505, 4294901760
        %v4029 = vsub.f32 %v505, %v4028
        %v4030 = vand.u32 %v4029, 4294901760
        %4031 = vmatprep.subr.mxu0 %v4030
        %v4032 = vand.u32 %v504, 4294901760
        %v4033 = vsub.f32 %v504, %v4032
        %v4034 = vand.u32 %v4033, 4294901760
        %4035 = vmatpush1.msra.mxu0 %v4034
        %v4036 = vand.u32 %v507, 4294901760
        %v4037 = vsub.f32 %v507, %v4036
        %v4038 = vand.u32 %v4037, 4294901760
        %4039 = vmatprep.subr.mxu0 %v4038
        %v4040 = vand.u32 %v506, 4294901760
        %v4041 = vsub.f32 %v506, %v4040
        %v4042 = vand.u32 %v4041, 4294901760
        %4043 = vmatpush1.msra.mxu0 %v4042
        %v4044 = vand.u32 %v509, 4294901760
        %v4045 = vsub.f32 %v509, %v4044
        %v4046 = vand.u32 %v4045, 4294901760
        %4047 = vmatprep.subr.mxu0 %v4046
        %v4048 = vand.u32 %v508, 4294901760
        %v4049 = vsub.f32 %v508, %v4048
        %v4050 = vand.u32 %v4049, 4294901760
        %4051 = vmatpush1.msra.mxu0 %v4050
        %v4052 = vand.u32 %v511, 4294901760
        %v4053 = vsub.f32 %v511, %v4052
        %v4054 = vand.u32 %v4053, 4294901760
        %4055 = vmatprep.subr.mxu0 %v4054
        %v4056 = vand.u32 %v510, 4294901760
        %v4057 = vsub.f32 %v510, %v4056
        %v4058 = vand.u32 %v4057, 4294901760
        %4059 = vmatpush1.msra.mxu0 %v4058
        %v4060 = vand.u32 %v513, 4294901760
        %v4061 = vsub.f32 %v513, %v4060
        %v4062 = vand.u32 %v4061, 4294901760
        %4063 = vmatprep.subr.mxu0 %v4062
        %v4064 = vand.u32 %v512, 4294901760
        %v4065 = vsub.f32 %v512, %v4064
        %v4066 = vand.u32 %v4065, 4294901760
        %4067 = vmatpush1.msra.mxu0 %v4066
        %v4068 = vand.u32 %v515, 4294901760
        %v4069 = vsub.f32 %v515, %v4068
        %v4070 = vand.u32 %v4069, 4294901760
        %4071 = vmatprep.subr.mxu0 %v4070
        %v4072 = vand.u32 %v514, 4294901760
        %v4073 = vsub.f32 %v514, %v4072
        %v4074 = vand.u32 %v4073, 4294901760
        %4075 = vmatpush1.msra.mxu0 %v4074
        %v4076 = vand.u32 %v517, 4294901760
        %v4077 = vsub.f32 %v517, %v4076
        %v4078 = vand.u32 %v4077, 4294901760
        %4079 = vmatprep.subr.mxu0 %v4078
        %v4080 = vand.u32 %v516, 4294901760
        %v4081 = vsub.f32 %v516, %v4080
        %v4082 = vand.u32 %v4081, 4294901760
        %4083 = vmatpush1.msra.mxu0 %v4082
        %v4084 = vand.u32 %v327, 4294901760
        %4085 = vmatprep.mubr.f32.mxu0 %v4084
        %v4086 = vand.u32 %v326, 4294901760
        %4087 = vmatmul.mubr.f32.gmra.mrb[0].mxu0 %v4086
        %v4088 = vpop.f32.mrb[0].mxu0
        %v4089 = vadd.f32 %v3704, %v4088
        %v4090 = vpop.f32.mrb[0].mxu0
        %v4091 = vadd.f32 %v3706, %v4090
        %v4092 = vand.u32 %v333, 4294901760
        %4093 = vmatprep.mubr.f32.mxu0 %v4092
        %v4094 = vand.u32 %v332, 4294901760
        %4095 = vmatmul.mubr.f32.gmra.mrb[0].mxu0 %v4094
        %v4096 = vpop.f32.mrb[0].mxu0
        %v4097 = vadd.f32 %v3716, %v4096
        %v4098 = vpop.f32.mrb[0].mxu0
        %v4099 = vadd.f32 %v3718, %v4098
        %v4100 = vand.u32 %v339, 4294901760
        %4101 = vmatprep.mubr.f32.mxu0 %v4100
        %v4102 = vand.u32 %v338, 4294901760
        %4103 = vmatmul.mubr.f32.gmra.mrb[0].mxu0 %v4102
        %v4104 = vpop.f32.mrb[0].mxu0
        %v4105 = vadd.f32 %v3728, %v4104
        %v4106 = vpop.f32.mrb[0].mxu0
        %v4107 = vadd.f32 %v3730, %v4106
        %v4108 = vand.u32 %v345, 4294901760
        %4109 = vmatprep.mubr.f32.mxu0 %v4108
        %v4110 = vand.u32 %v344, 4294901760
        %4111 = vmatmul.mubr.f32.gmra.mrb[0].mxu0 %v4110
        %v4112 = vpop.f32.mrb[0].mxu0
        %v4113 = vadd.f32 %v3740, %v4112
        %v4114 = vpop.f32.mrb[0].mxu0
        %v4115 = vadd.f32 %v3742, %v4114
        %v4116 = vand.u32 %v351, 4294901760
        %4117 = vmatprep.mubr.f32.mxu0 %v4116
        %v4118 = vand.u32 %v350, 4294901760
        %4119 = vmatmul.mubr.f32.gmra.mrb[0].mxu0 %v4118
        %v4120 = vpop.f32.mrb[0].mxu0
        %v4121 = vadd.f32 %v3752, %v4120
        %v4122 = vpop.f32.mrb[0].mxu0
        %v4123 = vadd.f32 %v3754, %v4122
        %v4124 = vand.u32 %v357, 4294901760
        %4125 = vmatprep.mubr.f32.mxu0 %v4124
        %v4126 = vand.u32 %v356, 4294901760
        %4127 = vmatmul.mubr.f32.gmra.mrb[0].mxu0 %v4126
        %v4128 = vpop.f32.mrb[0].mxu0
        %v4129 = vadd.f32 %v3764, %v4128
        %v4130 = vpop.f32.mrb[0].mxu0
        %v4131 = vadd.f32 %v3766, %v4130
        %v4132 = vand.u32 %v363, 4294901760
        %4133 = vmatprep.mubr.f32.mxu0 %v4132
        %v4134 = vand.u32 %v362, 4294901760
        %4135 = vmatmul.mubr.f32.gmra.mrb[0].mxu0 %v4134
        %v4136 = vpop.f32.mrb[0].mxu0
        %v4137 = vadd.f32 %v3776, %v4136
        %v4138 = vpop.f32.mrb[0].mxu0
        %v4139 = vadd.f32 %v3778, %v4138
        %v4140 = vand.u32 %v369, 4294901760
        %4141 = vmatprep.mubr.f32.mxu0 %v4140
        %v4142 = vand.u32 %v368, 4294901760
        %4143 = vmatmul.mubr.f32.gmra.mrb[0].mxu0 %v4142
        %v4144 = vpop.f32.mrb[0].mxu0
        %v4145 = vadd.f32 %v3788, %v4144
        %v4146 = vpop.f32.mrb[0].mxu0
        %v4147 = vadd.f32 %v3790, %v4146
        %v4148 = vand.u32 %v375, 4294901760
        %4149 = vmatprep.mubr.f32.mxu0 %v4148
        %v4150 = vand.u32 %v374, 4294901760
        %4151 = vmatmul.mubr.f32.gmra.mrb[0].mxu0 %v4150
        %v4152 = vpop.f32.mrb[0].mxu0
        %v4153 = vadd.f32 %v3800, %v4152
        %v4154 = vpop.f32.mrb[0].mxu0
        %v4155 = vadd.f32 %v3802, %v4154
        %v4156 = vand.u32 %v381, 4294901760
        %4157 = vmatprep.mubr.f32.mxu0 %v4156
        %v4158 = vand.u32 %v380, 4294901760
        %4159 = vmatmul.mubr.f32.gmra.mrb[0].mxu0 %v4158
        %v4160 = vpop.f32.mrb[0].mxu0
        %v4161 = vadd.f32 %v3812, %v4160
        %v4162 = vpop.f32.mrb[0].mxu0
        %v4163 = vadd.f32 %v3814, %v4162
        %v4164 = vand.u32 %v387, 4294901760
        %4165 = vmatprep.mubr.f32.mxu0 %v4164
        %v4166 = vand.u32 %v386, 4294901760
        %4167 = vmatmul.mubr.f32.gmra.mrb[0].mxu0 %v4166
        %v4168 = vpop.f32.mrb[0].mxu0
        %v4169 = vadd.f32 %v3824, %v4168
        %v4170 = vpop.f32.mrb[0].mxu0
        %v4171 = vadd.f32 %v3826, %v4170
        %4172 = vdwg.mxu0
        %v4173 = vand.u32 %v455, 4294901760
        %4174 = vmatprep.subr.mxu0 %v4173
        %v4175 = vand.u32 %v454, 4294901760
        %4176 = vmatpush1.msra.mxu0 %v4175
        %v4177 = vand.u32 %v457, 4294901760
        %4178 = vmatprep.subr.mxu0 %v4177
        %v4179 = vand.u32 %v456, 4294901760
        %4180 = vmatpush1.msra.mxu0 %v4179
        %v4181 = vand.u32 %v459, 4294901760
        %4182 = vmatprep.subr.mxu0 %v4181
        %v4183 = vand.u32 %v458, 4294901760
        %4184 = vmatpush1.msra.mxu0 %v4183
        %v4185 = vand.u32 %v461, 4294901760
        %4186 = vmatprep.subr.mxu0 %v4185
        %v4187 = vand.u32 %v460, 4294901760
        %4188 = vmatpush1.msra.mxu0 %v4187
        %v4189 = vand.u32 %v463, 4294901760
        %4190 = vmatprep.subr.mxu0 %v4189
        %v4191 = vand.u32 %v462, 4294901760
        %4192 = vmatpush1.msra.mxu0 %v4191
        %v4193 = vand.u32 %v465, 4294901760
        %4194 = vmatprep.subr.mxu0 %v4193
        %v4195 = vand.u32 %v464, 4294901760
        %4196 = vmatpush1.msra.mxu0 %v4195
        %v4197 = vand.u32 %v467, 4294901760
        %4198 = vmatprep.subr.mxu0 %v4197
        %v4199 = vand.u32 %v466, 4294901760
        %4200 = vmatpush1.msra.mxu0 %v4199
        %v4201 = vand.u32 %v469, 4294901760
        %4202 = vmatprep.subr.mxu0 %v4201
        %v4203 = vand.u32 %v468, 4294901760
        %4204 = vmatpush1.msra.mxu0 %v4203
        %v4205 = vand.u32 %v471, 4294901760
        %4206 = vmatprep.subr.mxu0 %v4205
        %v4207 = vand.u32 %v470, 4294901760
        %4208 = vmatpush1.msra.mxu0 %v4207
        %v4209 = vand.u32 %v473, 4294901760
        %4210 = vmatprep.subr.mxu0 %v4209
        %v4211 = vand.u32 %v472, 4294901760
        %4212 = vmatpush1.msra.mxu0 %v4211
        %v4213 = vand.u32 %v475, 4294901760
        %4214 = vmatprep.subr.mxu0 %v4213
        %v4215 = vand.u32 %v474, 4294901760
        %4216 = vmatpush1.msra.mxu0 %v4215
        %v4217 = vand.u32 %v477, 4294901760
        %4218 = vmatprep.subr.mxu0 %v4217
        %v4219 = vand.u32 %v476, 4294901760
        %4220 = vmatpush1.msra.mxu0 %v4219
        %v4221 = vand.u32 %v479, 4294901760
        %4222 = vmatprep.subr.mxu0 %v4221
        %v4223 = vand.u32 %v478, 4294901760
        %4224 = vmatpush1.msra.mxu0 %v4223
        %v4225 = vand.u32 %v481, 4294901760
        %4226 = vmatprep.subr.mxu0 %v4225
        %v4227 = vand.u32 %v480, 4294901760
        %4228 = vmatpush1.msra.mxu0 %v4227
        %v4229 = vand.u32 %v483, 4294901760
        %4230 = vmatprep.subr.mxu0 %v4229
        %v4231 = vand.u32 %v482, 4294901760
        %4232 = vmatpush1.msra.mxu0 %v4231
        %v4233 = vand.u32 %v485, 4294901760
        %4234 = vmatprep.subr.mxu0 %v4233
        %v4235 = vand.u32 %v484, 4294901760
        %4236 = vmatpush1.msra.mxu0 %v4235
        %v4237 = vand.u32 %v487, 4294901760
        %4238 = vmatprep.subr.mxu0 %v4237
        %v4239 = vand.u32 %v486, 4294901760
        %4240 = vmatpush1.msra.mxu0 %v4239
        %v4241 = vand.u32 %v489, 4294901760
        %4242 = vmatprep.subr.mxu0 %v4241
        %v4243 = vand.u32 %v488, 4294901760
        %4244 = vmatpush1.msra.mxu0 %v4243
        %v4245 = vand.u32 %v491, 4294901760
        %4246 = vmatprep.subr.mxu0 %v4245
        %v4247 = vand.u32 %v490, 4294901760
        %4248 = vmatpush1.msra.mxu0 %v4247
        %v4249 = vand.u32 %v493, 4294901760
        %4250 = vmatprep.subr.mxu0 %v4249
        %v4251 = vand.u32 %v492, 4294901760
        %4252 = vmatpush1.msra.mxu0 %v4251
        %v4253 = vand.u32 %v495, 4294901760
        %4254 = vmatprep.subr.mxu0 %v4253
        %v4255 = vand.u32 %v494, 4294901760
        %4256 = vmatpush1.msra.mxu0 %v4255
        %v4257 = vand.u32 %v497, 4294901760
        %4258 = vmatprep.subr.mxu0 %v4257
        %v4259 = vand.u32 %v496, 4294901760
        %4260 = vmatpush1.msra.mxu0 %v4259
        %v4261 = vand.u32 %v499, 4294901760
        %4262 = vmatprep.subr.mxu0 %v4261
        %v4263 = vand.u32 %v498, 4294901760
        %4264 = vmatpush1.msra.mxu0 %v4263
        %v4265 = vand.u32 %v501, 4294901760
        %4266 = vmatprep.subr.mxu0 %v4265
        %v4267 = vand.u32 %v500, 4294901760
        %4268 = vmatpush1.msra.mxu0 %v4267
        %v4269 = vand.u32 %v503, 4294901760
        %4270 = vmatprep.subr.mxu0 %v4269
        %v4271 = vand.u32 %v502, 4294901760
        %4272 = vmatpush1.msra.mxu0 %v4271
        %v4273 = vand.u32 %v505, 4294901760
        %4274 = vmatprep.subr.mxu0 %v4273
        %v4275 = vand.u32 %v504, 4294901760
        %4276 = vmatpush1.msra.mxu0 %v4275
        %v4277 = vand.u32 %v507, 4294901760
        %4278 = vmatprep.subr.mxu0 %v4277
        %v4279 = vand.u32 %v506, 4294901760
        %4280 = vmatpush1.msra.mxu0 %v4279
        %v4281 = vand.u32 %v509, 4294901760
        %4282 = vmatprep.subr.mxu0 %v4281
        %v4283 = vand.u32 %v508, 4294901760
        %4284 = vmatpush1.msra.mxu0 %v4283
        %v4285 = vand.u32 %v511, 4294901760
        %4286 = vmatprep.subr.mxu0 %v4285
        %v4287 = vand.u32 %v510, 4294901760
        %4288 = vmatpush1.msra.mxu0 %v4287
        %v4289 = vand.u32 %v513, 4294901760
        %4290 = vmatprep.subr.mxu0 %v4289
        %v4291 = vand.u32 %v512, 4294901760
        %4292 = vmatpush1.msra.mxu0 %v4291
        %v4293 = vand.u32 %v515, 4294901760
        %4294 = vmatprep.subr.mxu0 %v4293
        %v4295 = vand.u32 %v514, 4294901760
        %4296 = vmatpush1.msra.mxu0 %v4295
        %v4297 = vand.u32 %v517, 4294901760
        %4298 = vmatprep.subr.mxu0 %v4297
        %v4299 = vand.u32 %v516, 4294901760
        %4300 = vmatpush1.msra.mxu0 %v4299
        %v4301 = vand.u32 %v327, 4294901760
        %4302 = vmatprep.mubr.f32.mxu0 %v4301
        %v4303 = vand.u32 %v326, 4294901760
        %4304 = vmatmul.mubr.f32.gmra.mrb[0].mxu0 %v4303
        %v4305 = vpop.f32.mrb[0].mxu0
        %v4306 = vadd.f32 %v4089, %v4305
        %v4307 = vpop.f32.mrb[0].mxu0
        %v4308 = vadd.f32 %v4091, %v4307
        %v4309 = vand.u32 %v333, 4294901760
        %4310 = vmatprep.mubr.f32.mxu0 %v4309
        %v4311 = vand.u32 %v332, 4294901760
        %4312 = vmatmul.mubr.f32.gmra.mrb[0].mxu0 %v4311
        %v4313 = vpop.f32.mrb[0].mxu0
        %v4314 = vadd.f32 %v4097, %v4313
        %v4315 = vpop.f32.mrb[0].mxu0
        %v4316 = vadd.f32 %v4099, %v4315
        %v4317 = vand.u32 %v339, 4294901760
        %4318 = vmatprep.mubr.f32.mxu0 %v4317
        %v4319 = vand.u32 %v338, 4294901760
        %4320 = vmatmul.mubr.f32.gmra.mrb[0].mxu0 %v4319
        %v4321 = vpop.f32.mrb[0].mxu0
        %v4322 = vadd.f32 %v4105, %v4321
        %v4323 = vpop.f32.mrb[0].mxu0
        %v4324 = vadd.f32 %v4107, %v4323
        %v4325 = vand.u32 %v345, 4294901760
        %4326 = vmatprep.mubr.f32.mxu0 %v4325
        %v4327 = vand.u32 %v344, 4294901760
        %4328 = vmatmul.mubr.f32.gmra.mrb[0].mxu0 %v4327
        %v4329 = vpop.f32.mrb[0].mxu0
        %v4330 = vadd.f32 %v4113, %v4329
        %v4331 = vpop.f32.mrb[0].mxu0
        %v4332 = vadd.f32 %v4115, %v4331
        %v4333 = vand.u32 %v351, 4294901760
        %4334 = vmatprep.mubr.f32.mxu0 %v4333
        %v4335 = vand.u32 %v350, 4294901760
        %4336 = vmatmul.mubr.f32.gmra.mrb[0].mxu0 %v4335
        %v4337 = vpop.f32.mrb[0].mxu0
        %v4338 = vadd.f32 %v4121, %v4337
        %v4339 = vpop.f32.mrb[0].mxu0
        %v4340 = vadd.f32 %v4123, %v4339
        %v4341 = vand.u32 %v357, 4294901760
        %4342 = vmatprep.mubr.f32.mxu0 %v4341
        %v4343 = vand.u32 %v356, 4294901760
        %4344 = vmatmul.mubr.f32.gmra.mrb[0].mxu0 %v4343
        %v4345 = vpop.f32.mrb[0].mxu0
        %v4346 = vadd.f32 %v4129, %v4345
        %v4347 = vpop.f32.mrb[0].mxu0
        %v4348 = vadd.f32 %v4131, %v4347
        %v4349 = vand.u32 %v363, 4294901760
        %4350 = vmatprep.mubr.f32.mxu0 %v4349
        %v4351 = vand.u32 %v362, 4294901760
        %4352 = vmatmul.mubr.f32.gmra.mrb[0].mxu0 %v4351
        %v4353 = vpop.f32.mrb[0].mxu0
        %v4354 = vadd.f32 %v4137, %v4353
        %v4355 = vpop.f32.mrb[0].mxu0
        %v4356 = vadd.f32 %v4139, %v4355
        %v4357 = vand.u32 %v369, 4294901760
        %4358 = vmatprep.mubr.f32.mxu0 %v4357
        %v4359 = vand.u32 %v368, 4294901760
        %4360 = vmatmul.mubr.f32.gmra.mrb[0].mxu0 %v4359
        %v4361 = vpop.f32.mrb[0].mxu0
        %v4362 = vadd.f32 %v4145, %v4361
        %v4363 = vpop.f32.mrb[0].mxu0
        %v4364 = vadd.f32 %v4147, %v4363
        %v4365 = vand.u32 %v375, 4294901760
        %4366 = vmatprep.mubr.f32.mxu0 %v4365
        %v4367 = vand.u32 %v374, 4294901760
        %4368 = vmatmul.mubr.f32.gmra.mrb[0].mxu0 %v4367
        %v4369 = vpop.f32.mrb[0].mxu0
        %v4370 = vadd.f32 %v4153, %v4369
        %v4371 = vpop.f32.mrb[0].mxu0
        %v4372 = vadd.f32 %v4155, %v4371
        %v4373 = vand.u32 %v381, 4294901760
        %4374 = vmatprep.mubr.f32.mxu0 %v4373
        %v4375 = vand.u32 %v380, 4294901760
        %4376 = vmatmul.mubr.f32.gmra.mrb[0].mxu0 %v4375
        %v4377 = vpop.f32.mrb[0].mxu0
        %v4378 = vadd.f32 %v4161, %v4377
        %v4379 = vpop.f32.mrb[0].mxu0
        %v4380 = vadd.f32 %v4163, %v4379
        %v4381 = vand.u32 %v387, 4294901760
        %4382 = vmatprep.mubr.f32.mxu0 %v4381
        %v4383 = vand.u32 %v386, 4294901760
        %4384 = vmatmul.mubr.f32.gmra.mrb[0].mxu0 %v4383
        %v4385 = vpop.f32.mrb[0].mxu0
        %v4386 = vadd.f32 %v4169, %v4385
        %v4387 = vpop.f32.mrb[0].mxu0
        %v4388 = vadd.f32 %v4171, %v4387
        %4389 = vdwg.mxu0
        %v4390 = vand.u32 %v519, 4294901760
        %4391 = vmatprep.subr.mxu0 %v4390
        %v4392 = vand.u32 %v518, 4294901760
        %4393 = vmatpush1.msra.mxu0 %v4392
        %v4394 = vand.u32 %v521, 4294901760
        %4395 = vmatprep.subr.mxu0 %v4394
        %v4396 = vand.u32 %v520, 4294901760
        %4397 = vmatpush1.msra.mxu0 %v4396
        %v4398 = vand.u32 %v523, 4294901760
        %4399 = vmatprep.subr.mxu0 %v4398
        %v4400 = vand.u32 %v522, 4294901760
        %4401 = vmatpush1.msra.mxu0 %v4400
        %v4402 = vand.u32 %v525, 4294901760
        %4403 = vmatprep.subr.mxu0 %v4402
        %v4404 = vand.u32 %v524, 4294901760
        %4405 = vmatpush1.msra.mxu0 %v4404
        %v4406 = vand.u32 %v527, 4294901760
        %4407 = vmatprep.subr.mxu0 %v4406
        %v4408 = vand.u32 %v526, 4294901760
        %4409 = vmatpush1.msra.mxu0 %v4408
        %v4410 = vand.u32 %v529, 4294901760
        %4411 = vmatprep.subr.mxu0 %v4410
        %v4412 = vand.u32 %v528, 4294901760
        %4413 = vmatpush1.msra.mxu0 %v4412
        %v4414 = vand.u32 %v531, 4294901760
        %4415 = vmatprep.subr.mxu0 %v4414
        %v4416 = vand.u32 %v530, 4294901760
        %4417 = vmatpush1.msra.mxu0 %v4416
        %v4418 = vand.u32 %v533, 4294901760
        %4419 = vmatprep.subr.mxu0 %v4418
        %v4420 = vand.u32 %v532, 4294901760
        %4421 = vmatpush1.msra.mxu0 %v4420
        %v4422 = vand.u32 %v535, 4294901760
        %4423 = vmatprep.subr.mxu0 %v4422
        %v4424 = vand.u32 %v534, 4294901760
        %4425 = vmatpush1.msra.mxu0 %v4424
        %v4426 = vand.u32 %v537, 4294901760
        %4427 = vmatprep.subr.mxu0 %v4426
        %v4428 = vand.u32 %v536, 4294901760
        %4429 = vmatpush1.msra.mxu0 %v4428
        %v4430 = vand.u32 %v539, 4294901760
        %4431 = vmatprep.subr.mxu0 %v4430
        %v4432 = vand.u32 %v538, 4294901760
        %4433 = vmatpush1.msra.mxu0 %v4432
        %v4434 = vand.u32 %v541, 4294901760
        %4435 = vmatprep.subr.mxu0 %v4434
        %v4436 = vand.u32 %v540, 4294901760
        %4437 = vmatpush1.msra.mxu0 %v4436
        %v4438 = vand.u32 %v543, 4294901760
        %4439 = vmatprep.subr.mxu0 %v4438
        %v4440 = vand.u32 %v542, 4294901760
        %4441 = vmatpush1.msra.mxu0 %v4440
        %v4442 = vand.u32 %v545, 4294901760
        %4443 = vmatprep.subr.mxu0 %v4442
        %v4444 = vand.u32 %v544, 4294901760
        %4445 = vmatpush1.msra.mxu0 %v4444
        %v4446 = vand.u32 %v547, 4294901760
        %4447 = vmatprep.subr.mxu0 %v4446
        %v4448 = vand.u32 %v546, 4294901760
        %4449 = vmatpush1.msra.mxu0 %v4448
        %v4450 = vand.u32 %v549, 4294901760
        %4451 = vmatprep.subr.mxu0 %v4450
        %v4452 = vand.u32 %v548, 4294901760
        %4453 = vmatpush1.msra.mxu0 %v4452
        %v4454 = vand.u32 %v551, 4294901760
        %4455 = vmatprep.subr.mxu0 %v4454
        %v4456 = vand.u32 %v550, 4294901760
        %4457 = vmatpush1.msra.mxu0 %v4456
        %v4458 = vand.u32 %v553, 4294901760
        %4459 = vmatprep.subr.mxu0 %v4458
        %v4460 = vand.u32 %v552, 4294901760
        %4461 = vmatpush1.msra.mxu0 %v4460
        %v4462 = vand.u32 %v555, 4294901760
        %4463 = vmatprep.subr.mxu0 %v4462
        %v4464 = vand.u32 %v554, 4294901760
        %4465 = vmatpush1.msra.mxu0 %v4464
        %v4466 = vand.u32 %v557, 4294901760
        %4467 = vmatprep.subr.mxu0 %v4466
        %v4468 = vand.u32 %v556, 4294901760
        %4469 = vmatpush1.msra.mxu0 %v4468
        %v4470 = vand.u32 %v559, 4294901760
        %4471 = vmatprep.subr.mxu0 %v4470
        %v4472 = vand.u32 %v558, 4294901760
        %4473 = vmatpush1.msra.mxu0 %v4472
        %v4474 = vand.u32 %v561, 4294901760
        %4475 = vmatprep.subr.mxu0 %v4474
        %v4476 = vand.u32 %v560, 4294901760
        %4477 = vmatpush1.msra.mxu0 %v4476
        %v4478 = vand.u32 %v563, 4294901760
        %4479 = vmatprep.subr.mxu0 %v4478
        %v4480 = vand.u32 %v562, 4294901760
        %4481 = vmatpush1.msra.mxu0 %v4480
        %v4482 = vand.u32 %v565, 4294901760
        %4483 = vmatprep.subr.mxu0 %v4482
        %v4484 = vand.u32 %v564, 4294901760
        %4485 = vmatpush1.msra.mxu0 %v4484
        %v4486 = vand.u32 %v567, 4294901760
        %4487 = vmatprep.subr.mxu0 %v4486
        %v4488 = vand.u32 %v566, 4294901760
        %4489 = vmatpush1.msra.mxu0 %v4488
        %v4490 = vand.u32 %v569, 4294901760
        %4491 = vmatprep.subr.mxu0 %v4490
        %v4492 = vand.u32 %v568, 4294901760
        %4493 = vmatpush1.msra.mxu0 %v4492
        %v4494 = vand.u32 %v571, 4294901760
        %4495 = vmatprep.subr.mxu0 %v4494
        %v4496 = vand.u32 %v570, 4294901760
        %4497 = vmatpush1.msra.mxu0 %v4496
        %v4498 = vand.u32 %v573, 4294901760
        %4499 = vmatprep.subr.mxu0 %v4498
        %v4500 = vand.u32 %v572, 4294901760
        %4501 = vmatpush1.msra.mxu0 %v4500
        %v4502 = vand.u32 %v575, 4294901760
        %4503 = vmatprep.subr.mxu0 %v4502
        %v4504 = vand.u32 %v574, 4294901760
        %4505 = vmatpush1.msra.mxu0 %v4504
        %v4506 = vand.u32 %v577, 4294901760
        %4507 = vmatprep.subr.mxu0 %v4506
        %v4508 = vand.u32 %v576, 4294901760
        %4509 = vmatpush1.msra.mxu0 %v4508
        %v4510 = vand.u32 %v579, 4294901760
        %4511 = vmatprep.subr.mxu0 %v4510
        %v4512 = vand.u32 %v578, 4294901760
        %4513 = vmatpush1.msra.mxu0 %v4512
        %v4514 = vand.u32 %v581, 4294901760
        %4515 = vmatprep.subr.mxu0 %v4514
        %v4516 = vand.u32 %v580, 4294901760
        %4517 = vmatpush1.msra.mxu0 %v4516
        %v4518 = vand.u32 %v329, 4294901760
        %v4519 = vsub.f32 %v329, %v4518
        %v4520 = vand.u32 %v4519, 4294901760
        %v4521 = vsub.f32 %v4519, %v4520
        %v4522 = vand.u32 %v4521, 4294901760
        %4523 = vmatprep.mubr.f32.mxu0 %v4522
        %v4524 = vand.u32 %v328, 4294901760
        %v4525 = vsub.f32 %v328, %v4524
        %v4526 = vand.u32 %v4525, 4294901760
        %v4527 = vsub.f32 %v4525, %v4526
        %v4528 = vand.u32 %v4527, 4294901760
        %4529 = vmatmul.mubr.f32.gmra.mrb[0].mxu0 %v4528
        %v4530 = vpop.f32.mrb[0].mxu0
        %v4531 = vadd.f32 %v4306, %v4530
        %v4532 = vpop.f32.mrb[0].mxu0
        %v4533 = vadd.f32 %v4308, %v4532
        %v4534 = vand.u32 %v335, 4294901760
        %v4535 = vsub.f32 %v335, %v4534
        %v4536 = vand.u32 %v4535, 4294901760
        %v4537 = vsub.f32 %v4535, %v4536
        %v4538 = vand.u32 %v4537, 4294901760
        %4539 = vmatprep.mubr.f32.mxu0 %v4538
        %v4540 = vand.u32 %v334, 4294901760
        %v4541 = vsub.f32 %v334, %v4540
        %v4542 = vand.u32 %v4541, 4294901760
        %v4543 = vsub.f32 %v4541, %v4542
        %v4544 = vand.u32 %v4543, 4294901760
        %4545 = vmatmul.mubr.f32.gmra.mrb[0].mxu0 %v4544
        %v4546 = vpop.f32.mrb[0].mxu0
        %v4547 = vadd.f32 %v4314, %v4546
        %v4548 = vpop.f32.mrb[0].mxu0
        %v4549 = vadd.f32 %v4316, %v4548
        %v4550 = vand.u32 %v341, 4294901760
        %v4551 = vsub.f32 %v341, %v4550
        %v4552 = vand.u32 %v4551, 4294901760
        %v4553 = vsub.f32 %v4551, %v4552
        %v4554 = vand.u32 %v4553, 4294901760
        %4555 = vmatprep.mubr.f32.mxu0 %v4554
        %v4556 = vand.u32 %v340, 4294901760
        %v4557 = vsub.f32 %v340, %v4556
        %v4558 = vand.u32 %v4557, 4294901760
        %v4559 = vsub.f32 %v4557, %v4558
        %v4560 = vand.u32 %v4559, 4294901760
        %4561 = vmatmul.mubr.f32.gmra.mrb[0].mxu0 %v4560
        %v4562 = vpop.f32.mrb[0].mxu0
        %v4563 = vadd.f32 %v4322, %v4562
        %v4564 = vpop.f32.mrb[0].mxu0
        %v4565 = vadd.f32 %v4324, %v4564
        %v4566 = vand.u32 %v347, 4294901760
        %v4567 = vsub.f32 %v347, %v4566
        %v4568 = vand.u32 %v4567, 4294901760
        %v4569 = vsub.f32 %v4567, %v4568
        %v4570 = vand.u32 %v4569, 4294901760
        %4571 = vmatprep.mubr.f32.mxu0 %v4570
        %v4572 = vand.u32 %v346, 4294901760
        %v4573 = vsub.f32 %v346, %v4572
        %v4574 = vand.u32 %v4573, 4294901760
        %v4575 = vsub.f32 %v4573, %v4574
        %v4576 = vand.u32 %v4575, 4294901760
        %4577 = vmatmul.mubr.f32.gmra.mrb[0].mxu0 %v4576
        %v4578 = vpop.f32.mrb[0].mxu0
        %v4579 = vadd.f32 %v4330, %v4578
        %v4580 = vpop.f32.mrb[0].mxu0
        %v4581 = vadd.f32 %v4332, %v4580
        %v4582 = vand.u32 %v353, 4294901760
        %v4583 = vsub.f32 %v353, %v4582
        %v4584 = vand.u32 %v4583, 4294901760
        %v4585 = vsub.f32 %v4583, %v4584
        %v4586 = vand.u32 %v4585, 4294901760
        %4587 = vmatprep.mubr.f32.mxu0 %v4586
        %v4588 = vand.u32 %v352, 4294901760
        %v4589 = vsub.f32 %v352, %v4588
        %v4590 = vand.u32 %v4589, 4294901760
        %v4591 = vsub.f32 %v4589, %v4590
        %v4592 = vand.u32 %v4591, 4294901760
        %4593 = vmatmul.mubr.f32.gmra.mrb[0].mxu0 %v4592
        %v4594 = vpop.f32.mrb[0].mxu0
        %v4595 = vadd.f32 %v4338, %v4594
        %v4596 = vpop.f32.mrb[0].mxu0
        %v4597 = vadd.f32 %v4340, %v4596
        %v4598 = vand.u32 %v359, 4294901760
        %v4599 = vsub.f32 %v359, %v4598
        %v4600 = vand.u32 %v4599, 4294901760
        %v4601 = vsub.f32 %v4599, %v4600
        %v4602 = vand.u32 %v4601, 4294901760
        %4603 = vmatprep.mubr.f32.mxu0 %v4602
        %v4604 = vand.u32 %v358, 4294901760
        %v4605 = vsub.f32 %v358, %v4604
        %v4606 = vand.u32 %v4605, 4294901760
        %v4607 = vsub.f32 %v4605, %v4606
        %v4608 = vand.u32 %v4607, 4294901760
        %4609 = vmatmul.mubr.f32.gmra.mrb[0].mxu0 %v4608
        %v4610 = vpop.f32.mrb[0].mxu0
        %v4611 = vadd.f32 %v4346, %v4610
        %v4612 = vpop.f32.mrb[0].mxu0
        %v4613 = vadd.f32 %v4348, %v4612
        %v4614 = vand.u32 %v365, 4294901760
        %v4615 = vsub.f32 %v365, %v4614
        %v4616 = vand.u32 %v4615, 4294901760
        %v4617 = vsub.f32 %v4615, %v4616
        %v4618 = vand.u32 %v4617, 4294901760
        %4619 = vmatprep.mubr.f32.mxu0 %v4618
        %v4620 = vand.u32 %v364, 4294901760
        %v4621 = vsub.f32 %v364, %v4620
        %v4622 = vand.u32 %v4621, 4294901760
        %v4623 = vsub.f32 %v4621, %v4622
        %v4624 = vand.u32 %v4623, 4294901760
        %4625 = vmatmul.mubr.f32.gmra.mrb[0].mxu0 %v4624
        %v4626 = vpop.f32.mrb[0].mxu0
        %v4627 = vadd.f32 %v4354, %v4626
        %v4628 = vpop.f32.mrb[0].mxu0
        %v4629 = vadd.f32 %v4356, %v4628
        %v4630 = vand.u32 %v371, 4294901760
        %v4631 = vsub.f32 %v371, %v4630
        %v4632 = vand.u32 %v4631, 4294901760
        %v4633 = vsub.f32 %v4631, %v4632
        %v4634 = vand.u32 %v4633, 4294901760
        %4635 = vmatprep.mubr.f32.mxu0 %v4634
        %v4636 = vand.u32 %v370, 4294901760
        %v4637 = vsub.f32 %v370, %v4636
        %v4638 = vand.u32 %v4637, 4294901760
        %v4639 = vsub.f32 %v4637, %v4638
        %v4640 = vand.u32 %v4639, 4294901760
        %4641 = vmatmul.mubr.f32.gmra.mrb[0].mxu0 %v4640
        %v4642 = vpop.f32.mrb[0].mxu0
        %v4643 = vadd.f32 %v4362, %v4642
        %v4644 = vpop.f32.mrb[0].mxu0
        %v4645 = vadd.f32 %v4364, %v4644
        %v4646 = vand.u32 %v377, 4294901760
        %v4647 = vsub.f32 %v377, %v4646
        %v4648 = vand.u32 %v4647, 4294901760
        %v4649 = vsub.f32 %v4647, %v4648
        %v4650 = vand.u32 %v4649, 4294901760
        %4651 = vmatprep.mubr.f32.mxu0 %v4650
        %v4652 = vand.u32 %v376, 4294901760
        %v4653 = vsub.f32 %v376, %v4652
        %v4654 = vand.u32 %v4653, 4294901760
        %v4655 = vsub.f32 %v4653, %v4654
        %v4656 = vand.u32 %v4655, 4294901760
        %4657 = vmatmul.mubr.f32.gmra.mrb[0].mxu0 %v4656
        %v4658 = vpop.f32.mrb[0].mxu0
        %v4659 = vadd.f32 %v4370, %v4658
        %v4660 = vpop.f32.mrb[0].mxu0
        %v4661 = vadd.f32 %v4372, %v4660
        %v4662 = vand.u32 %v383, 4294901760
        %v4663 = vsub.f32 %v383, %v4662
        %v4664 = vand.u32 %v4663, 4294901760
        %v4665 = vsub.f32 %v4663, %v4664
        %v4666 = vand.u32 %v4665, 4294901760
        %4667 = vmatprep.mubr.f32.mxu0 %v4666
        %v4668 = vand.u32 %v382, 4294901760
        %v4669 = vsub.f32 %v382, %v4668
        %v4670 = vand.u32 %v4669, 4294901760
        %v4671 = vsub.f32 %v4669, %v4670
        %v4672 = vand.u32 %v4671, 4294901760
        %4673 = vmatmul.mubr.f32.gmra.mrb[0].mxu0 %v4672
        %v4674 = vpop.f32.mrb[0].mxu0
        %v4675 = vadd.f32 %v4378, %v4674
        %v4676 = vpop.f32.mrb[0].mxu0
        %v4677 = vadd.f32 %v4380, %v4676
        %v4678 = vand.u32 %v389, 4294901760
        %v4679 = vsub.f32 %v389, %v4678
        %v4680 = vand.u32 %v4679, 4294901760
        %v4681 = vsub.f32 %v4679, %v4680
        %v4682 = vand.u32 %v4681, 4294901760
        %4683 = vmatprep.mubr.f32.mxu0 %v4682
        %v4684 = vand.u32 %v388, 4294901760
        %v4685 = vsub.f32 %v388, %v4684
        %v4686 = vand.u32 %v4685, 4294901760
        %v4687 = vsub.f32 %v4685, %v4686
        %v4688 = vand.u32 %v4687, 4294901760
        %4689 = vmatmul.mubr.f32.gmra.mrb[0].mxu0 %v4688
        %v4690 = vpop.f32.mrb[0].mxu0
        %v4691 = vadd.f32 %v4386, %v4690
        %v4692 = vpop.f32.mrb[0].mxu0
        %v4693 = vadd.f32 %v4388, %v4692
        %4694 = vdwg.mxu0
        %v4695 = vand.u32 %v519, 4294901760
        %v4696 = vsub.f32 %v519, %v4695
        %v4697 = vand.u32 %v4696, 4294901760
        %v4698 = vsub.f32 %v4696, %v4697
        %v4699 = vand.u32 %v4698, 4294901760
        %4700 = vmatprep.subr.mxu0 %v4699
        %v4701 = vand.u32 %v518, 4294901760
        %v4702 = vsub.f32 %v518, %v4701
        %v4703 = vand.u32 %v4702, 4294901760
        %v4704 = vsub.f32 %v4702, %v4703
        %v4705 = vand.u32 %v4704, 4294901760
        %4706 = vmatpush1.msra.mxu0 %v4705
        %v4707 = vand.u32 %v521, 4294901760
        %v4708 = vsub.f32 %v521, %v4707
        %v4709 = vand.u32 %v4708, 4294901760
        %v4710 = vsub.f32 %v4708, %v4709
        %v4711 = vand.u32 %v4710, 4294901760
        %4712 = vmatprep.subr.mxu0 %v4711
        %v4713 = vand.u32 %v520, 4294901760
        %v4714 = vsub.f32 %v520, %v4713
        %v4715 = vand.u32 %v4714, 4294901760
        %v4716 = vsub.f32 %v4714, %v4715
        %v4717 = vand.u32 %v4716, 4294901760
        %4718 = vmatpush1.msra.mxu0 %v4717
        %v4719 = vand.u32 %v523, 4294901760
        %v4720 = vsub.f32 %v523, %v4719
        %v4721 = vand.u32 %v4720, 4294901760
        %v4722 = vsub.f32 %v4720, %v4721
        %v4723 = vand.u32 %v4722, 4294901760
        %4724 = vmatprep.subr.mxu0 %v4723
        %v4725 = vand.u32 %v522, 4294901760
        %v4726 = vsub.f32 %v522, %v4725
        %v4727 = vand.u32 %v4726, 4294901760
        %v4728 = vsub.f32 %v4726, %v4727
        %v4729 = vand.u32 %v4728, 4294901760
        %4730 = vmatpush1.msra.mxu0 %v4729
        %v4731 = vand.u32 %v525, 4294901760
        %v4732 = vsub.f32 %v525, %v4731
        %v4733 = vand.u32 %v4732, 4294901760
        %v4734 = vsub.f32 %v4732, %v4733
        %v4735 = vand.u32 %v4734, 4294901760
        %4736 = vmatprep.subr.mxu0 %v4735
        %v4737 = vand.u32 %v524, 4294901760
        %v4738 = vsub.f32 %v524, %v4737
        %v4739 = vand.u32 %v4738, 4294901760
        %v4740 = vsub.f32 %v4738, %v4739
        %v4741 = vand.u32 %v4740, 4294901760
        %4742 = vmatpush1.msra.mxu0 %v4741
        %v4743 = vand.u32 %v527, 4294901760
        %v4744 = vsub.f32 %v527, %v4743
        %v4745 = vand.u32 %v4744, 4294901760
        %v4746 = vsub.f32 %v4744, %v4745
        %v4747 = vand.u32 %v4746, 4294901760
        %4748 = vmatprep.subr.mxu0 %v4747
        %v4749 = vand.u32 %v526, 4294901760
        %v4750 = vsub.f32 %v526, %v4749
        %v4751 = vand.u32 %v4750, 4294901760
        %v4752 = vsub.f32 %v4750, %v4751
        %v4753 = vand.u32 %v4752, 4294901760
        %4754 = vmatpush1.msra.mxu0 %v4753
        %v4755 = vand.u32 %v529, 4294901760
        %v4756 = vsub.f32 %v529, %v4755
        %v4757 = vand.u32 %v4756, 4294901760
        %v4758 = vsub.f32 %v4756, %v4757
        %v4759 = vand.u32 %v4758, 4294901760
        %4760 = vmatprep.subr.mxu0 %v4759
        %v4761 = vand.u32 %v528, 4294901760
        %v4762 = vsub.f32 %v528, %v4761
        %v4763 = vand.u32 %v4762, 4294901760
        %v4764 = vsub.f32 %v4762, %v4763
        %v4765 = vand.u32 %v4764, 4294901760
        %4766 = vmatpush1.msra.mxu0 %v4765
        %v4767 = vand.u32 %v531, 4294901760
        %v4768 = vsub.f32 %v531, %v4767
        %v4769 = vand.u32 %v4768, 4294901760
        %v4770 = vsub.f32 %v4768, %v4769
        %v4771 = vand.u32 %v4770, 4294901760
        %4772 = vmatprep.subr.mxu0 %v4771
        %v4773 = vand.u32 %v530, 4294901760
        %v4774 = vsub.f32 %v530, %v4773
        %v4775 = vand.u32 %v4774, 4294901760
        %v4776 = vsub.f32 %v4774, %v4775
        %v4777 = vand.u32 %v4776, 4294901760
        %4778 = vmatpush1.msra.mxu0 %v4777
        %v4779 = vand.u32 %v533, 4294901760
        %v4780 = vsub.f32 %v533, %v4779
        %v4781 = vand.u32 %v4780, 4294901760
        %v4782 = vsub.f32 %v4780, %v4781
        %v4783 = vand.u32 %v4782, 4294901760
        %4784 = vmatprep.subr.mxu0 %v4783
        %v4785 = vand.u32 %v532, 4294901760
        %v4786 = vsub.f32 %v532, %v4785
        %v4787 = vand.u32 %v4786, 4294901760
        %v4788 = vsub.f32 %v4786, %v4787
        %v4789 = vand.u32 %v4788, 4294901760
        %4790 = vmatpush1.msra.mxu0 %v4789
        %v4791 = vand.u32 %v535, 4294901760
        %v4792 = vsub.f32 %v535, %v4791
        %v4793 = vand.u32 %v4792, 4294901760
        %v4794 = vsub.f32 %v4792, %v4793
        %v4795 = vand.u32 %v4794, 4294901760
        %4796 = vmatprep.subr.mxu0 %v4795
        %v4797 = vand.u32 %v534, 4294901760
        %v4798 = vsub.f32 %v534, %v4797
        %v4799 = vand.u32 %v4798, 4294901760
        %v4800 = vsub.f32 %v4798, %v4799
        %v4801 = vand.u32 %v4800, 4294901760
        %4802 = vmatpush1.msra.mxu0 %v4801
        %v4803 = vand.u32 %v537, 4294901760
        %v4804 = vsub.f32 %v537, %v4803
        %v4805 = vand.u32 %v4804, 4294901760
        %v4806 = vsub.f32 %v4804, %v4805
        %v4807 = vand.u32 %v4806, 4294901760
        %4808 = vmatprep.subr.mxu0 %v4807
        %v4809 = vand.u32 %v536, 4294901760
        %v4810 = vsub.f32 %v536, %v4809
        %v4811 = vand.u32 %v4810, 4294901760
        %v4812 = vsub.f32 %v4810, %v4811
        %v4813 = vand.u32 %v4812, 4294901760
        %4814 = vmatpush1.msra.mxu0 %v4813
        %v4815 = vand.u32 %v539, 4294901760
        %v4816 = vsub.f32 %v539, %v4815
        %v4817 = vand.u32 %v4816, 4294901760
        %v4818 = vsub.f32 %v4816, %v4817
        %v4819 = vand.u32 %v4818, 4294901760
        %4820 = vmatprep.subr.mxu0 %v4819
        %v4821 = vand.u32 %v538, 4294901760
        %v4822 = vsub.f32 %v538, %v4821
        %v4823 = vand.u32 %v4822, 4294901760
        %v4824 = vsub.f32 %v4822, %v4823
        %v4825 = vand.u32 %v4824, 4294901760
        %4826 = vmatpush1.msra.mxu0 %v4825
        %v4827 = vand.u32 %v541, 4294901760
        %v4828 = vsub.f32 %v541, %v4827
        %v4829 = vand.u32 %v4828, 4294901760
        %v4830 = vsub.f32 %v4828, %v4829
        %v4831 = vand.u32 %v4830, 4294901760
        %4832 = vmatprep.subr.mxu0 %v4831
        %v4833 = vand.u32 %v540, 4294901760
        %v4834 = vsub.f32 %v540, %v4833
        %v4835 = vand.u32 %v4834, 4294901760
        %v4836 = vsub.f32 %v4834, %v4835
        %v4837 = vand.u32 %v4836, 4294901760
        %4838 = vmatpush1.msra.mxu0 %v4837
        %v4839 = vand.u32 %v543, 4294901760
        %v4840 = vsub.f32 %v543, %v4839
        %v4841 = vand.u32 %v4840, 4294901760
        %v4842 = vsub.f32 %v4840, %v4841
        %v4843 = vand.u32 %v4842, 4294901760
        %4844 = vmatprep.subr.mxu0 %v4843
        %v4845 = vand.u32 %v542, 4294901760
        %v4846 = vsub.f32 %v542, %v4845
        %v4847 = vand.u32 %v4846, 4294901760
        %v4848 = vsub.f32 %v4846, %v4847
        %v4849 = vand.u32 %v4848, 4294901760
        %4850 = vmatpush1.msra.mxu0 %v4849
        %v4851 = vand.u32 %v545, 4294901760
        %v4852 = vsub.f32 %v545, %v4851
        %v4853 = vand.u32 %v4852, 4294901760
        %v4854 = vsub.f32 %v4852, %v4853
        %v4855 = vand.u32 %v4854, 4294901760
        %4856 = vmatprep.subr.mxu0 %v4855
        %v4857 = vand.u32 %v544, 4294901760
        %v4858 = vsub.f32 %v544, %v4857
        %v4859 = vand.u32 %v4858, 4294901760
        %v4860 = vsub.f32 %v4858, %v4859
        %v4861 = vand.u32 %v4860, 4294901760
        %4862 = vmatpush1.msra.mxu0 %v4861
        %v4863 = vand.u32 %v547, 4294901760
        %v4864 = vsub.f32 %v547, %v4863
        %v4865 = vand.u32 %v4864, 4294901760
        %v4866 = vsub.f32 %v4864, %v4865
        %v4867 = vand.u32 %v4866, 4294901760
        %4868 = vmatprep.subr.mxu0 %v4867
        %v4869 = vand.u32 %v546, 4294901760
        %v4870 = vsub.f32 %v546, %v4869
        %v4871 = vand.u32 %v4870, 4294901760
        %v4872 = vsub.f32 %v4870, %v4871
        %v4873 = vand.u32 %v4872, 4294901760
        %4874 = vmatpush1.msra.mxu0 %v4873
        %v4875 = vand.u32 %v549, 4294901760
        %v4876 = vsub.f32 %v549, %v4875
        %v4877 = vand.u32 %v4876, 4294901760
        %v4878 = vsub.f32 %v4876, %v4877
        %v4879 = vand.u32 %v4878, 4294901760
        %4880 = vmatprep.subr.mxu0 %v4879
        %v4881 = vand.u32 %v548, 4294901760
        %v4882 = vsub.f32 %v548, %v4881
        %v4883 = vand.u32 %v4882, 4294901760
        %v4884 = vsub.f32 %v4882, %v4883
        %v4885 = vand.u32 %v4884, 4294901760
        %4886 = vmatpush1.msra.mxu0 %v4885
        %v4887 = vand.u32 %v551, 4294901760
        %v4888 = vsub.f32 %v551, %v4887
        %v4889 = vand.u32 %v4888, 4294901760
        %v4890 = vsub.f32 %v4888, %v4889
        %v4891 = vand.u32 %v4890, 4294901760
        %4892 = vmatprep.subr.mxu0 %v4891
        %v4893 = vand.u32 %v550, 4294901760
        %v4894 = vsub.f32 %v550, %v4893
        %v4895 = vand.u32 %v4894, 4294901760
        %v4896 = vsub.f32 %v4894, %v4895
        %v4897 = vand.u32 %v4896, 4294901760
        %4898 = vmatpush1.msra.mxu0 %v4897
        %v4899 = vand.u32 %v553, 4294901760
        %v4900 = vsub.f32 %v553, %v4899
        %v4901 = vand.u32 %v4900, 4294901760
        %v4902 = vsub.f32 %v4900, %v4901
        %v4903 = vand.u32 %v4902, 4294901760
        %4904 = vmatprep.subr.mxu0 %v4903
        %v4905 = vand.u32 %v552, 4294901760
        %v4906 = vsub.f32 %v552, %v4905
        %v4907 = vand.u32 %v4906, 4294901760
        %v4908 = vsub.f32 %v4906, %v4907
        %v4909 = vand.u32 %v4908, 4294901760
        %4910 = vmatpush1.msra.mxu0 %v4909
        %v4911 = vand.u32 %v555, 4294901760
        %v4912 = vsub.f32 %v555, %v4911
        %v4913 = vand.u32 %v4912, 4294901760
        %v4914 = vsub.f32 %v4912, %v4913
        %v4915 = vand.u32 %v4914, 4294901760
        %4916 = vmatprep.subr.mxu0 %v4915
        %v4917 = vand.u32 %v554, 4294901760
        %v4918 = vsub.f32 %v554, %v4917
        %v4919 = vand.u32 %v4918, 4294901760
        %v4920 = vsub.f32 %v4918, %v4919
        %v4921 = vand.u32 %v4920, 4294901760
        %4922 = vmatpush1.msra.mxu0 %v4921
        %v4923 = vand.u32 %v557, 4294901760
        %v4924 = vsub.f32 %v557, %v4923
        %v4925 = vand.u32 %v4924, 4294901760
        %v4926 = vsub.f32 %v4924, %v4925
        %v4927 = vand.u32 %v4926, 4294901760
        %4928 = vmatprep.subr.mxu0 %v4927
        %v4929 = vand.u32 %v556, 4294901760
        %v4930 = vsub.f32 %v556, %v4929
        %v4931 = vand.u32 %v4930, 4294901760
        %v4932 = vsub.f32 %v4930, %v4931
        %v4933 = vand.u32 %v4932, 4294901760
        %4934 = vmatpush1.msra.mxu0 %v4933
        %v4935 = vand.u32 %v559, 4294901760
        %v4936 = vsub.f32 %v559, %v4935
        %v4937 = vand.u32 %v4936, 4294901760
        %v4938 = vsub.f32 %v4936, %v4937
        %v4939 = vand.u32 %v4938, 4294901760
        %4940 = vmatprep.subr.mxu0 %v4939
        %v4941 = vand.u32 %v558, 4294901760
        %v4942 = vsub.f32 %v558, %v4941
        %v4943 = vand.u32 %v4942, 4294901760
        %v4944 = vsub.f32 %v4942, %v4943
        %v4945 = vand.u32 %v4944, 4294901760
        %4946 = vmatpush1.msra.mxu0 %v4945
        %v4947 = vand.u32 %v561, 4294901760
        %v4948 = vsub.f32 %v561, %v4947
        %v4949 = vand.u32 %v4948, 4294901760
        %v4950 = vsub.f32 %v4948, %v4949
        %v4951 = vand.u32 %v4950, 4294901760
        %4952 = vmatprep.subr.mxu0 %v4951
        %v4953 = vand.u32 %v560, 4294901760
        %v4954 = vsub.f32 %v560, %v4953
        %v4955 = vand.u32 %v4954, 4294901760
        %v4956 = vsub.f32 %v4954, %v4955
        %v4957 = vand.u32 %v4956, 4294901760
        %4958 = vmatpush1.msra.mxu0 %v4957
        %v4959 = vand.u32 %v563, 4294901760
        %v4960 = vsub.f32 %v563, %v4959
        %v4961 = vand.u32 %v4960, 4294901760
        %v4962 = vsub.f32 %v4960, %v4961
        %v4963 = vand.u32 %v4962, 4294901760
        %4964 = vmatprep.subr.mxu0 %v4963
        %v4965 = vand.u32 %v562, 4294901760
        %v4966 = vsub.f32 %v562, %v4965
        %v4967 = vand.u32 %v4966, 4294901760
        %v4968 = vsub.f32 %v4966, %v4967
        %v4969 = vand.u32 %v4968, 4294901760
        %4970 = vmatpush1.msra.mxu0 %v4969
        %v4971 = vand.u32 %v565, 4294901760
        %v4972 = vsub.f32 %v565, %v4971
        %v4973 = vand.u32 %v4972, 4294901760
        %v4974 = vsub.f32 %v4972, %v4973
        %v4975 = vand.u32 %v4974, 4294901760
        %4976 = vmatprep.subr.mxu0 %v4975
        %v4977 = vand.u32 %v564, 4294901760
        %v4978 = vsub.f32 %v564, %v4977
        %v4979 = vand.u32 %v4978, 4294901760
        %v4980 = vsub.f32 %v4978, %v4979
        %v4981 = vand.u32 %v4980, 4294901760
        %4982 = vmatpush1.msra.mxu0 %v4981
        %v4983 = vand.u32 %v567, 4294901760
        %v4984 = vsub.f32 %v567, %v4983
        %v4985 = vand.u32 %v4984, 4294901760
        %v4986 = vsub.f32 %v4984, %v4985
        %v4987 = vand.u32 %v4986, 4294901760
        %4988 = vmatprep.subr.mxu0 %v4987
        %v4989 = vand.u32 %v566, 4294901760
        %v4990 = vsub.f32 %v566, %v4989
        %v4991 = vand.u32 %v4990, 4294901760
        %v4992 = vsub.f32 %v4990, %v4991
        %v4993 = vand.u32 %v4992, 4294901760
        %4994 = vmatpush1.msra.mxu0 %v4993
        %v4995 = vand.u32 %v569, 4294901760
        %v4996 = vsub.f32 %v569, %v4995
        %v4997 = vand.u32 %v4996, 4294901760
        %v4998 = vsub.f32 %v4996, %v4997
        %v4999 = vand.u32 %v4998, 4294901760
        %5000 = vmatprep.subr.mxu0 %v4999
        %v5001 = vand.u32 %v568, 4294901760
        %v5002 = vsub.f32 %v568, %v5001
        %v5003 = vand.u32 %v5002, 4294901760
        %v5004 = vsub.f32 %v5002, %v5003
        %v5005 = vand.u32 %v5004, 4294901760
        %5006 = vmatpush1.msra.mxu0 %v5005
        %v5007 = vand.u32 %v571, 4294901760
        %v5008 = vsub.f32 %v571, %v5007
        %v5009 = vand.u32 %v5008, 4294901760
        %v5010 = vsub.f32 %v5008, %v5009
        %v5011 = vand.u32 %v5010, 4294901760
        %5012 = vmatprep.subr.mxu0 %v5011
        %v5013 = vand.u32 %v570, 4294901760
        %v5014 = vsub.f32 %v570, %v5013
        %v5015 = vand.u32 %v5014, 4294901760
        %v5016 = vsub.f32 %v5014, %v5015
        %v5017 = vand.u32 %v5016, 4294901760
        %5018 = vmatpush1.msra.mxu0 %v5017
        %v5019 = vand.u32 %v573, 4294901760
        %v5020 = vsub.f32 %v573, %v5019
        %v5021 = vand.u32 %v5020, 4294901760
        %v5022 = vsub.f32 %v5020, %v5021
        %v5023 = vand.u32 %v5022, 4294901760
        %5024 = vmatprep.subr.mxu0 %v5023
        %v5025 = vand.u32 %v572, 4294901760
        %v5026 = vsub.f32 %v572, %v5025
        %v5027 = vand.u32 %v5026, 4294901760
        %v5028 = vsub.f32 %v5026, %v5027
        %v5029 = vand.u32 %v5028, 4294901760
        %5030 = vmatpush1.msra.mxu0 %v5029
        %v5031 = vand.u32 %v575, 4294901760
        %v5032 = vsub.f32 %v575, %v5031
        %v5033 = vand.u32 %v5032, 4294901760
        %v5034 = vsub.f32 %v5032, %v5033
        %v5035 = vand.u32 %v5034, 4294901760
        %5036 = vmatprep.subr.mxu0 %v5035
        %v5037 = vand.u32 %v574, 4294901760
        %v5038 = vsub.f32 %v574, %v5037
        %v5039 = vand.u32 %v5038, 4294901760
        %v5040 = vsub.f32 %v5038, %v5039
        %v5041 = vand.u32 %v5040, 4294901760
        %5042 = vmatpush1.msra.mxu0 %v5041
        %v5043 = vand.u32 %v577, 4294901760
        %v5044 = vsub.f32 %v577, %v5043
        %v5045 = vand.u32 %v5044, 4294901760
        %v5046 = vsub.f32 %v5044, %v5045
        %v5047 = vand.u32 %v5046, 4294901760
        %5048 = vmatprep.subr.mxu0 %v5047
        %v5049 = vand.u32 %v576, 4294901760
        %v5050 = vsub.f32 %v576, %v5049
        %v5051 = vand.u32 %v5050, 4294901760
        %v5052 = vsub.f32 %v5050, %v5051
        %v5053 = vand.u32 %v5052, 4294901760
        %5054 = vmatpush1.msra.mxu0 %v5053
        %v5055 = vand.u32 %v579, 4294901760
        %v5056 = vsub.f32 %v579, %v5055
        %v5057 = vand.u32 %v5056, 4294901760
        %v5058 = vsub.f32 %v5056, %v5057
        %v5059 = vand.u32 %v5058, 4294901760
        %5060 = vmatprep.subr.mxu0 %v5059
        %v5061 = vand.u32 %v578, 4294901760
        %v5062 = vsub.f32 %v578, %v5061
        %v5063 = vand.u32 %v5062, 4294901760
        %v5064 = vsub.f32 %v5062, %v5063
        %v5065 = vand.u32 %v5064, 4294901760
        %5066 = vmatpush1.msra.mxu0 %v5065
        %v5067 = vand.u32 %v581, 4294901760
        %v5068 = vsub.f32 %v581, %v5067
        %v5069 = vand.u32 %v5068, 4294901760
        %v5070 = vsub.f32 %v5068, %v5069
        %v5071 = vand.u32 %v5070, 4294901760
        %5072 = vmatprep.subr.mxu0 %v5071
        %v5073 = vand.u32 %v580, 4294901760
        %v5074 = vsub.f32 %v580, %v5073
        %v5075 = vand.u32 %v5074, 4294901760
        %v5076 = vsub.f32 %v5074, %v5075
        %v5077 = vand.u32 %v5076, 4294901760
        %5078 = vmatpush1.msra.mxu0 %v5077
        %v5079 = vand.u32 %v329, 4294901760
        %5080 = vmatprep.mubr.f32.mxu0 %v5079
        %v5081 = vand.u32 %v328, 4294901760
        %5082 = vmatmul.mubr.f32.gmra.mrb[0].mxu0 %v5081
        %v5083 = vpop.f32.mrb[0].mxu0
        %v5084 = vadd.f32 %v4531, %v5083
        %v5085 = vpop.f32.mrb[0].mxu0
        %v5086 = vadd.f32 %v4533, %v5085
        %v5087 = vand.u32 %v335, 4294901760
        %5088 = vmatprep.mubr.f32.mxu0 %v5087
        %v5089 = vand.u32 %v334, 4294901760
        %5090 = vmatmul.mubr.f32.gmra.mrb[0].mxu0 %v5089
        %v5091 = vpop.f32.mrb[0].mxu0
        %v5092 = vadd.f32 %v4547, %v5091
        %v5093 = vpop.f32.mrb[0].mxu0
        %v5094 = vadd.f32 %v4549, %v5093
        %v5095 = vand.u32 %v341, 4294901760
        %5096 = vmatprep.mubr.f32.mxu0 %v5095
        %v5097 = vand.u32 %v340, 4294901760
        %5098 = vmatmul.mubr.f32.gmra.mrb[0].mxu0 %v5097
        %v5099 = vpop.f32.mrb[0].mxu0
        %v5100 = vadd.f32 %v4563, %v5099
        %v5101 = vpop.f32.mrb[0].mxu0
        %v5102 = vadd.f32 %v4565, %v5101
        %v5103 = vand.u32 %v347, 4294901760
        %5104 = vmatprep.mubr.f32.mxu0 %v5103
        %v5105 = vand.u32 %v346, 4294901760
        %5106 = vmatmul.mubr.f32.gmra.mrb[0].mxu0 %v5105
        %v5107 = vpop.f32.mrb[0].mxu0
        %v5108 = vadd.f32 %v4579, %v5107
        %v5109 = vpop.f32.mrb[0].mxu0
        %v5110 = vadd.f32 %v4581, %v5109
        %v5111 = vand.u32 %v353, 4294901760
        %5112 = vmatprep.mubr.f32.mxu0 %v5111
        %v5113 = vand.u32 %v352, 4294901760
        %5114 = vmatmul.mubr.f32.gmra.mrb[0].mxu0 %v5113
        %v5115 = vpop.f32.mrb[0].mxu0
        %v5116 = vadd.f32 %v4595, %v5115
        %v5117 = vpop.f32.mrb[0].mxu0
        %v5118 = vadd.f32 %v4597, %v5117
        %v5119 = vand.u32 %v359, 4294901760
        %5120 = vmatprep.mubr.f32.mxu0 %v5119
        %v5121 = vand.u32 %v358, 4294901760
        %5122 = vmatmul.mubr.f32.gmra.mrb[0].mxu0 %v5121
        %v5123 = vpop.f32.mrb[0].mxu0
        %v5124 = vadd.f32 %v4611, %v5123
        %v5125 = vpop.f32.mrb[0].mxu0
        %v5126 = vadd.f32 %v4613, %v5125
        %v5127 = vand.u32 %v365, 4294901760
        %5128 = vmatprep.mubr.f32.mxu0 %v5127
        %v5129 = vand.u32 %v364, 4294901760
        %5130 = vmatmul.mubr.f32.gmra.mrb[0].mxu0 %v5129
        %v5131 = vpop.f32.mrb[0].mxu0
        %v5132 = vadd.f32 %v4627, %v5131
        %v5133 = vpop.f32.mrb[0].mxu0
        %v5134 = vadd.f32 %v4629, %v5133
        %v5135 = vand.u32 %v371, 4294901760
        %5136 = vmatprep.mubr.f32.mxu0 %v5135
        %v5137 = vand.u32 %v370, 4294901760
        %5138 = vmatmul.mubr.f32.gmra.mrb[0].mxu0 %v5137
        %v5139 = vpop.f32.mrb[0].mxu0
        %v5140 = vadd.f32 %v4643, %v5139
        %v5141 = vpop.f32.mrb[0].mxu0
        %v5142 = vadd.f32 %v4645, %v5141
        %v5143 = vand.u32 %v377, 4294901760
        %5144 = vmatprep.mubr.f32.mxu0 %v5143
        %v5145 = vand.u32 %v376, 4294901760
        %5146 = vmatmul.mubr.f32.gmra.mrb[0].mxu0 %v5145
        %v5147 = vpop.f32.mrb[0].mxu0
        %v5148 = vadd.f32 %v4659, %v5147
        %v5149 = vpop.f32.mrb[0].mxu0
        %v5150 = vadd.f32 %v4661, %v5149
        %v5151 = vand.u32 %v383, 4294901760
        %5152 = vmatprep.mubr.f32.mxu0 %v5151
        %v5153 = vand.u32 %v382, 4294901760
        %5154 = vmatmul.mubr.f32.gmra.mrb[0].mxu0 %v5153
        %v5155 = vpop.f32.mrb[0].mxu0
        %v5156 = vadd.f32 %v4675, %v5155
        %v5157 = vpop.f32.mrb[0].mxu0
        %v5158 = vadd.f32 %v4677, %v5157
        %v5159 = vand.u32 %v389, 4294901760
        %5160 = vmatprep.mubr.f32.mxu0 %v5159
        %v5161 = vand.u32 %v388, 4294901760
        %5162 = vmatmul.mubr.f32.gmra.mrb[0].mxu0 %v5161
        %v5163 = vpop.f32.mrb[0].mxu0
        %v5164 = vadd.f32 %v4691, %v5163
        %v5165 = vpop.f32.mrb[0].mxu0
        %v5166 = vadd.f32 %v4693, %v5165
        %5167 = vdwg.mxu0
        %v5168 = vand.u32 %v519, 4294901760
        %v5169 = vsub.f32 %v519, %v5168
        %5170 = vmatprep.subr.mxu0 %v5169
        %v5171 = vand.u32 %v518, 4294901760
        %v5172 = vsub.f32 %v518, %v5171
        %5173 = vmatpush1.msra.mxu0 %v5172
        %v5174 = vand.u32 %v521, 4294901760
        %v5175 = vsub.f32 %v521, %v5174
        %5176 = vmatprep.subr.mxu0 %v5175
        %v5177 = vand.u32 %v520, 4294901760
        %v5178 = vsub.f32 %v520, %v5177
        %5179 = vmatpush1.msra.mxu0 %v5178
        %v5180 = vand.u32 %v523, 4294901760
        %v5181 = vsub.f32 %v523, %v5180
        %5182 = vmatprep.subr.mxu0 %v5181
        %v5183 = vand.u32 %v522, 4294901760
        %v5184 = vsub.f32 %v522, %v5183
        %5185 = vmatpush1.msra.mxu0 %v5184
        %v5186 = vand.u32 %v525, 4294901760
        %v5187 = vsub.f32 %v525, %v5186
        %5188 = vmatprep.subr.mxu0 %v5187
        %v5189 = vand.u32 %v524, 4294901760
        %v5190 = vsub.f32 %v524, %v5189
        %5191 = vmatpush1.msra.mxu0 %v5190
        %v5192 = vand.u32 %v527, 4294901760
        %v5193 = vsub.f32 %v527, %v5192
        %5194 = vmatprep.subr.mxu0 %v5193
        %v5195 = vand.u32 %v526, 4294901760
        %v5196 = vsub.f32 %v526, %v5195
        %5197 = vmatpush1.msra.mxu0 %v5196
        %v5198 = vand.u32 %v529, 4294901760
        %v5199 = vsub.f32 %v529, %v5198
        %5200 = vmatprep.subr.mxu0 %v5199
        %v5201 = vand.u32 %v528, 4294901760
        %v5202 = vsub.f32 %v528, %v5201
        %5203 = vmatpush1.msra.mxu0 %v5202
        %v5204 = vand.u32 %v531, 4294901760
        %v5205 = vsub.f32 %v531, %v5204
        %5206 = vmatprep.subr.mxu0 %v5205
        %v5207 = vand.u32 %v530, 4294901760
        %v5208 = vsub.f32 %v530, %v5207
        %5209 = vmatpush1.msra.mxu0 %v5208
        %v5210 = vand.u32 %v533, 4294901760
        %v5211 = vsub.f32 %v533, %v5210
        %5212 = vmatprep.subr.mxu0 %v5211
        %v5213 = vand.u32 %v532, 4294901760
        %v5214 = vsub.f32 %v532, %v5213
        %5215 = vmatpush1.msra.mxu0 %v5214
        %v5216 = vand.u32 %v535, 4294901760
        %v5217 = vsub.f32 %v535, %v5216
        %5218 = vmatprep.subr.mxu0 %v5217
        %v5219 = vand.u32 %v534, 4294901760
        %v5220 = vsub.f32 %v534, %v5219
        %5221 = vmatpush1.msra.mxu0 %v5220
        %v5222 = vand.u32 %v537, 4294901760
        %v5223 = vsub.f32 %v537, %v5222
        %5224 = vmatprep.subr.mxu0 %v5223
        %v5225 = vand.u32 %v536, 4294901760
        %v5226 = vsub.f32 %v536, %v5225
        %5227 = vmatpush1.msra.mxu0 %v5226
        %v5228 = vand.u32 %v539, 4294901760
        %v5229 = vsub.f32 %v539, %v5228
        %5230 = vmatprep.subr.mxu0 %v5229
        %v5231 = vand.u32 %v538, 4294901760
        %v5232 = vsub.f32 %v538, %v5231
        %5233 = vmatpush1.msra.mxu0 %v5232
        %v5234 = vand.u32 %v541, 4294901760
        %v5235 = vsub.f32 %v541, %v5234
        %5236 = vmatprep.subr.mxu0 %v5235
        %v5237 = vand.u32 %v540, 4294901760
        %v5238 = vsub.f32 %v540, %v5237
        %5239 = vmatpush1.msra.mxu0 %v5238
        %v5240 = vand.u32 %v543, 4294901760
        %v5241 = vsub.f32 %v543, %v5240
        %5242 = vmatprep.subr.mxu0 %v5241
        %v5243 = vand.u32 %v542, 4294901760
        %v5244 = vsub.f32 %v542, %v5243
        %5245 = vmatpush1.msra.mxu0 %v5244
        %v5246 = vand.u32 %v545, 4294901760
        %v5247 = vsub.f32 %v545, %v5246
        %5248 = vmatprep.subr.mxu0 %v5247
        %v5249 = vand.u32 %v544, 4294901760
        %v5250 = vsub.f32 %v544, %v5249
        %5251 = vmatpush1.msra.mxu0 %v5250
        %v5252 = vand.u32 %v547, 4294901760
        %v5253 = vsub.f32 %v547, %v5252
        %5254 = vmatprep.subr.mxu0 %v5253
        %v5255 = vand.u32 %v546, 4294901760
        %v5256 = vsub.f32 %v546, %v5255
        %5257 = vmatpush1.msra.mxu0 %v5256
        %v5258 = vand.u32 %v549, 4294901760
        %v5259 = vsub.f32 %v549, %v5258
        %5260 = vmatprep.subr.mxu0 %v5259
        %v5261 = vand.u32 %v548, 4294901760
        %v5262 = vsub.f32 %v548, %v5261
        %5263 = vmatpush1.msra.mxu0 %v5262
        %v5264 = vand.u32 %v551, 4294901760
        %v5265 = vsub.f32 %v551, %v5264
        %5266 = vmatprep.subr.mxu0 %v5265
        %v5267 = vand.u32 %v550, 4294901760
        %v5268 = vsub.f32 %v550, %v5267
        %5269 = vmatpush1.msra.mxu0 %v5268
        %v5270 = vand.u32 %v553, 4294901760
        %v5271 = vsub.f32 %v553, %v5270
        %5272 = vmatprep.subr.mxu0 %v5271
        %v5273 = vand.u32 %v552, 4294901760
        %v5274 = vsub.f32 %v552, %v5273
        %5275 = vmatpush1.msra.mxu0 %v5274
        %v5276 = vand.u32 %v555, 4294901760
        %v5277 = vsub.f32 %v555, %v5276
        %5278 = vmatprep.subr.mxu0 %v5277
        %v5279 = vand.u32 %v554, 4294901760
        %v5280 = vsub.f32 %v554, %v5279
        %5281 = vmatpush1.msra.mxu0 %v5280
        %v5282 = vand.u32 %v557, 4294901760
        %v5283 = vsub.f32 %v557, %v5282
        %5284 = vmatprep.subr.mxu0 %v5283
        %v5285 = vand.u32 %v556, 4294901760
        %v5286 = vsub.f32 %v556, %v5285
        %5287 = vmatpush1.msra.mxu0 %v5286
        %v5288 = vand.u32 %v559, 4294901760
        %v5289 = vsub.f32 %v559, %v5288
        %5290 = vmatprep.subr.mxu0 %v5289
        %v5291 = vand.u32 %v558, 4294901760
        %v5292 = vsub.f32 %v558, %v5291
        %5293 = vmatpush1.msra.mxu0 %v5292
        %v5294 = vand.u32 %v561, 4294901760
        %v5295 = vsub.f32 %v561, %v5294
        %5296 = vmatprep.subr.mxu0 %v5295
        %v5297 = vand.u32 %v560, 4294901760
        %v5298 = vsub.f32 %v560, %v5297
        %5299 = vmatpush1.msra.mxu0 %v5298
        %v5300 = vand.u32 %v563, 4294901760
        %v5301 = vsub.f32 %v563, %v5300
        %5302 = vmatprep.subr.mxu0 %v5301
        %v5303 = vand.u32 %v562, 4294901760
        %v5304 = vsub.f32 %v562, %v5303
        %5305 = vmatpush1.msra.mxu0 %v5304
        %v5306 = vand.u32 %v565, 4294901760
        %v5307 = vsub.f32 %v565, %v5306
        %5308 = vmatprep.subr.mxu0 %v5307
        %v5309 = vand.u32 %v564, 4294901760
        %v5310 = vsub.f32 %v564, %v5309
        %5311 = vmatpush1.msra.mxu0 %v5310
        %v5312 = vand.u32 %v567, 4294901760
        %v5313 = vsub.f32 %v567, %v5312
        %5314 = vmatprep.subr.mxu0 %v5313
        %v5315 = vand.u32 %v566, 4294901760
        %v5316 = vsub.f32 %v566, %v5315
        %5317 = vmatpush1.msra.mxu0 %v5316
        %v5318 = vand.u32 %v569, 4294901760
        %v5319 = vsub.f32 %v569, %v5318
        %5320 = vmatprep.subr.mxu0 %v5319
        %v5321 = vand.u32 %v568, 4294901760
        %v5322 = vsub.f32 %v568, %v5321
        %5323 = vmatpush1.msra.mxu0 %v5322
        %v5324 = vand.u32 %v571, 4294901760
        %v5325 = vsub.f32 %v571, %v5324
        %5326 = vmatprep.subr.mxu0 %v5325
        %v5327 = vand.u32 %v570, 4294901760
        %v5328 = vsub.f32 %v570, %v5327
        %5329 = vmatpush1.msra.mxu0 %v5328
        %v5330 = vand.u32 %v573, 4294901760
        %v5331 = vsub.f32 %v573, %v5330
        %5332 = vmatprep.subr.mxu0 %v5331
        %v5333 = vand.u32 %v572, 4294901760
        %v5334 = vsub.f32 %v572, %v5333
        %5335 = vmatpush1.msra.mxu0 %v5334
        %v5336 = vand.u32 %v575, 4294901760
        %v5337 = vsub.f32 %v575, %v5336
        %5338 = vmatprep.subr.mxu0 %v5337
        %v5339 = vand.u32 %v574, 4294901760
        %v5340 = vsub.f32 %v574, %v5339
        %5341 = vmatpush1.msra.mxu0 %v5340
        %v5342 = vand.u32 %v577, 4294901760
        %v5343 = vsub.f32 %v577, %v5342
        %5344 = vmatprep.subr.mxu0 %v5343
        %v5345 = vand.u32 %v576, 4294901760
        %v5346 = vsub.f32 %v576, %v5345
        %5347 = vmatpush1.msra.mxu0 %v5346
        %v5348 = vand.u32 %v579, 4294901760
        %v5349 = vsub.f32 %v579, %v5348
        %5350 = vmatprep.subr.mxu0 %v5349
        %v5351 = vand.u32 %v578, 4294901760
        %v5352 = vsub.f32 %v578, %v5351
        %5353 = vmatpush1.msra.mxu0 %v5352
        %v5354 = vand.u32 %v581, 4294901760
        %v5355 = vsub.f32 %v581, %v5354
        %5356 = vmatprep.subr.mxu0 %v5355
        %v5357 = vand.u32 %v580, 4294901760
        %v5358 = vsub.f32 %v580, %v5357
        %5359 = vmatpush1.msra.mxu0 %v5358
        %v5360 = vand.u32 %v329, 4294901760
        %v5361 = vsub.f32 %v329, %v5360
        %5362 = vmatprep.mubr.f32.mxu0 %v5361
        %v5363 = vand.u32 %v328, 4294901760
        %v5364 = vsub.f32 %v328, %v5363
        %5365 = vmatmul.mubr.f32.gmra.mrb[0].mxu0 %v5364
        %v5366 = vpop.f32.mrb[0].mxu0
        %v5367 = vadd.f32 %v5084, %v5366
        %v5368 = vpop.f32.mrb[0].mxu0
        %v5369 = vadd.f32 %v5086, %v5368
        %v5370 = vand.u32 %v335, 4294901760
        %v5371 = vsub.f32 %v335, %v5370
        %5372 = vmatprep.mubr.f32.mxu0 %v5371
        %v5373 = vand.u32 %v334, 4294901760
        %v5374 = vsub.f32 %v334, %v5373
        %5375 = vmatmul.mubr.f32.gmra.mrb[0].mxu0 %v5374
        %v5376 = vpop.f32.mrb[0].mxu0
        %v5377 = vadd.f32 %v5092, %v5376
        %v5378 = vpop.f32.mrb[0].mxu0
        %v5379 = vadd.f32 %v5094, %v5378
        %v5380 = vand.u32 %v341, 4294901760
        %v5381 = vsub.f32 %v341, %v5380
        %5382 = vmatprep.mubr.f32.mxu0 %v5381
        %v5383 = vand.u32 %v340, 4294901760
        %v5384 = vsub.f32 %v340, %v5383
        %5385 = vmatmul.mubr.f32.gmra.mrb[0].mxu0 %v5384
        %v5386 = vpop.f32.mrb[0].mxu0
        %v5387 = vadd.f32 %v5100, %v5386
        %v5388 = vpop.f32.mrb[0].mxu0
        %v5389 = vadd.f32 %v5102, %v5388
        %v5390 = vand.u32 %v347, 4294901760
        %v5391 = vsub.f32 %v347, %v5390
        %5392 = vmatprep.mubr.f32.mxu0 %v5391
        %v5393 = vand.u32 %v346, 4294901760
        %v5394 = vsub.f32 %v346, %v5393
        %5395 = vmatmul.mubr.f32.gmra.mrb[0].mxu0 %v5394
        %v5396 = vpop.f32.mrb[0].mxu0
        %v5397 = vadd.f32 %v5108, %v5396
        %v5398 = vpop.f32.mrb[0].mxu0
        %v5399 = vadd.f32 %v5110, %v5398
        %v5400 = vand.u32 %v353, 4294901760
        %v5401 = vsub.f32 %v353, %v5400
        %5402 = vmatprep.mubr.f32.mxu0 %v5401
        %v5403 = vand.u32 %v352, 4294901760
        %v5404 = vsub.f32 %v352, %v5403
        %5405 = vmatmul.mubr.f32.gmra.mrb[0].mxu0 %v5404
        %v5406 = vpop.f32.mrb[0].mxu0
        %v5407 = vadd.f32 %v5116, %v5406
        %v5408 = vpop.f32.mrb[0].mxu0
        %v5409 = vadd.f32 %v5118, %v5408
        %v5410 = vand.u32 %v359, 4294901760
        %v5411 = vsub.f32 %v359, %v5410
        %5412 = vmatprep.mubr.f32.mxu0 %v5411
        %v5413 = vand.u32 %v358, 4294901760
        %v5414 = vsub.f32 %v358, %v5413
        %5415 = vmatmul.mubr.f32.gmra.mrb[0].mxu0 %v5414
        %v5416 = vpop.f32.mrb[0].mxu0
        %v5417 = vadd.f32 %v5124, %v5416
        %v5418 = vpop.f32.mrb[0].mxu0
        %v5419 = vadd.f32 %v5126, %v5418
        %v5420 = vand.u32 %v365, 4294901760
        %v5421 = vsub.f32 %v365, %v5420
        %5422 = vmatprep.mubr.f32.mxu0 %v5421
        %v5423 = vand.u32 %v364, 4294901760
        %v5424 = vsub.f32 %v364, %v5423
        %5425 = vmatmul.mubr.f32.gmra.mrb[0].mxu0 %v5424
        %v5426 = vpop.f32.mrb[0].mxu0
        %v5427 = vadd.f32 %v5132, %v5426
        %v5428 = vpop.f32.mrb[0].mxu0
        %v5429 = vadd.f32 %v5134, %v5428
        %v5430 = vand.u32 %v371, 4294901760
        %v5431 = vsub.f32 %v371, %v5430
        %5432 = vmatprep.mubr.f32.mxu0 %v5431
        %v5433 = vand.u32 %v370, 4294901760
        %v5434 = vsub.f32 %v370, %v5433
        %5435 = vmatmul.mubr.f32.gmra.mrb[0].mxu0 %v5434
        %v5436 = vpop.f32.mrb[0].mxu0
        %v5437 = vadd.f32 %v5140, %v5436
        %v5438 = vpop.f32.mrb[0].mxu0
        %v5439 = vadd.f32 %v5142, %v5438
        %v5440 = vand.u32 %v377, 4294901760
        %v5441 = vsub.f32 %v377, %v5440
        %5442 = vmatprep.mubr.f32.mxu0 %v5441
        %v5443 = vand.u32 %v376, 4294901760
        %v5444 = vsub.f32 %v376, %v5443
        %5445 = vmatmul.mubr.f32.gmra.mrb[0].mxu0 %v5444
        %v5446 = vpop.f32.mrb[0].mxu0
        %v5447 = vadd.f32 %v5148, %v5446
        %v5448 = vpop.f32.mrb[0].mxu0
        %v5449 = vadd.f32 %v5150, %v5448
        %v5450 = vand.u32 %v383, 4294901760
        %v5451 = vsub.f32 %v383, %v5450
        %5452 = vmatprep.mubr.f32.mxu0 %v5451
        %v5453 = vand.u32 %v382, 4294901760
        %v5454 = vsub.f32 %v382, %v5453
        %5455 = vmatmul.mubr.f32.gmra.mrb[0].mxu0 %v5454
        %v5456 = vpop.f32.mrb[0].mxu0
        %v5457 = vadd.f32 %v5156, %v5456
        %v5458 = vpop.f32.mrb[0].mxu0
        %v5459 = vadd.f32 %v5158, %v5458
        %v5460 = vand.u32 %v389, 4294901760
        %v5461 = vsub.f32 %v389, %v5460
        %5462 = vmatprep.mubr.f32.mxu0 %v5461
        %v5463 = vand.u32 %v388, 4294901760
        %v5464 = vsub.f32 %v388, %v5463
        %5465 = vmatmul.mubr.f32.gmra.mrb[0].mxu0 %v5464
        %v5466 = vpop.f32.mrb[0].mxu0
        %v5467 = vadd.f32 %v5164, %v5466
        %v5468 = vpop.f32.mrb[0].mxu0
        %v5469 = vadd.f32 %v5166, %v5468
        %5470 = vdwg.mxu0
        %v5471 = vand.u32 %v519, 4294901760
        %5472 = vmatprep.subr.mxu0 %v5471
        %v5473 = vand.u32 %v518, 4294901760
        %5474 = vmatpush1.msra.mxu0 %v5473
        %v5475 = vand.u32 %v521, 4294901760
        %5476 = vmatprep.subr.mxu0 %v5475
        %v5477 = vand.u32 %v520, 4294901760
        %5478 = vmatpush1.msra.mxu0 %v5477
        %v5479 = vand.u32 %v523, 4294901760
        %5480 = vmatprep.subr.mxu0 %v5479
        %v5481 = vand.u32 %v522, 4294901760
        %5482 = vmatpush1.msra.mxu0 %v5481
        %v5483 = vand.u32 %v525, 4294901760
        %5484 = vmatprep.subr.mxu0 %v5483
        %v5485 = vand.u32 %v524, 4294901760
        %5486 = vmatpush1.msra.mxu0 %v5485
        %v5487 = vand.u32 %v527, 4294901760
        %5488 = vmatprep.subr.mxu0 %v5487
        %v5489 = vand.u32 %v526, 4294901760
        %5490 = vmatpush1.msra.mxu0 %v5489
        %v5491 = vand.u32 %v529, 4294901760
        %5492 = vmatprep.subr.mxu0 %v5491
        %v5493 = vand.u32 %v528, 4294901760
        %5494 = vmatpush1.msra.mxu0 %v5493
        %v5495 = vand.u32 %v531, 4294901760
        %5496 = vmatprep.subr.mxu0 %v5495
        %v5497 = vand.u32 %v530, 4294901760
        %5498 = vmatpush1.msra.mxu0 %v5497
        %v5499 = vand.u32 %v533, 4294901760
        %5500 = vmatprep.subr.mxu0 %v5499
        %v5501 = vand.u32 %v532, 4294901760
        %5502 = vmatpush1.msra.mxu0 %v5501
        %v5503 = vand.u32 %v535, 4294901760
        %5504 = vmatprep.subr.mxu0 %v5503
        %v5505 = vand.u32 %v534, 4294901760
        %5506 = vmatpush1.msra.mxu0 %v5505
        %v5507 = vand.u32 %v537, 4294901760
        %5508 = vmatprep.subr.mxu0 %v5507
        %v5509 = vand.u32 %v536, 4294901760
        %5510 = vmatpush1.msra.mxu0 %v5509
        %v5511 = vand.u32 %v539, 4294901760
        %5512 = vmatprep.subr.mxu0 %v5511
        %v5513 = vand.u32 %v538, 4294901760
        %5514 = vmatpush1.msra.mxu0 %v5513
        %v5515 = vand.u32 %v541, 4294901760
        %5516 = vmatprep.subr.mxu0 %v5515
        %v5517 = vand.u32 %v540, 4294901760
        %5518 = vmatpush1.msra.mxu0 %v5517
        %v5519 = vand.u32 %v543, 4294901760
        %5520 = vmatprep.subr.mxu0 %v5519
        %v5521 = vand.u32 %v542, 4294901760
        %5522 = vmatpush1.msra.mxu0 %v5521
        %v5523 = vand.u32 %v545, 4294901760
        %5524 = vmatprep.subr.mxu0 %v5523
        %v5525 = vand.u32 %v544, 4294901760
        %5526 = vmatpush1.msra.mxu0 %v5525
        %v5527 = vand.u32 %v547, 4294901760
        %5528 = vmatprep.subr.mxu0 %v5527
        %v5529 = vand.u32 %v546, 4294901760
        %5530 = vmatpush1.msra.mxu0 %v5529
        %v5531 = vand.u32 %v549, 4294901760
        %5532 = vmatprep.subr.mxu0 %v5531
        %v5533 = vand.u32 %v548, 4294901760
        %5534 = vmatpush1.msra.mxu0 %v5533
        %v5535 = vand.u32 %v551, 4294901760
        %5536 = vmatprep.subr.mxu0 %v5535
        %v5537 = vand.u32 %v550, 4294901760
        %5538 = vmatpush1.msra.mxu0 %v5537
        %v5539 = vand.u32 %v553, 4294901760
        %5540 = vmatprep.subr.mxu0 %v5539
        %v5541 = vand.u32 %v552, 4294901760
        %5542 = vmatpush1.msra.mxu0 %v5541
        %v5543 = vand.u32 %v555, 4294901760
        %5544 = vmatprep.subr.mxu0 %v5543
        %v5545 = vand.u32 %v554, 4294901760
        %5546 = vmatpush1.msra.mxu0 %v5545
        %v5547 = vand.u32 %v557, 4294901760
        %5548 = vmatprep.subr.mxu0 %v5547
        %v5549 = vand.u32 %v556, 4294901760
        %5550 = vmatpush1.msra.mxu0 %v5549
        %v5551 = vand.u32 %v559, 4294901760
        %5552 = vmatprep.subr.mxu0 %v5551
        %v5553 = vand.u32 %v558, 4294901760
        %5554 = vmatpush1.msra.mxu0 %v5553
        %v5555 = vand.u32 %v561, 4294901760
        %5556 = vmatprep.subr.mxu0 %v5555
        %v5557 = vand.u32 %v560, 4294901760
        %5558 = vmatpush1.msra.mxu0 %v5557
        %v5559 = vand.u32 %v563, 4294901760
        %5560 = vmatprep.subr.mxu0 %v5559
        %v5561 = vand.u32 %v562, 4294901760
        %5562 = vmatpush1.msra.mxu0 %v5561
        %v5563 = vand.u32 %v565, 4294901760
        %5564 = vmatprep.subr.mxu0 %v5563
        %v5565 = vand.u32 %v564, 4294901760
        %5566 = vmatpush1.msra.mxu0 %v5565
        %v5567 = vand.u32 %v567, 4294901760
        %5568 = vmatprep.subr.mxu0 %v5567
        %v5569 = vand.u32 %v566, 4294901760
        %5570 = vmatpush1.msra.mxu0 %v5569
        %v5571 = vand.u32 %v569, 4294901760
        %5572 = vmatprep.subr.mxu0 %v5571
        %v5573 = vand.u32 %v568, 4294901760
        %5574 = vmatpush1.msra.mxu0 %v5573
        %v5575 = vand.u32 %v571, 4294901760
        %5576 = vmatprep.subr.mxu0 %v5575
        %v5577 = vand.u32 %v570, 4294901760
        %5578 = vmatpush1.msra.mxu0 %v5577
        %v5579 = vand.u32 %v573, 4294901760
        %5580 = vmatprep.subr.mxu0 %v5579
        %v5581 = vand.u32 %v572, 4294901760
        %5582 = vmatpush1.msra.mxu0 %v5581
        %v5583 = vand.u32 %v575, 4294901760
        %5584 = vmatprep.subr.mxu0 %v5583
        %v5585 = vand.u32 %v574, 4294901760
        %5586 = vmatpush1.msra.mxu0 %v5585
        %v5587 = vand.u32 %v577, 4294901760
        %5588 = vmatprep.subr.mxu0 %v5587
        %v5589 = vand.u32 %v576, 4294901760
        %5590 = vmatpush1.msra.mxu0 %v5589
        %v5591 = vand.u32 %v579, 4294901760
        %5592 = vmatprep.subr.mxu0 %v5591
        %v5593 = vand.u32 %v578, 4294901760
        %5594 = vmatpush1.msra.mxu0 %v5593
        %v5595 = vand.u32 %v581, 4294901760
        %5596 = vmatprep.subr.mxu0 %v5595
        %v5597 = vand.u32 %v580, 4294901760
        %5598 = vmatpush1.msra.mxu0 %v5597
        %v5599 = vand.u32 %v329, 4294901760
        %v5600 = vsub.f32 %v329, %v5599
        %v5601 = vand.u32 %v5600, 4294901760
        %5602 = vmatprep.mubr.f32.mxu0 %v5601
        %v5603 = vand.u32 %v328, 4294901760
        %v5604 = vsub.f32 %v328, %v5603
        %v5605 = vand.u32 %v5604, 4294901760
        %5606 = vmatmul.mubr.f32.gmra.mrb[0].mxu0 %v5605
        %v5607 = vpop.f32.mrb[0].mxu0
        %v5608 = vadd.f32 %v5367, %v5607
        %v5609 = vpop.f32.mrb[0].mxu0
        %v5610 = vadd.f32 %v5369, %v5609
        %v5611 = vand.u32 %v335, 4294901760
        %v5612 = vsub.f32 %v335, %v5611
        %v5613 = vand.u32 %v5612, 4294901760
        %5614 = vmatprep.mubr.f32.mxu0 %v5613
        %v5615 = vand.u32 %v334, 4294901760
        %v5616 = vsub.f32 %v334, %v5615
        %v5617 = vand.u32 %v5616, 4294901760
        %5618 = vmatmul.mubr.f32.gmra.mrb[0].mxu0 %v5617
        %v5619 = vpop.f32.mrb[0].mxu0
        %v5620 = vadd.f32 %v5377, %v5619
        %v5621 = vpop.f32.mrb[0].mxu0
        %v5622 = vadd.f32 %v5379, %v5621
        %v5623 = vand.u32 %v341, 4294901760
        %v5624 = vsub.f32 %v341, %v5623
        %v5625 = vand.u32 %v5624, 4294901760
        %5626 = vmatprep.mubr.f32.mxu0 %v5625
        %v5627 = vand.u32 %v340, 4294901760
        %v5628 = vsub.f32 %v340, %v5627
        %v5629 = vand.u32 %v5628, 4294901760
        %5630 = vmatmul.mubr.f32.gmra.mrb[0].mxu0 %v5629
        %v5631 = vpop.f32.mrb[0].mxu0
        %v5632 = vadd.f32 %v5387, %v5631
        %v5633 = vpop.f32.mrb[0].mxu0
        %v5634 = vadd.f32 %v5389, %v5633
        %v5635 = vand.u32 %v347, 4294901760
        %v5636 = vsub.f32 %v347, %v5635
        %v5637 = vand.u32 %v5636, 4294901760
        %5638 = vmatprep.mubr.f32.mxu0 %v5637
        %v5639 = vand.u32 %v346, 4294901760
        %v5640 = vsub.f32 %v346, %v5639
        %v5641 = vand.u32 %v5640, 4294901760
        %5642 = vmatmul.mubr.f32.gmra.mrb[0].mxu0 %v5641
        %v5643 = vpop.f32.mrb[0].mxu0
        %v5644 = vadd.f32 %v5397, %v5643
        %v5645 = vpop.f32.mrb[0].mxu0
        %v5646 = vadd.f32 %v5399, %v5645
        %v5647 = vand.u32 %v353, 4294901760
        %v5648 = vsub.f32 %v353, %v5647
        %v5649 = vand.u32 %v5648, 4294901760
        %5650 = vmatprep.mubr.f32.mxu0 %v5649
        %v5651 = vand.u32 %v352, 4294901760
        %v5652 = vsub.f32 %v352, %v5651
        %v5653 = vand.u32 %v5652, 4294901760
        %5654 = vmatmul.mubr.f32.gmra.mrb[0].mxu0 %v5653
        %v5655 = vpop.f32.mrb[0].mxu0
        %v5656 = vadd.f32 %v5407, %v5655
        %v5657 = vpop.f32.mrb[0].mxu0
        %v5658 = vadd.f32 %v5409, %v5657
        %v5659 = vand.u32 %v359, 4294901760
        %v5660 = vsub.f32 %v359, %v5659
        %v5661 = vand.u32 %v5660, 4294901760
        %5662 = vmatprep.mubr.f32.mxu0 %v5661
        %v5663 = vand.u32 %v358, 4294901760
        %v5664 = vsub.f32 %v358, %v5663
        %v5665 = vand.u32 %v5664, 4294901760
        %5666 = vmatmul.mubr.f32.gmra.mrb[0].mxu0 %v5665
        %v5667 = vpop.f32.mrb[0].mxu0
        %v5668 = vadd.f32 %v5417, %v5667
        %v5669 = vpop.f32.mrb[0].mxu0
        %v5670 = vadd.f32 %v5419, %v5669
        %v5671 = vand.u32 %v365, 4294901760
        %v5672 = vsub.f32 %v365, %v5671
        %v5673 = vand.u32 %v5672, 4294901760
        %5674 = vmatprep.mubr.f32.mxu0 %v5673
        %v5675 = vand.u32 %v364, 4294901760
        %v5676 = vsub.f32 %v364, %v5675
        %v5677 = vand.u32 %v5676, 4294901760
        %5678 = vmatmul.mubr.f32.gmra.mrb[0].mxu0 %v5677
        %v5679 = vpop.f32.mrb[0].mxu0
        %v5680 = vadd.f32 %v5427, %v5679
        %v5681 = vpop.f32.mrb[0].mxu0
        %v5682 = vadd.f32 %v5429, %v5681
        %v5683 = vand.u32 %v371, 4294901760
        %v5684 = vsub.f32 %v371, %v5683
        %v5685 = vand.u32 %v5684, 4294901760
        %5686 = vmatprep.mubr.f32.mxu0 %v5685
        %v5687 = vand.u32 %v370, 4294901760
        %v5688 = vsub.f32 %v370, %v5687
        %v5689 = vand.u32 %v5688, 4294901760
        %5690 = vmatmul.mubr.f32.gmra.mrb[0].mxu0 %v5689
        %v5691 = vpop.f32.mrb[0].mxu0
        %v5692 = vadd.f32 %v5437, %v5691
        %v5693 = vpop.f32.mrb[0].mxu0
        %v5694 = vadd.f32 %v5439, %v5693
        %v5695 = vand.u32 %v377, 4294901760
        %v5696 = vsub.f32 %v377, %v5695
        %v5697 = vand.u32 %v5696, 4294901760
        %5698 = vmatprep.mubr.f32.mxu0 %v5697
        %v5699 = vand.u32 %v376, 4294901760
        %v5700 = vsub.f32 %v376, %v5699
        %v5701 = vand.u32 %v5700, 4294901760
        %5702 = vmatmul.mubr.f32.gmra.mrb[0].mxu0 %v5701
        %v5703 = vpop.f32.mrb[0].mxu0
        %v5704 = vadd.f32 %v5447, %v5703
        %v5705 = vpop.f32.mrb[0].mxu0
        %v5706 = vadd.f32 %v5449, %v5705
        %v5707 = vand.u32 %v383, 4294901760
        %v5708 = vsub.f32 %v383, %v5707
        %v5709 = vand.u32 %v5708, 4294901760
        %5710 = vmatprep.mubr.f32.mxu0 %v5709
        %v5711 = vand.u32 %v382, 4294901760
        %v5712 = vsub.f32 %v382, %v5711
        %v5713 = vand.u32 %v5712, 4294901760
        %5714 = vmatmul.mubr.f32.gmra.mrb[0].mxu0 %v5713
        %v5715 = vpop.f32.mrb[0].mxu0
        %v5716 = vadd.f32 %v5457, %v5715
        %v5717 = vpop.f32.mrb[0].mxu0
        %v5718 = vadd.f32 %v5459, %v5717
        %v5719 = vand.u32 %v389, 4294901760
        %v5720 = vsub.f32 %v389, %v5719
        %v5721 = vand.u32 %v5720, 4294901760
        %5722 = vmatprep.mubr.f32.mxu0 %v5721
        %v5723 = vand.u32 %v388, 4294901760
        %v5724 = vsub.f32 %v388, %v5723
        %v5725 = vand.u32 %v5724, 4294901760
        %5726 = vmatmul.mubr.f32.gmra.mrb[0].mxu0 %v5725
        %v5727 = vpop.f32.mrb[0].mxu0
        %v5728 = vadd.f32 %v5467, %v5727
        %v5729 = vpop.f32.mrb[0].mxu0
        %v5730 = vadd.f32 %v5469, %v5729
        %5731 = vdwg.mxu0
        %v5732 = vand.u32 %v519, 4294901760
        %v5733 = vsub.f32 %v519, %v5732
        %v5734 = vand.u32 %v5733, 4294901760
        %5735 = vmatprep.subr.mxu0 %v5734
        %v5736 = vand.u32 %v518, 4294901760
        %v5737 = vsub.f32 %v518, %v5736
        %v5738 = vand.u32 %v5737, 4294901760
        %5739 = vmatpush1.msra.mxu0 %v5738
        %v5740 = vand.u32 %v521, 4294901760
        %v5741 = vsub.f32 %v521, %v5740
        %v5742 = vand.u32 %v5741, 4294901760
        %5743 = vmatprep.subr.mxu0 %v5742
        %v5744 = vand.u32 %v520, 4294901760
        %v5745 = vsub.f32 %v520, %v5744
        %v5746 = vand.u32 %v5745, 4294901760
        %5747 = vmatpush1.msra.mxu0 %v5746
        %v5748 = vand.u32 %v523, 4294901760
        %v5749 = vsub.f32 %v523, %v5748
        %v5750 = vand.u32 %v5749, 4294901760
        %5751 = vmatprep.subr.mxu0 %v5750
        %v5752 = vand.u32 %v522, 4294901760
        %v5753 = vsub.f32 %v522, %v5752
        %v5754 = vand.u32 %v5753, 4294901760
        %5755 = vmatpush1.msra.mxu0 %v5754
        %v5756 = vand.u32 %v525, 4294901760
        %v5757 = vsub.f32 %v525, %v5756
        %v5758 = vand.u32 %v5757, 4294901760
        %5759 = vmatprep.subr.mxu0 %v5758
        %v5760 = vand.u32 %v524, 4294901760
        %v5761 = vsub.f32 %v524, %v5760
        %v5762 = vand.u32 %v5761, 4294901760
        %5763 = vmatpush1.msra.mxu0 %v5762
        %v5764 = vand.u32 %v527, 4294901760
        %v5765 = vsub.f32 %v527, %v5764
        %v5766 = vand.u32 %v5765, 4294901760
        %5767 = vmatprep.subr.mxu0 %v5766
        %v5768 = vand.u32 %v526, 4294901760
        %v5769 = vsub.f32 %v526, %v5768
        %v5770 = vand.u32 %v5769, 4294901760
        %5771 = vmatpush1.msra.mxu0 %v5770
        %v5772 = vand.u32 %v529, 4294901760
        %v5773 = vsub.f32 %v529, %v5772
        %v5774 = vand.u32 %v5773, 4294901760
        %5775 = vmatprep.subr.mxu0 %v5774
        %v5776 = vand.u32 %v528, 4294901760
        %v5777 = vsub.f32 %v528, %v5776
        %v5778 = vand.u32 %v5777, 4294901760
        %5779 = vmatpush1.msra.mxu0 %v5778
        %v5780 = vand.u32 %v531, 4294901760
        %v5781 = vsub.f32 %v531, %v5780
        %v5782 = vand.u32 %v5781, 4294901760
        %5783 = vmatprep.subr.mxu0 %v5782
        %v5784 = vand.u32 %v530, 4294901760
        %v5785 = vsub.f32 %v530, %v5784
        %v5786 = vand.u32 %v5785, 4294901760
        %5787 = vmatpush1.msra.mxu0 %v5786
        %v5788 = vand.u32 %v533, 4294901760
        %v5789 = vsub.f32 %v533, %v5788
        %v5790 = vand.u32 %v5789, 4294901760
        %5791 = vmatprep.subr.mxu0 %v5790
        %v5792 = vand.u32 %v532, 4294901760
        %v5793 = vsub.f32 %v532, %v5792
        %v5794 = vand.u32 %v5793, 4294901760
        %5795 = vmatpush1.msra.mxu0 %v5794
        %v5796 = vand.u32 %v535, 4294901760
        %v5797 = vsub.f32 %v535, %v5796
        %v5798 = vand.u32 %v5797, 4294901760
        %5799 = vmatprep.subr.mxu0 %v5798
        %v5800 = vand.u32 %v534, 4294901760
        %v5801 = vsub.f32 %v534, %v5800
        %v5802 = vand.u32 %v5801, 4294901760
        %5803 = vmatpush1.msra.mxu0 %v5802
        %v5804 = vand.u32 %v537, 4294901760
        %v5805 = vsub.f32 %v537, %v5804
        %v5806 = vand.u32 %v5805, 4294901760
        %5807 = vmatprep.subr.mxu0 %v5806
        %v5808 = vand.u32 %v536, 4294901760
        %v5809 = vsub.f32 %v536, %v5808
        %v5810 = vand.u32 %v5809, 4294901760
        %5811 = vmatpush1.msra.mxu0 %v5810
        %v5812 = vand.u32 %v539, 4294901760
        %v5813 = vsub.f32 %v539, %v5812
        %v5814 = vand.u32 %v5813, 4294901760
        %5815 = vmatprep.subr.mxu0 %v5814
        %v5816 = vand.u32 %v538, 4294901760
        %v5817 = vsub.f32 %v538, %v5816
        %v5818 = vand.u32 %v5817, 4294901760
        %5819 = vmatpush1.msra.mxu0 %v5818
        %v5820 = vand.u32 %v541, 4294901760
        %v5821 = vsub.f32 %v541, %v5820
        %v5822 = vand.u32 %v5821, 4294901760
        %5823 = vmatprep.subr.mxu0 %v5822
        %v5824 = vand.u32 %v540, 4294901760
        %v5825 = vsub.f32 %v540, %v5824
        %v5826 = vand.u32 %v5825, 4294901760
        %5827 = vmatpush1.msra.mxu0 %v5826
        %v5828 = vand.u32 %v543, 4294901760
        %v5829 = vsub.f32 %v543, %v5828
        %v5830 = vand.u32 %v5829, 4294901760
        %5831 = vmatprep.subr.mxu0 %v5830
        %v5832 = vand.u32 %v542, 4294901760
        %v5833 = vsub.f32 %v542, %v5832
        %v5834 = vand.u32 %v5833, 4294901760
        %5835 = vmatpush1.msra.mxu0 %v5834
        %v5836 = vand.u32 %v545, 4294901760
        %v5837 = vsub.f32 %v545, %v5836
        %v5838 = vand.u32 %v5837, 4294901760
        %5839 = vmatprep.subr.mxu0 %v5838
        %v5840 = vand.u32 %v544, 4294901760
        %v5841 = vsub.f32 %v544, %v5840
        %v5842 = vand.u32 %v5841, 4294901760
        %5843 = vmatpush1.msra.mxu0 %v5842
        %v5844 = vand.u32 %v547, 4294901760
        %v5845 = vsub.f32 %v547, %v5844
        %v5846 = vand.u32 %v5845, 4294901760
        %5847 = vmatprep.subr.mxu0 %v5846
        %v5848 = vand.u32 %v546, 4294901760
        %v5849 = vsub.f32 %v546, %v5848
        %v5850 = vand.u32 %v5849, 4294901760
        %5851 = vmatpush1.msra.mxu0 %v5850
        %v5852 = vand.u32 %v549, 4294901760
        %v5853 = vsub.f32 %v549, %v5852
        %v5854 = vand.u32 %v5853, 4294901760
        %5855 = vmatprep.subr.mxu0 %v5854
        %v5856 = vand.u32 %v548, 4294901760
        %v5857 = vsub.f32 %v548, %v5856
        %v5858 = vand.u32 %v5857, 4294901760
        %5859 = vmatpush1.msra.mxu0 %v5858
        %v5860 = vand.u32 %v551, 4294901760
        %v5861 = vsub.f32 %v551, %v5860
        %v5862 = vand.u32 %v5861, 4294901760
        %5863 = vmatprep.subr.mxu0 %v5862
        %v5864 = vand.u32 %v550, 4294901760
        %v5865 = vsub.f32 %v550, %v5864
        %v5866 = vand.u32 %v5865, 4294901760
        %5867 = vmatpush1.msra.mxu0 %v5866
        %v5868 = vand.u32 %v553, 4294901760
        %v5869 = vsub.f32 %v553, %v5868
        %v5870 = vand.u32 %v5869, 4294901760
        %5871 = vmatprep.subr.mxu0 %v5870
        %v5872 = vand.u32 %v552, 4294901760
        %v5873 = vsub.f32 %v552, %v5872
        %v5874 = vand.u32 %v5873, 4294901760
        %5875 = vmatpush1.msra.mxu0 %v5874
        %v5876 = vand.u32 %v555, 4294901760
        %v5877 = vsub.f32 %v555, %v5876
        %v5878 = vand.u32 %v5877, 4294901760
        %5879 = vmatprep.subr.mxu0 %v5878
        %v5880 = vand.u32 %v554, 4294901760
        %v5881 = vsub.f32 %v554, %v5880
        %v5882 = vand.u32 %v5881, 4294901760
        %5883 = vmatpush1.msra.mxu0 %v5882
        %v5884 = vand.u32 %v557, 4294901760
        %v5885 = vsub.f32 %v557, %v5884
        %v5886 = vand.u32 %v5885, 4294901760
        %5887 = vmatprep.subr.mxu0 %v5886
        %v5888 = vand.u32 %v556, 4294901760
        %v5889 = vsub.f32 %v556, %v5888
        %v5890 = vand.u32 %v5889, 4294901760
        %5891 = vmatpush1.msra.mxu0 %v5890
        %v5892 = vand.u32 %v559, 4294901760
        %v5893 = vsub.f32 %v559, %v5892
        %v5894 = vand.u32 %v5893, 4294901760
        %5895 = vmatprep.subr.mxu0 %v5894
        %v5896 = vand.u32 %v558, 4294901760
        %v5897 = vsub.f32 %v558, %v5896
        %v5898 = vand.u32 %v5897, 4294901760
        %5899 = vmatpush1.msra.mxu0 %v5898
        %v5900 = vand.u32 %v561, 4294901760
        %v5901 = vsub.f32 %v561, %v5900
        %v5902 = vand.u32 %v5901, 4294901760
        %5903 = vmatprep.subr.mxu0 %v5902
        %v5904 = vand.u32 %v560, 4294901760
        %v5905 = vsub.f32 %v560, %v5904
        %v5906 = vand.u32 %v5905, 4294901760
        %5907 = vmatpush1.msra.mxu0 %v5906
        %v5908 = vand.u32 %v563, 4294901760
        %v5909 = vsub.f32 %v563, %v5908
        %v5910 = vand.u32 %v5909, 4294901760
        %5911 = vmatprep.subr.mxu0 %v5910
        %v5912 = vand.u32 %v562, 4294901760
        %v5913 = vsub.f32 %v562, %v5912
        %v5914 = vand.u32 %v5913, 4294901760
        %5915 = vmatpush1.msra.mxu0 %v5914
        %v5916 = vand.u32 %v565, 4294901760
        %v5917 = vsub.f32 %v565, %v5916
        %v5918 = vand.u32 %v5917, 4294901760
        %5919 = vmatprep.subr.mxu0 %v5918
        %v5920 = vand.u32 %v564, 4294901760
        %v5921 = vsub.f32 %v564, %v5920
        %v5922 = vand.u32 %v5921, 4294901760
        %5923 = vmatpush1.msra.mxu0 %v5922
        %v5924 = vand.u32 %v567, 4294901760
        %v5925 = vsub.f32 %v567, %v5924
        %v5926 = vand.u32 %v5925, 4294901760
        %5927 = vmatprep.subr.mxu0 %v5926
        %v5928 = vand.u32 %v566, 4294901760
        %v5929 = vsub.f32 %v566, %v5928
        %v5930 = vand.u32 %v5929, 4294901760
        %5931 = vmatpush1.msra.mxu0 %v5930
        %v5932 = vand.u32 %v569, 4294901760
        %v5933 = vsub.f32 %v569, %v5932
        %v5934 = vand.u32 %v5933, 4294901760
        %5935 = vmatprep.subr.mxu0 %v5934
        %v5936 = vand.u32 %v568, 4294901760
        %v5937 = vsub.f32 %v568, %v5936
        %v5938 = vand.u32 %v5937, 4294901760
        %5939 = vmatpush1.msra.mxu0 %v5938
        %v5940 = vand.u32 %v571, 4294901760
        %v5941 = vsub.f32 %v571, %v5940
        %v5942 = vand.u32 %v5941, 4294901760
        %5943 = vmatprep.subr.mxu0 %v5942
        %v5944 = vand.u32 %v570, 4294901760
        %v5945 = vsub.f32 %v570, %v5944
        %v5946 = vand.u32 %v5945, 4294901760
        %5947 = vmatpush1.msra.mxu0 %v5946
        %v5948 = vand.u32 %v573, 4294901760
        %v5949 = vsub.f32 %v573, %v5948
        %v5950 = vand.u32 %v5949, 4294901760
        %5951 = vmatprep.subr.mxu0 %v5950
        %v5952 = vand.u32 %v572, 4294901760
        %v5953 = vsub.f32 %v572, %v5952
        %v5954 = vand.u32 %v5953, 4294901760
        %5955 = vmatpush1.msra.mxu0 %v5954
        %v5956 = vand.u32 %v575, 4294901760
        %v5957 = vsub.f32 %v575, %v5956
        %v5958 = vand.u32 %v5957, 4294901760
        %5959 = vmatprep.subr.mxu0 %v5958
        %v5960 = vand.u32 %v574, 4294901760
        %v5961 = vsub.f32 %v574, %v5960
        %v5962 = vand.u32 %v5961, 4294901760
        %5963 = vmatpush1.msra.mxu0 %v5962
        %v5964 = vand.u32 %v577, 4294901760
        %v5965 = vsub.f32 %v577, %v5964
        %v5966 = vand.u32 %v5965, 4294901760
        %5967 = vmatprep.subr.mxu0 %v5966
        %v5968 = vand.u32 %v576, 4294901760
        %v5969 = vsub.f32 %v576, %v5968
        %v5970 = vand.u32 %v5969, 4294901760
        %5971 = vmatpush1.msra.mxu0 %v5970
        %v5972 = vand.u32 %v579, 4294901760
        %v5973 = vsub.f32 %v579, %v5972
        %v5974 = vand.u32 %v5973, 4294901760
        %5975 = vmatprep.subr.mxu0 %v5974
        %v5976 = vand.u32 %v578, 4294901760
        %v5977 = vsub.f32 %v578, %v5976
        %v5978 = vand.u32 %v5977, 4294901760
        %5979 = vmatpush1.msra.mxu0 %v5978
        %v5980 = vand.u32 %v581, 4294901760
        %v5981 = vsub.f32 %v581, %v5980
        %v5982 = vand.u32 %v5981, 4294901760
        %5983 = vmatprep.subr.mxu0 %v5982
        %v5984 = vand.u32 %v580, 4294901760
        %v5985 = vsub.f32 %v580, %v5984
        %v5986 = vand.u32 %v5985, 4294901760
        %5987 = vmatpush1.msra.mxu0 %v5986
        %v5988 = vand.u32 %v329, 4294901760
        %5989 = vmatprep.mubr.f32.mxu0 %v5988
        %v5990 = vand.u32 %v328, 4294901760
        %5991 = vmatmul.mubr.f32.gmra.mrb[0].mxu0 %v5990
        %v5992 = vpop.f32.mrb[0].mxu0
        %v5993 = vadd.f32 %v5608, %v5992
        %v5994 = vpop.f32.mrb[0].mxu0
        %v5995 = vadd.f32 %v5610, %v5994
        %v5996 = vand.u32 %v335, 4294901760
        %5997 = vmatprep.mubr.f32.mxu0 %v5996
        %v5998 = vand.u32 %v334, 4294901760
        %5999 = vmatmul.mubr.f32.gmra.mrb[0].mxu0 %v5998
        %v6000 = vpop.f32.mrb[0].mxu0
        %v6001 = vadd.f32 %v5620, %v6000
        %v6002 = vpop.f32.mrb[0].mxu0
        %v6003 = vadd.f32 %v5622, %v6002
        %v6004 = vand.u32 %v341, 4294901760
        %6005 = vmatprep.mubr.f32.mxu0 %v6004
        %v6006 = vand.u32 %v340, 4294901760
        %6007 = vmatmul.mubr.f32.gmra.mrb[0].mxu0 %v6006
        %v6008 = vpop.f32.mrb[0].mxu0
        %v6009 = vadd.f32 %v5632, %v6008
        %v6010 = vpop.f32.mrb[0].mxu0
        %v6011 = vadd.f32 %v5634, %v6010
        %v6012 = vand.u32 %v347, 4294901760
        %6013 = vmatprep.mubr.f32.mxu0 %v6012
        %v6014 = vand.u32 %v346, 4294901760
        %6015 = vmatmul.mubr.f32.gmra.mrb[0].mxu0 %v6014
        %v6016 = vpop.f32.mrb[0].mxu0
        %v6017 = vadd.f32 %v5644, %v6016
        %v6018 = vpop.f32.mrb[0].mxu0
        %v6019 = vadd.f32 %v5646, %v6018
        %v6020 = vand.u32 %v353, 4294901760
        %6021 = vmatprep.mubr.f32.mxu0 %v6020
        %v6022 = vand.u32 %v352, 4294901760
        %6023 = vmatmul.mubr.f32.gmra.mrb[0].mxu0 %v6022
        %v6024 = vpop.f32.mrb[0].mxu0
        %v6025 = vadd.f32 %v5656, %v6024
        %v6026 = vpop.f32.mrb[0].mxu0
        %v6027 = vadd.f32 %v5658, %v6026
        %v6028 = vand.u32 %v359, 4294901760
        %6029 = vmatprep.mubr.f32.mxu0 %v6028
        %v6030 = vand.u32 %v358, 4294901760
        %6031 = vmatmul.mubr.f32.gmra.mrb[0].mxu0 %v6030
        %v6032 = vpop.f32.mrb[0].mxu0
        %v6033 = vadd.f32 %v5668, %v6032
        %v6034 = vpop.f32.mrb[0].mxu0
        %v6035 = vadd.f32 %v5670, %v6034
        %v6036 = vand.u32 %v365, 4294901760
        %6037 = vmatprep.mubr.f32.mxu0 %v6036
        %v6038 = vand.u32 %v364, 4294901760
        %6039 = vmatmul.mubr.f32.gmra.mrb[0].mxu0 %v6038
        %v6040 = vpop.f32.mrb[0].mxu0
        %v6041 = vadd.f32 %v5680, %v6040
        %v6042 = vpop.f32.mrb[0].mxu0
        %v6043 = vadd.f32 %v5682, %v6042
        %v6044 = vand.u32 %v371, 4294901760
        %6045 = vmatprep.mubr.f32.mxu0 %v6044
        %v6046 = vand.u32 %v370, 4294901760
        %6047 = vmatmul.mubr.f32.gmra.mrb[0].mxu0 %v6046
        %v6048 = vpop.f32.mrb[0].mxu0
        %v6049 = vadd.f32 %v5692, %v6048
        %v6050 = vpop.f32.mrb[0].mxu0
        %v6051 = vadd.f32 %v5694, %v6050
        %v6052 = vand.u32 %v377, 4294901760
        %6053 = vmatprep.mubr.f32.mxu0 %v6052
        %v6054 = vand.u32 %v376, 4294901760
        %6055 = vmatmul.mubr.f32.gmra.mrb[0].mxu0 %v6054
        %v6056 = vpop.f32.mrb[0].mxu0
        %v6057 = vadd.f32 %v5704, %v6056
        %v6058 = vpop.f32.mrb[0].mxu0
        %v6059 = vadd.f32 %v5706, %v6058
        %v6060 = vand.u32 %v383, 4294901760
        %6061 = vmatprep.mubr.f32.mxu0 %v6060
        %v6062 = vand.u32 %v382, 4294901760
        %6063 = vmatmul.mubr.f32.gmra.mrb[0].mxu0 %v6062
        %v6064 = vpop.f32.mrb[0].mxu0
        %v6065 = vadd.f32 %v5716, %v6064
        %v6066 = vpop.f32.mrb[0].mxu0
        %v6067 = vadd.f32 %v5718, %v6066
        %v6068 = vand.u32 %v389, 4294901760
        %6069 = vmatprep.mubr.f32.mxu0 %v6068
        %v6070 = vand.u32 %v388, 4294901760
        %6071 = vmatmul.mubr.f32.gmra.mrb[0].mxu0 %v6070
        %v6072 = vpop.f32.mrb[0].mxu0
        %v6073 = vadd.f32 %v5728, %v6072
        %v6074 = vpop.f32.mrb[0].mxu0
        %v6075 = vadd.f32 %v5730, %v6074
        %6076 = vdwg.mxu0
        %v6077 = vand.u32 %v519, 4294901760
        %6078 = vmatprep.subr.mxu0 %v6077
        %v6079 = vand.u32 %v518, 4294901760
        %6080 = vmatpush1.msra.mxu0 %v6079
        %v6081 = vand.u32 %v521, 4294901760
        %6082 = vmatprep.subr.mxu0 %v6081
        %v6083 = vand.u32 %v520, 4294901760
        %6084 = vmatpush1.msra.mxu0 %v6083
        %v6085 = vand.u32 %v523, 4294901760
        %6086 = vmatprep.subr.mxu0 %v6085
        %v6087 = vand.u32 %v522, 4294901760
        %6088 = vmatpush1.msra.mxu0 %v6087
        %v6089 = vand.u32 %v525, 4294901760
        %6090 = vmatprep.subr.mxu0 %v6089
        %v6091 = vand.u32 %v524, 4294901760
        %6092 = vmatpush1.msra.mxu0 %v6091
        %v6093 = vand.u32 %v527, 4294901760
        %6094 = vmatprep.subr.mxu0 %v6093
        %v6095 = vand.u32 %v526, 4294901760
        %6096 = vmatpush1.msra.mxu0 %v6095
        %v6097 = vand.u32 %v529, 4294901760
        %6098 = vmatprep.subr.mxu0 %v6097
        %v6099 = vand.u32 %v528, 4294901760
        %6100 = vmatpush1.msra.mxu0 %v6099
        %v6101 = vand.u32 %v531, 4294901760
        %6102 = vmatprep.subr.mxu0 %v6101
        %v6103 = vand.u32 %v530, 4294901760
        %6104 = vmatpush1.msra.mxu0 %v6103
        %v6105 = vand.u32 %v533, 4294901760
        %6106 = vmatprep.subr.mxu0 %v6105
        %v6107 = vand.u32 %v532, 4294901760
        %6108 = vmatpush1.msra.mxu0 %v6107
        %v6109 = vand.u32 %v535, 4294901760
        %6110 = vmatprep.subr.mxu0 %v6109
        %v6111 = vand.u32 %v534, 4294901760
        %6112 = vmatpush1.msra.mxu0 %v6111
        %v6113 = vand.u32 %v537, 4294901760
        %6114 = vmatprep.subr.mxu0 %v6113
        %v6115 = vand.u32 %v536, 4294901760
        %6116 = vmatpush1.msra.mxu0 %v6115
        %v6117 = vand.u32 %v539, 4294901760
        %6118 = vmatprep.subr.mxu0 %v6117
        %v6119 = vand.u32 %v538, 4294901760
        %6120 = vmatpush1.msra.mxu0 %v6119
        %v6121 = vand.u32 %v541, 4294901760
        %6122 = vmatprep.subr.mxu0 %v6121
        %v6123 = vand.u32 %v540, 4294901760
        %6124 = vmatpush1.msra.mxu0 %v6123
        %v6125 = vand.u32 %v543, 4294901760
        %6126 = vmatprep.subr.mxu0 %v6125
        %v6127 = vand.u32 %v542, 4294901760
        %6128 = vmatpush1.msra.mxu0 %v6127
        %v6129 = vand.u32 %v545, 4294901760
        %6130 = vmatprep.subr.mxu0 %v6129
        %v6131 = vand.u32 %v544, 4294901760
        %6132 = vmatpush1.msra.mxu0 %v6131
        %v6133 = vand.u32 %v547, 4294901760
        %6134 = vmatprep.subr.mxu0 %v6133
        %v6135 = vand.u32 %v546, 4294901760
        %6136 = vmatpush1.msra.mxu0 %v6135
        %v6137 = vand.u32 %v549, 4294901760
        %6138 = vmatprep.subr.mxu0 %v6137
        %v6139 = vand.u32 %v548, 4294901760
        %6140 = vmatpush1.msra.mxu0 %v6139
        %v6141 = vand.u32 %v551, 4294901760
        %6142 = vmatprep.subr.mxu0 %v6141
        %v6143 = vand.u32 %v550, 4294901760
        %6144 = vmatpush1.msra.mxu0 %v6143
        %v6145 = vand.u32 %v553, 4294901760
        %6146 = vmatprep.subr.mxu0 %v6145
        %v6147 = vand.u32 %v552, 4294901760
        %6148 = vmatpush1.msra.mxu0 %v6147
        %v6149 = vand.u32 %v555, 4294901760
        %6150 = vmatprep.subr.mxu0 %v6149
        %v6151 = vand.u32 %v554, 4294901760
        %6152 = vmatpush1.msra.mxu0 %v6151
        %v6153 = vand.u32 %v557, 4294901760
        %6154 = vmatprep.subr.mxu0 %v6153
        %v6155 = vand.u32 %v556, 4294901760
        %6156 = vmatpush1.msra.mxu0 %v6155
        %v6157 = vand.u32 %v559, 4294901760
        %6158 = vmatprep.subr.mxu0 %v6157
        %v6159 = vand.u32 %v558, 4294901760
        %6160 = vmatpush1.msra.mxu0 %v6159
        %v6161 = vand.u32 %v561, 4294901760
        %6162 = vmatprep.subr.mxu0 %v6161
        %v6163 = vand.u32 %v560, 4294901760
        %6164 = vmatpush1.msra.mxu0 %v6163
        %v6165 = vand.u32 %v563, 4294901760
        %6166 = vmatprep.subr.mxu0 %v6165
        %v6167 = vand.u32 %v562, 4294901760
        %6168 = vmatpush1.msra.mxu0 %v6167
        %v6169 = vand.u32 %v565, 4294901760
        %6170 = vmatprep.subr.mxu0 %v6169
        %v6171 = vand.u32 %v564, 4294901760
        %6172 = vmatpush1.msra.mxu0 %v6171
        %v6173 = vand.u32 %v567, 4294901760
        %6174 = vmatprep.subr.mxu0 %v6173
        %v6175 = vand.u32 %v566, 4294901760
        %6176 = vmatpush1.msra.mxu0 %v6175
        %v6177 = vand.u32 %v569, 4294901760
        %6178 = vmatprep.subr.mxu0 %v6177
        %v6179 = vand.u32 %v568, 4294901760
        %6180 = vmatpush1.msra.mxu0 %v6179
        %v6181 = vand.u32 %v571, 4294901760
        %6182 = vmatprep.subr.mxu0 %v6181
        %v6183 = vand.u32 %v570, 4294901760
        %6184 = vmatpush1.msra.mxu0 %v6183
        %v6185 = vand.u32 %v573, 4294901760
        %6186 = vmatprep.subr.mxu0 %v6185
        %v6187 = vand.u32 %v572, 4294901760
        %6188 = vmatpush1.msra.mxu0 %v6187
        %v6189 = vand.u32 %v575, 4294901760
        %6190 = vmatprep.subr.mxu0 %v6189
        %v6191 = vand.u32 %v574, 4294901760
        %6192 = vmatpush1.msra.mxu0 %v6191
        %v6193 = vand.u32 %v577, 4294901760
        %6194 = vmatprep.subr.mxu0 %v6193
        %v6195 = vand.u32 %v576, 4294901760
        %6196 = vmatpush1.msra.mxu0 %v6195
        %v6197 = vand.u32 %v579, 4294901760
        %6198 = vmatprep.subr.mxu0 %v6197
        %v6199 = vand.u32 %v578, 4294901760
        %6200 = vmatpush1.msra.mxu0 %v6199
        %v6201 = vand.u32 %v581, 4294901760
        %6202 = vmatprep.subr.mxu0 %v6201
        %v6203 = vand.u32 %v580, 4294901760
        %6204 = vmatpush1.msra.mxu0 %v6203
        %v6205 = vand.u32 %v329, 4294901760
        %6206 = vmatprep.mubr.f32.mxu0 %v6205
        %v6207 = vand.u32 %v328, 4294901760
        %6208 = vmatmul.mubr.f32.gmra.mrb[0].mxu0 %v6207
        %v6209 = vpop.f32.mrb[0].mxu0
        %v6210 = vadd.f32 %v5993, %v6209
        %v6211 = vpop.f32.mrb[0].mxu0
        %v6212 = vadd.f32 %v5995, %v6211
        %v6213 = vand.u32 %v335, 4294901760
        %6214 = vmatprep.mubr.f32.mxu0 %v6213
        %v6215 = vand.u32 %v334, 4294901760
        %6216 = vmatmul.mubr.f32.gmra.mrb[0].mxu0 %v6215
        %v6217 = vpop.f32.mrb[0].mxu0
        %v6218 = vadd.f32 %v6001, %v6217
        %v6219 = vpop.f32.mrb[0].mxu0
        %v6220 = vadd.f32 %v6003, %v6219
        %v6221 = vand.u32 %v341, 4294901760
        %6222 = vmatprep.mubr.f32.mxu0 %v6221
        %v6223 = vand.u32 %v340, 4294901760
        %6224 = vmatmul.mubr.f32.gmra.mrb[0].mxu0 %v6223
        %v6225 = vpop.f32.mrb[0].mxu0
        %v6226 = vadd.f32 %v6009, %v6225
        %v6227 = vpop.f32.mrb[0].mxu0
        %v6228 = vadd.f32 %v6011, %v6227
        %v6229 = vand.u32 %v347, 4294901760
        %6230 = vmatprep.mubr.f32.mxu0 %v6229
        %v6231 = vand.u32 %v346, 4294901760
        %6232 = vmatmul.mubr.f32.gmra.mrb[0].mxu0 %v6231
        %v6233 = vpop.f32.mrb[0].mxu0
        %v6234 = vadd.f32 %v6017, %v6233
        %v6235 = vpop.f32.mrb[0].mxu0
        %v6236 = vadd.f32 %v6019, %v6235
        %v6237 = vand.u32 %v353, 4294901760
        %6238 = vmatprep.mubr.f32.mxu0 %v6237
        %v6239 = vand.u32 %v352, 4294901760
        %6240 = vmatmul.mubr.f32.gmra.mrb[0].mxu0 %v6239
        %v6241 = vpop.f32.mrb[0].mxu0
        %v6242 = vadd.f32 %v6025, %v6241
        %v6243 = vpop.f32.mrb[0].mxu0
        %v6244 = vadd.f32 %v6027, %v6243
        %v6245 = vand.u32 %v359, 4294901760
        %6246 = vmatprep.mubr.f32.mxu0 %v6245
        %v6247 = vand.u32 %v358, 4294901760
        %6248 = vmatmul.mubr.f32.gmra.mrb[0].mxu0 %v6247
        %v6249 = vpop.f32.mrb[0].mxu0
        %v6250 = vadd.f32 %v6033, %v6249
        %v6251 = vpop.f32.mrb[0].mxu0
        %v6252 = vadd.f32 %v6035, %v6251
        %v6253 = vand.u32 %v365, 4294901760
        %6254 = vmatprep.mubr.f32.mxu0 %v6253
        %v6255 = vand.u32 %v364, 4294901760
        %6256 = vmatmul.mubr.f32.gmra.mrb[0].mxu0 %v6255
        %v6257 = vpop.f32.mrb[0].mxu0
        %v6258 = vadd.f32 %v6041, %v6257
        %v6259 = vpop.f32.mrb[0].mxu0
        %v6260 = vadd.f32 %v6043, %v6259
        %v6261 = vand.u32 %v371, 4294901760
        %6262 = vmatprep.mubr.f32.mxu0 %v6261
        %v6263 = vand.u32 %v370, 4294901760
        %6264 = vmatmul.mubr.f32.gmra.mrb[0].mxu0 %v6263
        %v6265 = vpop.f32.mrb[0].mxu0
        %v6266 = vadd.f32 %v6049, %v6265
        %v6267 = vpop.f32.mrb[0].mxu0
        %v6268 = vadd.f32 %v6051, %v6267
        %v6269 = vand.u32 %v377, 4294901760
        %6270 = vmatprep.mubr.f32.mxu0 %v6269
        %v6271 = vand.u32 %v376, 4294901760
        %6272 = vmatmul.mubr.f32.gmra.mrb[0].mxu0 %v6271
        %v6273 = vpop.f32.mrb[0].mxu0
        %v6274 = vadd.f32 %v6057, %v6273
        %v6275 = vpop.f32.mrb[0].mxu0
        %v6276 = vadd.f32 %v6059, %v6275
        %v6277 = vand.u32 %v383, 4294901760
        %6278 = vmatprep.mubr.f32.mxu0 %v6277
        %v6279 = vand.u32 %v382, 4294901760
        %6280 = vmatmul.mubr.f32.gmra.mrb[0].mxu0 %v6279
        %v6281 = vpop.f32.mrb[0].mxu0
        %v6282 = vadd.f32 %v6065, %v6281
        %v6283 = vpop.f32.mrb[0].mxu0
        %v6284 = vadd.f32 %v6067, %v6283
        %v6285 = vand.u32 %v389, 4294901760
        %6286 = vmatprep.mubr.f32.mxu0 %v6285
        %v6287 = vand.u32 %v388, 4294901760
        %6288 = vmatmul.mubr.f32.gmra.mrb[0].mxu0 %v6287
        %v6289 = vpop.f32.mrb[0].mxu0
        %v6290 = vadd.f32 %v6073, %v6289
        %v6291 = vpop.f32.mrb[0].mxu0
        %v6292 = vadd.f32 %v6075, %v6291
        %6293 = vdwg.mxu0
        %6294 = vst [vmem:[%s208] sm:$0xff] %v6210
        %vm6295 = vcmask 556032
        %6296 = vst.msk [vmem:[%s208 + $0x8] sm:$0xff] %vm6295, %v6212
        %6297 = vst [vmem:[%s208 + $0x10] sm:$0xff] %v6218
        %6298 = vst.msk [vmem:[%s208 + $0x18] sm:$0xff] %vm6295, %v6220
        %6299 = vst [vmem:[%s208 + $0x20] sm:$0xff] %v6226
        %6300 = vst.msk [vmem:[%s208 + $0x28] sm:$0xff] %vm6295, %v6228
        %6301 = vst [vmem:[%s208 + $0x30] sm:$0xff] %v6234
        %6302 = vst.msk [vmem:[%s208 + $0x38] sm:$0xff] %vm6295, %v6236
        %6303 = vst [vmem:[%s208 + $0x40] sm:$0xff] %v6242
        %6304 = vst.msk [vmem:[%s208 + $0x48] sm:$0xff] %vm6295, %v6244
        %6305 = vst [vmem:[%s208 + $0x50] sm:$0xff] %v6250
        %6306 = vst.msk [vmem:[%s208 + $0x58] sm:$0xff] %vm6295, %v6252
        %6307 = vst [vmem:[%s208 + $0x60] sm:$0xff] %v6258
        %6308 = vst.msk [vmem:[%s208 + $0x68] sm:$0xff] %vm6295, %v6260
        %6309 = vst [vmem:[%s208 + $0x70] sm:$0xff] %v6266
        %6310 = vst.msk [vmem:[%s208 + $0x78] sm:$0xff] %vm6295, %v6268
        %6311 = vst [vmem:[%s208 + $0x80] sm:$0xff] %v6274
        %6312 = vst.msk [vmem:[%s208 + $0x88] sm:$0xff] %vm6295, %v6276
        %6313 = vst [vmem:[%s208 + $0x90] sm:$0xff] %v6282
        %6314 = vst.msk [vmem:[%s208 + $0x98] sm:$0xff] %vm6295, %v6284
        %6315 = vst [vmem:[%s208 + $0xa0] sm:$0xff] %v6290
        %6316 = vst.msk [vmem:[%s208 + $0xa8] sm:$0xff] %vm6295, %v6292
        %s6317 = sand.u32 %s117, 1
        %s6318 = scalar_lea.sflag [#allocation3], %s6317
        %s6319 = sand.u32 %s117, 1
        %s6320 = smul.addr %s6319, 176
        %s6321 = scalar_lea.vmem [#allocation2], %s6320
        // Predicated region
        $region33: #{tpu_custom_call.1} parent=31 // pred_check
          %p6322 = pneg %p127
        $region34: #{tpu_custom_call.1} parent=31 // pred_check_branch
          %6324 = sbr.rel (%p6322) target = $region36
        $region35: #{tpu_custom_call.1} parent=31 // pred_region
          %s6325 = smul.u32 11, %s22
          %s6327 = ssub.s32 2816, 2816
          %6328 = vsyncadd %s6318, %s6327
          %s6329 = smul.addr %s6325, 2
          %s6330 = smul.addr %s21, 44
          %s6331 = sadd.s32 %s6329, %s6330
          %s6332 = smul.addr %s6331, 128
          %s6333 = scalar_lea.hbm %s3, %s6332
          %s6334 = sshll.u32 %s6321, 4
          %s6335 = int_to_ptr.vmem [resolvable:$true] %s6334
          %6340 = dma.vmem_to_hbm [thread:$0]  %s6335, 2816, %s6333, %s6318, 256, 256, 16
        $region36: #{tpu_custom_call.1} parent=31 // pred_fallthru
          _
      $region32: #{tpu_custom_call.1} parent=5 // pred_fallthru
        _
      %p6341 = scmp.le.s32.totalorder 2, %s12
      // Predicated region
      $region37: #{tpu_custom_call.1} parent=5 // pred_check
        %p6342 = pneg %p6341
      $region38: #{tpu_custom_call.1} parent=5 // pred_check_branch
        %6344 = sbr.rel (%p6342) target = $region40
      $region39: #{tpu_custom_call.1} parent=5 // pred_region
        %s6345 = ssub.s32 %s12, 2
        // Predicated region
        $region41: #{tpu_custom_call.1} parent=39 // pred_check
          %p6346 = pneg %p133
        $region42: #{tpu_custom_call.1} parent=39 // pred_check_branch
          %6348 = sbr.rel (%p6346) target = $region44
        $region43: #{tpu_custom_call.1} parent=39 // pred_region
          %s6349 = sand.u32 %s118, 1
          %s6350 = scalar_lea.sflag [#allocation3], %s6349
          %s6351 = sand.u32 %s118, 1
          %s6352 = smul.addr %s6351, 176
          %s6353 = scalar_lea.vmem [#allocation2], %s6352
          %6354 = dma.done %s6350, 2816
        $region44: #{tpu_custom_call.1} parent=39 // pred_fallthru
          _
      $region40: #{tpu_custom_call.1} parent=5 // pred_fallthru
        _
    $region6: #{tpu_custom_call.1} parent=1 // loop_footer
      %s16 = sadd.s32 1, %s12
    $region7: #{tpu_custom_call.1} parent=1 // loop_footer_branch
      %11 = sbr.rel target = $region3
    $region8: #{tpu_custom_call.1} parent=1 // loop_exit
      _
    %6355 = vsyncpa [#allocation3], 1
    %s6356 = scalar_lea.sflag [#allocation3], 1
    %6357 = vsyncpa %s6356, 1

</llo_original>
